<compile_context>
chip_gen: v7x
topology: tpu7x:2x2x1
jax: 0.10.0
libtpu: 0.0.40
codegen_flags: <defaults>
</compile_context>

<pallas_src>
import functools
import math

import jax
import jax.numpy as jnp
from jax.experimental import pallas as pl
from jax.experimental.pallas import tpu as pltpu


def _round_up(x, m):
    return ((x + m - 1) // m) * m


def combiner_kernel(hs_ref, w_ip_ref, qk_m_ref, qk_b_ref, w_c1_ref, b_c1_ref,
                    base_a_ref, w_op_ref, w_fc_ref, b_fc_ref, alpha_ref,
                    out_ref, *, tb: int, c: int):
    # ---- batched input_proj -------------------------------------------------
    # (TB, S, C) tile -> (TB*C, S) via per-item minor-dim transposes (XLU),
    # then one big MXU matmul with M = TB*C rows.
    cols = [hs_ref[t].T for t in range(tb)]                          # (C, S) each
    hs_cs = cols[0] if tb == 1 else jnp.concatenate(cols, axis=0)    # (TB*C, S)
    h1 = jnp.dot(hs_cs, w_ip_ref[...],
                 preferred_element_type=jnp.float32)                 # (TB*C, J)

    alpha = alpha_ref[0, 0]
    qk_m = qk_m_ref[...]       # (2, C)  rows = mean_rows(w_q), mean_rows(w_k)
    qk_b = qk_b_ref[...]       # (2, J)  folded biases (b_ip + mean(b_q/b_k))
    w_c1 = w_c1_ref[...]       # (C, C)
    b_c1 = b_c1_ref[...]       # (C, J)  conv1 bias with b_ip folded in
    base_a = base_a_ref[...]   # (J, J)
    w_op = w_op_ref[...]       # (J, 1)

    # ---- per-batch adjacency + graph step (tiny, statically unrolled) -------
    o_cols = []
    for t in range(tb):
        h1_t = h1[t * c:(t + 1) * c, :]                                        # (C, J)
        qk = jnp.dot(qk_m, h1_t, preferred_element_type=jnp.float32) + qk_b    # (2, J)
        q1 = qk[0:1, :]
        k1 = qk[1:2, :]
        a1 = jnp.abs(base_a + alpha * jnp.tanh(jnp.transpose(q1) - k1))        # (J, J)
        aw = jnp.dot(a1, w_op, preferred_element_type=jnp.float32)             # (J, 1)
        h2 = jnp.dot(w_c1, h1_t, preferred_element_type=jnp.float32) + b_c1    # (C, J)
        o_cols.append(jnp.dot(h2, aw, preferred_element_type=jnp.float32))     # (C, 1)
    o = o_cols[0] if tb == 1 else jnp.concatenate(o_cols, axis=1)              # (C, TB)

    # ---- fused BatchNorm * output_proj * fc (lane-dense 128-wide output) ----
    logits = jnp.dot(o.T, w_fc_ref[...],
                     preferred_element_type=jnp.float32) + b_fc_ref[...]       # (TB, NCp)
    out_ref[...] = logits[None, :, :]


def _fold_params(p, nc_pad):
    """Eval-mode algebraic folds (exact): conv_q/k means, b_ip, BN, output_proj, fc."""
    C, NC = p["w_fc"].shape
    wq_m = jnp.mean(p["w_q"], axis=0, keepdims=True)                  # (1, C)
    wk_m = jnp.mean(p["w_k"], axis=0, keepdims=True)                  # (1, C)
    bq_m = jnp.mean(p["b_q"])
    bk_m = jnp.mean(p["b_k"])
    qk_means = jnp.concatenate([wq_m, wk_m], axis=0)                  # (2, C)
    qk_bias = jnp.concatenate(
        [wq_m.sum() * p["b_ip"] + bq_m,
         wk_m.sum() * p["b_ip"] + bk_m], axis=0)                      # (2, J)
    b_c1_fold = (jnp.dot(p["w_c1"].sum(axis=1, keepdims=True), p["b_ip"])
                 + p["b_c1"])                                         # (C, J)
    w_fc_scaled = p["bn_scale"] * p["w_fc"]                           # (C, NC)
    s_wop = p["w_op"].sum()
    b_fused = p["b_fc"] + jnp.dot(
        (p["bn_off"] * s_wop + p["b_op"][0, 0]).T, p["w_fc"])         # (1, NC)

    w_fc_fused = jnp.zeros((C, nc_pad), jnp.float32).at[:, :NC].set(w_fc_scaled)
    b_fused_p = jnp.zeros((1, nc_pad), jnp.float32).at[:, :NC].set(b_fused)
    return dict(w_ip=p["w_ip"], qk_means=qk_means, qk_bias=qk_bias,
                w_c1=p["w_c1"], b_c1_fold=b_c1_fold, base_a=p["base_a"],
                w_op=p["w_op"], w_fc_fused=w_fc_fused, b_fused=b_fused_p,
                alpha=p["alpha"])


def combiner_forward(x_dict, params):
    # glue: concat FPN features over the "select" axis; keep (B, S, C) layout
    # (no wrapper-side transpose -- the tile transpose happens in-kernel).
    hs = jnp.concatenate([x_dict[k] for k in x_dict], axis=1).astype(jnp.float32)
    B, S, C = hs.shape
    J = params["w_ip"].shape[1]
    NC = params["w_fc"].shape[1]
    NCp = _round_up(NC, 128)      # lane-dense output, sliced back afterwards

    kp = _fold_params(params, NCp)

    # batch tile: aim for TB*C ~= 256 MXU rows, keep >=2 grid steps (v7x 2 TCs)
    tb = max(1, min(256 // max(C, 1), B))
    if B >= 2:
        tb = max(1, min(tb, B // 2))
    n_blocks = -(-B // tb)
    b_pad = n_blocks * tb
    if b_pad != B:
        hs = jnp.concatenate(
            [hs, jnp.zeros((b_pad - B, S, C), hs.dtype)], axis=0)

    kernel = functools.partial(combiner_kernel, tb=tb, c=C)

    def full(shape):
        return pl.BlockSpec(shape, lambda g: (0,) * len(shape))

    in_specs = [
        pl.BlockSpec((tb, S, C), lambda g: (g, 0, 0)),   # hs batch tile
        full((S, J)),            # w_ip
        full((2, C)),            # qk_means
        full((2, J)),            # qk_bias
        full((C, C)),            # w_c1
        full((C, J)),            # b_c1_fold
        full((J, J)),            # base_a
        full((J, 1)),            # w_op
        full((C, NCp)),          # w_fc_fused (bn_scale folded, lane-padded)
        full((1, NCp)),          # b_fused
        pl.BlockSpec(memory_space=pltpu.MemorySpace.SMEM),   # alpha scalar
    ]
    out_specs = pl.BlockSpec((1, tb, NCp), lambda g: (g, 0, 0))

    out = pl.pallas_call(
        kernel,
        out_shape=jax.ShapeDtypeStruct((n_blocks, tb, NCp), jnp.float32),
        grid=(n_blocks,),
        in_specs=in_specs,
        out_specs=out_specs,
        compiler_params=pltpu.CompilerParams(
            dimension_semantics=("parallel",)),
    )(hs, kp["w_ip"], kp["qk_means"], kp["qk_bias"], kp["w_c1"],
      kp["b_c1_fold"], kp["base_a"], kp["w_op"], kp["w_fc_fused"],
      kp["b_fused"], kp["alpha"])

    return out.reshape(b_pad, NCp)[:B, :NC]


def combiner_reference(x_dict, params):
    # plain-JAX reference (unfolded math) for correctness checking
    hs = jnp.concatenate([x_dict[k] for k in x_dict], axis=1).transpose(0, 2, 1)
    hs = hs.astype(jnp.float32)                                          # (B, C, S)
    h1 = jnp.einsum("bcs,sj->bcj", hs, params["w_ip"]) + params["b_ip"]  # (B, C, J)
    q = jnp.einsum("qc,bcj->bqj", params["w_q"], h1) + params["b_q"]
    k = jnp.einsum("qc,bcj->bqj", params["w_k"], h1) + params["b_k"]
    q1 = q.mean(axis=1)
    k1 = k.mean(axis=1)
    a1 = jnp.tanh(q1[:, :, None] - k1[:, None, :])
    a1 = params["base_a"][None] + a1 * params["alpha"][0, 0]
    a1 = jnp.abs(a1)
    h2 = jnp.einsum("oc,bcj->boj", params["w_c1"], h1) + params["b_c1"]
    h3 = jnp.einsum("bcj,bjk->bck", h2, a1)
    h4 = h3 * params["bn_scale"][None] + params["bn_off"][None]
    o = jnp.einsum("bcj,jo->bco", h4, params["w_op"]) + params["b_op"]
    o = o.reshape(o.shape[0], -1)
    return o @ params["w_fc"] + params["b_fc"]


def make_params(key, *, total_num_selects, fpn_size, num_classes):
    C = fpn_size
    S = total_num_selects
    J = total_num_selects // 32
    C4 = C // 4
    NC = num_classes
    ks = jax.random.split(key, 16)

    def init(k, shape, scale=0.1):
        return scale * jax.random.normal(k, shape, dtype=jnp.float32)

    bn_eps = 1e-5
    gamma = 1.0 + init(ks[12], (C, 1))
    beta = init(ks[13], (C, 1))
    run_mean = init(ks[14], (C, 1))
    run_var = 1.0 + 0.1 * jnp.abs(jax.random.normal(ks[15], (C, 1), jnp.float32))
    bn_scale = gamma / jnp.sqrt(run_var + bn_eps)
    bn_off = beta - run_mean * bn_scale

    params = {
        # input_proj (Linear S->J), stored transposed (in, out)
        "w_ip": init(ks[0], (S, J)),
        "b_ip": init(ks[1], (1, J)),
        # conv_q1 / conv_k1 (1x1 Conv1d C->C//4), kernel dim squeezed
        "w_q": init(ks[2], (C4, C)),
        "b_q": init(ks[3], (C4, 1)),
        "w_k": init(ks[4], (C4, C)),
        "b_k": init(ks[5], (C4, 1)),
        # conv1 (1x1 Conv1d C->C)
        "w_c1": init(ks[6], (C, C)),
        "b_c1": init(ks[7], (C, 1)),
        # base_adjacency = eye(J)/100 + 1/100 ; alpha nonzero so the tanh
        # adjacency path is actually exercised by the check
        "base_a": jnp.eye(J, dtype=jnp.float32) / 100.0 + 1.0 / 100.0,
        "alpha": jnp.full((1, 1), 0.3, dtype=jnp.float32),
        # BatchNorm1d(C), eval mode, folded running stats (randomized state)
        "bn_scale": bn_scale,
        "bn_off": bn_off,
        # output_proj (Linear J->1), transposed
        "w_op": init(ks[8], (J, 1)),
        "b_op": init(ks[9], (1, 1)),
        # fc (Linear C->num_classes), transposed
        "w_fc": init(ks[10], (C, NC)),
        "b_fc": init(ks[11], (1, NC)),
    }
    return params


if __name__ == "__main__":
    B = 16                   # -> batch tile TB=8 (TB*C=256 MXU rows), 2 grid steps
    fpn_size = 32            # == proj_size (fpn_size is not None -> no proj_* modules)
    total_num_selects = 256  # -> num_joints J = 8
    num_classes = 10

    key = jax.random.PRNGKey(0)
    k_params, k_a, k_b = jax.random.split(key, 3)
    params = make_params(k_params, total_num_selects=total_num_selects,
                         fpn_size=fpn_size, num_classes=num_classes)

    # dict of FPN features, each (B, S_i, fpn_size); S_a + S_b == total_num_selects
    x = {
        "la": jax.random.normal(k_a, (B, 128, fpn_size), dtype=jnp.float32),
        "lb": jax.random.normal(k_b, (B, 128, fpn_size), dtype=jnp.float32),
    }

    out = combiner_forward(x, params)
    out = jax.block_until_ready(out)

    ref = combiner_reference(x, params)
    assert out.shape == (B, num_classes)
    assert jnp.allclose(out, ref, rtol=1e-2, atol=1e-3), (out, ref)

    print("KERNEL_OK")
</pallas_src>

<mosaic_0001>
module attributes {stable_mosaic.version = 11 : i64} {
  func.func @combiner_kernel(%arg0: i32, %arg1: memref<8x256x32xf32, #tpu.memory_space<vmem>>, %arg2: memref<256x8xf32, #tpu.memory_space<vmem>>, %arg3: memref<2x32xf32, #tpu.memory_space<vmem>>, %arg4: memref<2x8xf32, #tpu.memory_space<vmem>>, %arg5: memref<32x32xf32, #tpu.memory_space<vmem>>, %arg6: memref<32x8xf32, #tpu.memory_space<vmem>>, %arg7: memref<8x8xf32, #tpu.memory_space<vmem>>, %arg8: memref<8x1xf32, #tpu.memory_space<vmem>>, %arg9: memref<32x128xf32, #tpu.memory_space<vmem>>, %arg10: memref<1x128xf32, #tpu.memory_space<vmem>>, %arg11: memref<1x1xf32, #tpu.memory_space<smem>>, %arg12: memref<1x8x128xf32, #tpu.memory_space<vmem>>) attributes {dimension_semantics = [#tpu.dimension_semantics<parallel>], iteration_bounds = array<i64: 2>, scalar_prefetch = 0 : i64, scratch_operands = 0 : i64, tpu.core_type = #tpu.core_type<tc>, window_params = [{transform_indices = @transform_0, window_bounds = array<i64: 8, 256, 32>}, {pipeline_mode = #tpu.pipeline_mode<synchronous>, transform_indices = @transform_1, window_bounds = array<i64: 256, 8>}, {pipeline_mode = #tpu.pipeline_mode<synchronous>, transform_indices = @transform_2, window_bounds = array<i64: 2, 32>}, {pipeline_mode = #tpu.pipeline_mode<synchronous>, transform_indices = @transform_3, window_bounds = array<i64: 2, 8>}, {pipeline_mode = #tpu.pipeline_mode<synchronous>, transform_indices = @transform_4, window_bounds = array<i64: 32, 32>}, {pipeline_mode = #tpu.pipeline_mode<synchronous>, transform_indices = @transform_5, window_bounds = array<i64: 32, 8>}, {pipeline_mode = #tpu.pipeline_mode<synchronous>, transform_indices = @transform_6, window_bounds = array<i64: 8, 8>}, {pipeline_mode = #tpu.pipeline_mode<synchronous>, transform_indices = @transform_7, window_bounds = array<i64: 8, 1>}, {pipeline_mode = #tpu.pipeline_mode<synchronous>, transform_indices = @transform_8, window_bounds = array<i64: 32, 128>}, {pipeline_mode = #tpu.pipeline_mode<synchronous>, transform_indices = @transform_9, window_bounds = array<i64: 1, 128>}, {transform_indices = @transform_10, window_bounds = array<i64: 1, 1>}, {transform_indices = @transform_11, window_bounds = array<i64: 1, 8, 128>}]} {
    %c0 = arith.constant 0 : index
    %c0_0 = arith.constant 0 : index
    %c0_1 = arith.constant 0 : index
    %0 = vector.load %arg1[%c0, %c0_0, %c0_1] : memref<8x256x32xf32, #tpu.memory_space<vmem>>, vector<1x256x32xf32>
    %1 = vector.shape_cast %0 : vector<1x256x32xf32> to vector<256x32xf32>
    %2 = tpu.transpose %1, [1, 0] : vector<256x32xf32> -> vector<32x256xf32>
    %c1 = arith.constant 1 : index
    %c0_2 = arith.constant 0 : index
    %c0_3 = arith.constant 0 : index
    %3 = vector.load %arg1[%c1, %c0_2, %c0_3] : memref<8x256x32xf32, #tpu.memory_space<vmem>>, vector<1x256x32xf32>
    %4 = vector.shape_cast %3 : vector<1x256x32xf32> to vector<256x32xf32>
    %5 = tpu.transpose %4, [1, 0] : vector<256x32xf32> -> vector<32x256xf32>
    %c2 = arith.constant 2 : index
    %c0_4 = arith.constant 0 : index
    %c0_5 = arith.constant 0 : index
    %6 = vector.load %arg1[%c2, %c0_4, %c0_5] : memref<8x256x32xf32, #tpu.memory_space<vmem>>, vector<1x256x32xf32>
    %7 = vector.shape_cast %6 : vector<1x256x32xf32> to vector<256x32xf32>
    %8 = tpu.transpose %7, [1, 0] : vector<256x32xf32> -> vector<32x256xf32>
    %c3 = arith.constant 3 : index
    %c0_6 = arith.constant 0 : index
    %c0_7 = arith.constant 0 : index
    %9 = vector.load %arg1[%c3, %c0_6, %c0_7] : memref<8x256x32xf32, #tpu.memory_space<vmem>>, vector<1x256x32xf32>
    %10 = vector.shape_cast %9 : vector<1x256x32xf32> to vector<256x32xf32>
    %11 = tpu.transpose %10, [1, 0] : vector<256x32xf32> -> vector<32x256xf32>
    %c4 = arith.constant 4 : index
    %c0_8 = arith.constant 0 : index
    %c0_9 = arith.constant 0 : index
    %12 = vector.load %arg1[%c4, %c0_8, %c0_9] : memref<8x256x32xf32, #tpu.memory_space<vmem>>, vector<1x256x32xf32>
    %13 = vector.shape_cast %12 : vector<1x256x32xf32> to vector<256x32xf32>
    %14 = tpu.transpose %13, [1, 0] : vector<256x32xf32> -> vector<32x256xf32>
    %c5 = arith.constant 5 : index
    %c0_10 = arith.constant 0 : index
    %c0_11 = arith.constant 0 : index
    %15 = vector.load %arg1[%c5, %c0_10, %c0_11] : memref<8x256x32xf32, #tpu.memory_space<vmem>>, vector<1x256x32xf32>
    %16 = vector.shape_cast %15 : vector<1x256x32xf32> to vector<256x32xf32>
    %17 = tpu.transpose %16, [1, 0] : vector<256x32xf32> -> vector<32x256xf32>
    %c6 = arith.constant 6 : index
    %c0_12 = arith.constant 0 : index
    %c0_13 = arith.constant 0 : index
    %18 = vector.load %arg1[%c6, %c0_12, %c0_13] : memref<8x256x32xf32, #tpu.memory_space<vmem>>, vector<1x256x32xf32>
    %19 = vector.shape_cast %18 : vector<1x256x32xf32> to vector<256x32xf32>
    %20 = tpu.transpose %19, [1, 0] : vector<256x32xf32> -> vector<32x256xf32>
    %c7 = arith.constant 7 : index
    %c0_14 = arith.constant 0 : index
    %c0_15 = arith.constant 0 : index
    %21 = vector.load %arg1[%c7, %c0_14, %c0_15] : memref<8x256x32xf32, #tpu.memory_space<vmem>>, vector<1x256x32xf32>
    %22 = vector.shape_cast %21 : vector<1x256x32xf32> to vector<256x32xf32>
    %23 = tpu.transpose %22, [1, 0] : vector<256x32xf32> -> vector<32x256xf32>
    %24 = tpu.concatenate %2, %5, %8, %11, %14, %17, %20, %23 in 0 : vector<32x256xf32>, vector<32x256xf32>, vector<32x256xf32>, vector<32x256xf32>, vector<32x256xf32>, vector<32x256xf32>, vector<32x256xf32>, vector<32x256xf32> -> vector<256x256xf32>
    %c0_16 = arith.constant 0 : index
    %c0_17 = arith.constant 0 : index
    %25 = vector.load %arg2[%c0_16, %c0_17] : memref<256x8xf32, #tpu.memory_space<vmem>>, vector<256x8xf32>
    %cst = arith.constant dense<0.000000e+00> : vector<256x8xf32>
    %26 = tpu.matmul %24, %25, %cst {dimension_numbers = #tpu.dot_dimension_numbers<[1], [0], [0], [1], [0, 0, 1, 1], [], []>} : vector<256x256xf32>, vector<256x8xf32>, vector<256x8xf32> -> vector<256x8xf32>
    %c0_18 = arith.constant 0 : index
    %c0_19 = arith.constant 0 : index
    %27 = memref.load %arg11[%c0_18, %c0_19] : memref<1x1xf32, #tpu.memory_space<smem>>
    %c0_20 = arith.constant 0 : index
    %c0_21 = arith.constant 0 : index
    %28 = vector.load %arg3[%c0_20, %c0_21] : memref<2x32xf32, #tpu.memory_space<vmem>>, vector<2x32xf32>
    %c0_22 = arith.constant 0 : index
    %c0_23 = arith.constant 0 : index
    %29 = vector.load %arg4[%c0_22, %c0_23] : memref<2x8xf32, #tpu.memory_space<vmem>>, vector<2x8xf32>
    %c0_24 = arith.constant 0 : index
    %c0_25 = arith.constant 0 : index
    %30 = vector.load %arg5[%c0_24, %c0_25] : memref<32x32xf32, #tpu.memory_space<vmem>>, vector<32x32xf32>
    %c0_26 = arith.constant 0 : index
    %c0_27 = arith.constant 0 : index
    %31 = vector.load %arg6[%c0_26, %c0_27] : memref<32x8xf32, #tpu.memory_space<vmem>>, vector<32x8xf32>
    %c0_28 = arith.constant 0 : index
    %c0_29 = arith.constant 0 : index
    %32 = vector.load %arg7[%c0_28, %c0_29] : memref<8x8xf32, #tpu.memory_space<vmem>>, vector<8x8xf32>
    %c0_30 = arith.constant 0 : index
    %c0_31 = arith.constant 0 : index
    %33 = vector.load %arg8[%c0_30, %c0_31] : memref<8x1xf32, #tpu.memory_space<vmem>>, vector<8x1xf32>
    %34 = vector.extract_strided_slice %26 {offsets = [0, 0], sizes = [32, 8], strides = [1, 1]} : vector<256x8xf32> to vector<32x8xf32>
    %cst_32 = arith.constant dense<0.000000e+00> : vector<2x8xf32>
    %35 = tpu.matmul %28, %34, %cst_32 {dimension_numbers = #tpu.dot_dimension_numbers<[1], [0], [0], [1], [0, 0, 1, 1], [], []>} : vector<2x32xf32>, vector<32x8xf32>, vector<2x8xf32> -> vector<2x8xf32>
    %36 = arith.addf %35, %29 : vector<2x8xf32>
    %37 = vector.extract_strided_slice %36 {offsets = [0, 0], sizes = [1, 8], strides = [1, 1]} : vector<2x8xf32> to vector<1x8xf32>
    %38 = vector.extract_strided_slice %36 {offsets = [1, 0], sizes = [1, 8], strides = [1, 1]} : vector<2x8xf32> to vector<1x8xf32>
    %39 = tpu.transpose %37, [1, 0] : vector<1x8xf32> -> vector<8x1xf32>
    %40 = vector.broadcast %39 : vector<8x1xf32> to vector<8x8xf32>
    %41 = vector.broadcast %38 : vector<1x8xf32> to vector<8x8xf32>
    %42 = arith.subf %40, %41 : vector<8x8xf32>
    %43 = math.tanh %42 : vector<8x8xf32>
    %44 = vector.broadcast %27 : f32 to vector<8x8xf32>
    %45 = arith.mulf %44, %43 : vector<8x8xf32>
    %46 = arith.addf %32, %45 : vector<8x8xf32>
    %47 = math.absf %46 : vector<8x8xf32>
    %cst_33 = arith.constant dense<0.000000e+00> : vector<8x1xf32>
    %48 = tpu.matmul %47, %33, %cst_33 {dimension_numbers = #tpu.dot_dimension_numbers<[1], [0], [0], [1], [0, 0, 1, 1], [], []>} : vector<8x8xf32>, vector<8x1xf32>, vector<8x1xf32> -> vector<8x1xf32>
    %cst_34 = arith.constant dense<0.000000e+00> : vector<32x8xf32>
    %49 = tpu.matmul %30, %34, %cst_34 {dimension_numbers = #tpu.dot_dimension_numbers<[1], [0], [0], [1], [0, 0, 1, 1], [], []>} : vector<32x32xf32>, vector<32x8xf32>, vector<32x8xf32> -> vector<32x8xf32>
    %50 = arith.addf %49, %31 : vector<32x8xf32>
    %cst_35 = arith.constant dense<0.000000e+00> : vector<32x1xf32>
    %51 = tpu.matmul %50, %48, %cst_35 {dimension_numbers = #tpu.dot_dimension_numbers<[1], [0], [0], [1], [0, 0, 1, 1], [], []>} : vector<32x8xf32>, vector<8x1xf32>, vector<32x1xf32> -> vector<32x1xf32>
    %52 = vector.extract_strided_slice %26 {offsets = [32, 0], sizes = [32, 8], strides = [1, 1]} : vector<256x8xf32> to vector<32x8xf32>
    %cst_36 = arith.constant dense<0.000000e+00> : vector<2x8xf32>
    %53 = tpu.matmul %28, %52, %cst_36 {dimension_numbers = #tpu.dot_dimension_numbers<[1], [0], [0], [1], [0, 0, 1, 1], [], []>} : vector<2x32xf32>, vector<32x8xf32>, vector<2x8xf32> -> vector<2x8xf32>
    %54 = arith.addf %53, %29 : vector<2x8xf32>
    %55 = vector.extract_strided_slice %54 {offsets = [0, 0], sizes = [1, 8], strides = [1, 1]} : vector<2x8xf32> to vector<1x8xf32>
    %56 = vector.extract_strided_slice %54 {offsets = [1, 0], sizes = [1, 8], strides = [1, 1]} : vector<2x8xf32> to vector<1x8xf32>
    %57 = tpu.transpose %55, [1, 0] : vector<1x8xf32> -> vector<8x1xf32>
    %58 = vector.broadcast %57 : vector<8x1xf32> to vector<8x8xf32>
    %59 = vector.broadcast %56 : vector<1x8xf32> to vector<8x8xf32>
    %60 = arith.subf %58, %59 : vector<8x8xf32>
    %61 = math.tanh %60 : vector<8x8xf32>
    %62 = vector.broadcast %27 : f32 to vector<8x8xf32>
    %63 = arith.mulf %62, %61 : vector<8x8xf32>
    %64 = arith.addf %32, %63 : vector<8x8xf32>
    %65 = math.absf %64 : vector<8x8xf32>
    %cst_37 = arith.constant dense<0.000000e+00> : vector<8x1xf32>
    %66 = tpu.matmul %65, %33, %cst_37 {dimension_numbers = #tpu.dot_dimension_numbers<[1], [0], [0], [1], [0, 0, 1, 1], [], []>} : vector<8x8xf32>, vector<8x1xf32>, vector<8x1xf32> -> vector<8x1xf32>
    %cst_38 = arith.constant dense<0.000000e+00> : vector<32x8xf32>
    %67 = tpu.matmul %30, %52, %cst_38 {dimension_numbers = #tpu.dot_dimension_numbers<[1], [0], [0], [1], [0, 0, 1, 1], [], []>} : vector<32x32xf32>, vector<32x8xf32>, vector<32x8xf32> -> vector<32x8xf32>
    %68 = arith.addf %67, %31 : vector<32x8xf32>
    %cst_39 = arith.constant dense<0.000000e+00> : vector<32x1xf32>
    %69 = tpu.matmul %68, %66, %cst_39 {dimension_numbers = #tpu.dot_dimension_numbers<[1], [0], [0], [1], [0, 0, 1, 1], [], []>} : vector<32x8xf32>, vector<8x1xf32>, vector<32x1xf32> -> vector<32x1xf32>
    %70 = vector.extract_strided_slice %26 {offsets = [64, 0], sizes = [32, 8], strides = [1, 1]} : vector<256x8xf32> to vector<32x8xf32>
    %cst_40 = arith.constant dense<0.000000e+00> : vector<2x8xf32>
    %71 = tpu.matmul %28, %70, %cst_40 {dimension_numbers = #tpu.dot_dimension_numbers<[1], [0], [0], [1], [0, 0, 1, 1], [], []>} : vector<2x32xf32>, vector<32x8xf32>, vector<2x8xf32> -> vector<2x8xf32>
    %72 = arith.addf %71, %29 : vector<2x8xf32>
    %73 = vector.extract_strided_slice %72 {offsets = [0, 0], sizes = [1, 8], strides = [1, 1]} : vector<2x8xf32> to vector<1x8xf32>
    %74 = vector.extract_strided_slice %72 {offsets = [1, 0], sizes = [1, 8], strides = [1, 1]} : vector<2x8xf32> to vector<1x8xf32>
    %75 = tpu.transpose %73, [1, 0] : vector<1x8xf32> -> vector<8x1xf32>
    %76 = vector.broadcast %75 : vector<8x1xf32> to vector<8x8xf32>
    %77 = vector.broadcast %74 : vector<1x8xf32> to vector<8x8xf32>
    %78 = arith.subf %76, %77 : vector<8x8xf32>
    %79 = math.tanh %78 : vector<8x8xf32>
    %80 = vector.broadcast %27 : f32 to vector<8x8xf32>
    %81 = arith.mulf %80, %79 : vector<8x8xf32>
    %82 = arith.addf %32, %81 : vector<8x8xf32>
    %83 = math.absf %82 : vector<8x8xf32>
    %cst_41 = arith.constant dense<0.000000e+00> : vector<8x1xf32>
    %84 = tpu.matmul %83, %33, %cst_41 {dimension_numbers = #tpu.dot_dimension_numbers<[1], [0], [0], [1], [0, 0, 1, 1], [], []>} : vector<8x8xf32>, vector<8x1xf32>, vector<8x1xf32> -> vector<8x1xf32>
    %cst_42 = arith.constant dense<0.000000e+00> : vector<32x8xf32>
    %85 = tpu.matmul %30, %70, %cst_42 {dimension_numbers = #tpu.dot_dimension_numbers<[1], [0], [0], [1], [0, 0, 1, 1], [], []>} : vector<32x32xf32>, vector<32x8xf32>, vector<32x8xf32> -> vector<32x8xf32>
    %86 = arith.addf %85, %31 : vector<32x8xf32>
    %cst_43 = arith.constant dense<0.000000e+00> : vector<32x1xf32>
    %87 = tpu.matmul %86, %84, %cst_43 {dimension_numbers = #tpu.dot_dimension_numbers<[1], [0], [0], [1], [0, 0, 1, 1], [], []>} : vector<32x8xf32>, vector<8x1xf32>, vector<32x1xf32> -> vector<32x1xf32>
    %88 = vector.extract_strided_slice %26 {offsets = [96, 0], sizes = [32, 8], strides = [1, 1]} : vector<256x8xf32> to vector<32x8xf32>
    %cst_44 = arith.constant dense<0.000000e+00> : vector<2x8xf32>
    %89 = tpu.matmul %28, %88, %cst_44 {dimension_numbers = #tpu.dot_dimension_numbers<[1], [0], [0], [1], [0, 0, 1, 1], [], []>} : vector<2x32xf32>, vector<32x8xf32>, vector<2x8xf32> -> vector<2x8xf32>
    %90 = arith.addf %89, %29 : vector<2x8xf32>
    %91 = vector.extract_strided_slice %90 {offsets = [0, 0], sizes = [1, 8], strides = [1, 1]} : vector<2x8xf32> to vector<1x8xf32>
    %92 = vector.extract_strided_slice %90 {offsets = [1, 0], sizes = [1, 8], strides = [1, 1]} : vector<2x8xf32> to vector<1x8xf32>
    %93 = tpu.transpose %91, [1, 0] : vector<1x8xf32> -> vector<8x1xf32>
    %94 = vector.broadcast %93 : vector<8x1xf32> to vector<8x8xf32>
    %95 = vector.broadcast %92 : vector<1x8xf32> to vector<8x8xf32>
    %96 = arith.subf %94, %95 : vector<8x8xf32>
    %97 = math.tanh %96 : vector<8x8xf32>
    %98 = vector.broadcast %27 : f32 to vector<8x8xf32>
    %99 = arith.mulf %98, %97 : vector<8x8xf32>
    %100 = arith.addf %32, %99 : vector<8x8xf32>
    %101 = math.absf %100 : vector<8x8xf32>
    %cst_45 = arith.constant dense<0.000000e+00> : vector<8x1xf32>
    %102 = tpu.matmul %101, %33, %cst_45 {dimension_numbers = #tpu.dot_dimension_numbers<[1], [0], [0], [1], [0, 0, 1, 1], [], []>} : vector<8x8xf32>, vector<8x1xf32>, vector<8x1xf32> -> vector<8x1xf32>
    %cst_46 = arith.constant dense<0.000000e+00> : vector<32x8xf32>
    %103 = tpu.matmul %30, %88, %cst_46 {dimension_numbers = #tpu.dot_dimension_numbers<[1], [0], [0], [1], [0, 0, 1, 1], [], []>} : vector<32x32xf32>, vector<32x8xf32>, vector<32x8xf32> -> vector<32x8xf32>
    %104 = arith.addf %103, %31 : vector<32x8xf32>
    %cst_47 = arith.constant dense<0.000000e+00> : vector<32x1xf32>
    %105 = tpu.matmul %104, %102, %cst_47 {dimension_numbers = #tpu.dot_dimension_numbers<[1], [0], [0], [1], [0, 0, 1, 1], [], []>} : vector<32x8xf32>, vector<8x1xf32>, vector<32x1xf32> -> vector<32x1xf32>
    %106 = vector.extract_strided_slice %26 {offsets = [128, 0], sizes = [32, 8], strides = [1, 1]} : vector<256x8xf32> to vector<32x8xf32>
    %cst_48 = arith.constant dense<0.000000e+00> : vector<2x8xf32>
    %107 = tpu.matmul %28, %106, %cst_48 {dimension_numbers = #tpu.dot_dimension_numbers<[1], [0], [0], [1], [0, 0, 1, 1], [], []>} : vector<2x32xf32>, vector<32x8xf32>, vector<2x8xf32> -> vector<2x8xf32>
    %108 = arith.addf %107, %29 : vector<2x8xf32>
    %109 = vector.extract_strided_slice %108 {offsets = [0, 0], sizes = [1, 8], strides = [1, 1]} : vector<2x8xf32> to vector<1x8xf32>
    %110 = vector.extract_strided_slice %108 {offsets = [1, 0], sizes = [1, 8], strides = [1, 1]} : vector<2x8xf32> to vector<1x8xf32>
    %111 = tpu.transpose %109, [1, 0] : vector<1x8xf32> -> vector<8x1xf32>
    %112 = vector.broadcast %111 : vector<8x1xf32> to vector<8x8xf32>
    %113 = vector.broadcast %110 : vector<1x8xf32> to vector<8x8xf32>
    %114 = arith.subf %112, %113 : vector<8x8xf32>
    %115 = math.tanh %114 : vector<8x8xf32>
    %116 = vector.broadcast %27 : f32 to vector<8x8xf32>
    %117 = arith.mulf %116, %115 : vector<8x8xf32>
    %118 = arith.addf %32, %117 : vector<8x8xf32>
    %119 = math.absf %118 : vector<8x8xf32>
    %cst_49 = arith.constant dense<0.000000e+00> : vector<8x1xf32>
    %120 = tpu.matmul %119, %33, %cst_49 {dimension_numbers = #tpu.dot_dimension_numbers<[1], [0], [0], [1], [0, 0, 1, 1], [], []>} : vector<8x8xf32>, vector<8x1xf32>, vector<8x1xf32> -> vector<8x1xf32>
    %cst_50 = arith.constant dense<0.000000e+00> : vector<32x8xf32>
    %121 = tpu.matmul %30, %106, %cst_50 {dimension_numbers = #tpu.dot_dimension_numbers<[1], [0], [0], [1], [0, 0, 1, 1], [], []>} : vector<32x32xf32>, vector<32x8xf32>, vector<32x8xf32> -> vector<32x8xf32>
    %122 = arith.addf %121, %31 : vector<32x8xf32>
    %cst_51 = arith.constant dense<0.000000e+00> : vector<32x1xf32>
    %123 = tpu.matmul %122, %120, %cst_51 {dimension_numbers = #tpu.dot_dimension_numbers<[1], [0], [0], [1], [0, 0, 1, 1], [], []>} : vector<32x8xf32>, vector<8x1xf32>, vector<32x1xf32> -> vector<32x1xf32>
    %124 = vector.extract_strided_slice %26 {offsets = [160, 0], sizes = [32, 8], strides = [1, 1]} : vector<256x8xf32> to vector<32x8xf32>
    %cst_52 = arith.constant dense<0.000000e+00> : vector<2x8xf32>
    %125 = tpu.matmul %28, %124, %cst_52 {dimension_numbers = #tpu.dot_dimension_numbers<[1], [0], [0], [1], [0, 0, 1, 1], [], []>} : vector<2x32xf32>, vector<32x8xf32>, vector<2x8xf32> -> vector<2x8xf32>
    %126 = arith.addf %125, %29 : vector<2x8xf32>
    %127 = vector.extract_strided_slice %126 {offsets = [0, 0], sizes = [1, 8], strides = [1, 1]} : vector<2x8xf32> to vector<1x8xf32>
    %128 = vector.extract_strided_slice %126 {offsets = [1, 0], sizes = [1, 8], strides = [1, 1]} : vector<2x8xf32> to vector<1x8xf32>
    %129 = tpu.transpose %127, [1, 0] : vector<1x8xf32> -> vector<8x1xf32>
    %130 = vector.broadcast %129 : vector<8x1xf32> to vector<8x8xf32>
    %131 = vector.broadcast %128 : vector<1x8xf32> to vector<8x8xf32>
    %132 = arith.subf %130, %131 : vector<8x8xf32>
    %133 = math.tanh %132 : vector<8x8xf32>
    %134 = vector.broadcast %27 : f32 to vector<8x8xf32>
    %135 = arith.mulf %134, %133 : vector<8x8xf32>
    %136 = arith.addf %32, %135 : vector<8x8xf32>
    %137 = math.absf %136 : vector<8x8xf32>
    %cst_53 = arith.constant dense<0.000000e+00> : vector<8x1xf32>
    %138 = tpu.matmul %137, %33, %cst_53 {dimension_numbers = #tpu.dot_dimension_numbers<[1], [0], [0], [1], [0, 0, 1, 1], [], []>} : vector<8x8xf32>, vector<8x1xf32>, vector<8x1xf32> -> vector<8x1xf32>
    %cst_54 = arith.constant dense<0.000000e+00> : vector<32x8xf32>
    %139 = tpu.matmul %30, %124, %cst_54 {dimension_numbers = #tpu.dot_dimension_numbers<[1], [0], [0], [1], [0, 0, 1, 1], [], []>} : vector<32x32xf32>, vector<32x8xf32>, vector<32x8xf32> -> vector<32x8xf32>
    %140 = arith.addf %139, %31 : vector<32x8xf32>
    %cst_55 = arith.constant dense<0.000000e+00> : vector<32x1xf32>
    %141 = tpu.matmul %140, %138, %cst_55 {dimension_numbers = #tpu.dot_dimension_numbers<[1], [0], [0], [1], [0, 0, 1, 1], [], []>} : vector<32x8xf32>, vector<8x1xf32>, vector<32x1xf32> -> vector<32x1xf32>
    %142 = vector.extract_strided_slice %26 {offsets = [192, 0], sizes = [32, 8], strides = [1, 1]} : vector<256x8xf32> to vector<32x8xf32>
    %cst_56 = arith.constant dense<0.000000e+00> : vector<2x8xf32>
    %143 = tpu.matmul %28, %142, %cst_56 {dimension_numbers = #tpu.dot_dimension_numbers<[1], [0], [0], [1], [0, 0, 1, 1], [], []>} : vector<2x32xf32>, vector<32x8xf32>, vector<2x8xf32> -> vector<2x8xf32>
    %144 = arith.addf %143, %29 : vector<2x8xf32>
    %145 = vector.extract_strided_slice %144 {offsets = [0, 0], sizes = [1, 8], strides = [1, 1]} : vector<2x8xf32> to vector<1x8xf32>
    %146 = vector.extract_strided_slice %144 {offsets = [1, 0], sizes = [1, 8], strides = [1, 1]} : vector<2x8xf32> to vector<1x8xf32>
    %147 = tpu.transpose %145, [1, 0] : vector<1x8xf32> -> vector<8x1xf32>
    %148 = vector.broadcast %147 : vector<8x1xf32> to vector<8x8xf32>
    %149 = vector.broadcast %146 : vector<1x8xf32> to vector<8x8xf32>
    %150 = arith.subf %148, %149 : vector<8x8xf32>
    %151 = math.tanh %150 : vector<8x8xf32>
    %152 = vector.broadcast %27 : f32 to vector<8x8xf32>
    %153 = arith.mulf %152, %151 : vector<8x8xf32>
    %154 = arith.addf %32, %153 : vector<8x8xf32>
    %155 = math.absf %154 : vector<8x8xf32>
    %cst_57 = arith.constant dense<0.000000e+00> : vector<8x1xf32>
    %156 = tpu.matmul %155, %33, %cst_57 {dimension_numbers = #tpu.dot_dimension_numbers<[1], [0], [0], [1], [0, 0, 1, 1], [], []>} : vector<8x8xf32>, vector<8x1xf32>, vector<8x1xf32> -> vector<8x1xf32>
    %cst_58 = arith.constant dense<0.000000e+00> : vector<32x8xf32>
    %157 = tpu.matmul %30, %142, %cst_58 {dimension_numbers = #tpu.dot_dimension_numbers<[1], [0], [0], [1], [0, 0, 1, 1], [], []>} : vector<32x32xf32>, vector<32x8xf32>, vector<32x8xf32> -> vector<32x8xf32>
    %158 = arith.addf %157, %31 : vector<32x8xf32>
    %cst_59 = arith.constant dense<0.000000e+00> : vector<32x1xf32>
    %159 = tpu.matmul %158, %156, %cst_59 {dimension_numbers = #tpu.dot_dimension_numbers<[1], [0], [0], [1], [0, 0, 1, 1], [], []>} : vector<32x8xf32>, vector<8x1xf32>, vector<32x1xf32> -> vector<32x1xf32>
    %160 = vector.extract_strided_slice %26 {offsets = [224, 0], sizes = [32, 8], strides = [1, 1]} : vector<256x8xf32> to vector<32x8xf32>
    %cst_60 = arith.constant dense<0.000000e+00> : vector<2x8xf32>
    %161 = tpu.matmul %28, %160, %cst_60 {dimension_numbers = #tpu.dot_dimension_numbers<[1], [0], [0], [1], [0, 0, 1, 1], [], []>} : vector<2x32xf32>, vector<32x8xf32>, vector<2x8xf32> -> vector<2x8xf32>
    %162 = arith.addf %161, %29 : vector<2x8xf32>
    %163 = vector.extract_strided_slice %162 {offsets = [0, 0], sizes = [1, 8], strides = [1, 1]} : vector<2x8xf32> to vector<1x8xf32>
    %164 = vector.extract_strided_slice %162 {offsets = [1, 0], sizes = [1, 8], strides = [1, 1]} : vector<2x8xf32> to vector<1x8xf32>
    %165 = tpu.transpose %163, [1, 0] : vector<1x8xf32> -> vector<8x1xf32>
    %166 = vector.broadcast %165 : vector<8x1xf32> to vector<8x8xf32>
    %167 = vector.broadcast %164 : vector<1x8xf32> to vector<8x8xf32>
    %168 = arith.subf %166, %167 : vector<8x8xf32>
    %169 = math.tanh %168 : vector<8x8xf32>
    %170 = vector.broadcast %27 : f32 to vector<8x8xf32>
    %171 = arith.mulf %170, %169 : vector<8x8xf32>
    %172 = arith.addf %32, %171 : vector<8x8xf32>
    %173 = math.absf %172 : vector<8x8xf32>
    %cst_61 = arith.constant dense<0.000000e+00> : vector<8x1xf32>
    %174 = tpu.matmul %173, %33, %cst_61 {dimension_numbers = #tpu.dot_dimension_numbers<[1], [0], [0], [1], [0, 0, 1, 1], [], []>} : vector<8x8xf32>, vector<8x1xf32>, vector<8x1xf32> -> vector<8x1xf32>
    %cst_62 = arith.constant dense<0.000000e+00> : vector<32x8xf32>
    %175 = tpu.matmul %30, %160, %cst_62 {dimension_numbers = #tpu.dot_dimension_numbers<[1], [0], [0], [1], [0, 0, 1, 1], [], []>} : vector<32x32xf32>, vector<32x8xf32>, vector<32x8xf32> -> vector<32x8xf32>
    %176 = arith.addf %175, %31 : vector<32x8xf32>
    %cst_63 = arith.constant dense<0.000000e+00> : vector<32x1xf32>
    %177 = tpu.matmul %176, %174, %cst_63 {dimension_numbers = #tpu.dot_dimension_numbers<[1], [0], [0], [1], [0, 0, 1, 1], [], []>} : vector<32x8xf32>, vector<8x1xf32>, vector<32x1xf32> -> vector<32x1xf32>
    %178 = tpu.concatenate %51, %69, %87, %105, %123, %141, %159, %177 in 1 : vector<32x1xf32>, vector<32x1xf32>, vector<32x1xf32>, vector<32x1xf32>, vector<32x1xf32>, vector<32x1xf32>, vector<32x1xf32>, vector<32x1xf32> -> vector<32x8xf32>
    %179 = tpu.transpose %178, [1, 0] : vector<32x8xf32> -> vector<8x32xf32>
    %c0_64 = arith.constant 0 : index
    %c0_65 = arith.constant 0 : index
    %180 = vector.load %arg9[%c0_64, %c0_65] : memref<32x128xf32, #tpu.memory_space<vmem>>, vector<32x128xf32>
    %cst_66 = arith.constant dense<0.000000e+00> : vector<8x128xf32>
    %181 = tpu.matmul %179, %180, %cst_66 {dimension_numbers = #tpu.dot_dimension_numbers<[1], [0], [0], [1], [0, 0, 1, 1], [], []>} : vector<8x32xf32>, vector<32x128xf32>, vector<8x128xf32> -> vector<8x128xf32>
    %c0_67 = arith.constant 0 : index
    %c0_68 = arith.constant 0 : index
    %182 = vector.load %arg10[%c0_67, %c0_68] : memref<1x128xf32, #tpu.memory_space<vmem>>, vector<1x128xf32>
    %183 = vector.broadcast %182 : vector<1x128xf32> to vector<8x128xf32>
    %184 = arith.addf %181, %183 : vector<8x128xf32>
    %185 = vector.shape_cast %184 : vector<8x128xf32> to vector<1x8x128xf32>
    %c0_69 = arith.constant 0 : index
    %c0_70 = arith.constant 0 : index
    %c0_71 = arith.constant 0 : index
    %186 = vector.load %arg12[%c0_69, %c0_70, %c0_71] : memref<1x8x128xf32, #tpu.memory_space<vmem>>, vector<1x8x128xf32>
    tpu.vector_store %arg12[%c0_69, %c0_70, %c0_71], %185 {strides = array<i32>} : memref<1x8x128xf32, #tpu.memory_space<vmem>>, vector<1x8x128xf32>,
    return
  }
  func.func @transform_0(%arg0: i32) -> (i32, i32, i32) {
    %c0_i32 = arith.constant 0 : i32
    %c0_i32_0 = arith.constant 0 : i32
    %c0_i32_1 = arith.constant 0 : i32
    return %arg0, %c0_i32, %c0_i32_0 : i32, i32, i32
  }
  func.func @transform_1(%arg0: i32) -> (i32, i32) {
    %c0_i32 = arith.constant 0 : i32
    %c0_i32_0 = arith.constant 0 : i32
    %c0_i32_1 = arith.constant 0 : i32
    return %c0_i32, %c0_i32_0 : i32, i32
  }
  func.func @transform_2(%arg0: i32) -> (i32, i32) {
    %c0_i32 = arith.constant 0 : i32
    %c0_i32_0 = arith.constant 0 : i32
    %c0_i32_1 = arith.constant 0 : i32
    return %c0_i32, %c0_i32_0 : i32, i32
  }
  func.func @transform_3(%arg0: i32) -> (i32, i32) {
    %c0_i32 = arith.constant 0 : i32
    %c0_i32_0 = arith.constant 0 : i32
    %c0_i32_1 = arith.constant 0 : i32
    return %c0_i32, %c0_i32_0 : i32, i32
  }
  func.func @transform_4(%arg0: i32) -> (i32, i32) {
    %c0_i32 = arith.constant 0 : i32
    %c0_i32_0 = arith.constant 0 : i32
    %c0_i32_1 = arith.constant 0 : i32
    return %c0_i32, %c0_i32_0 : i32, i32
  }
  func.func @transform_5(%arg0: i32) -> (i32, i32) {
    %c0_i32 = arith.constant 0 : i32
    %c0_i32_0 = arith.constant 0 : i32
    %c0_i32_1 = arith.constant 0 : i32
    return %c0_i32, %c0_i32_0 : i32, i32
  }
  func.func @transform_6(%arg0: i32) -> (i32, i32) {
    %c0_i32 = arith.constant 0 : i32
    %c0_i32_0 = arith.constant 0 : i32
    %c0_i32_1 = arith.constant 0 : i32
    return %c0_i32, %c0_i32_0 : i32, i32
  }
  func.func @transform_7(%arg0: i32) -> (i32, i32) {
    %c0_i32 = arith.constant 0 : i32
    %c0_i32_0 = arith.constant 0 : i32
    %c0_i32_1 = arith.constant 0 : i32
    return %c0_i32, %c0_i32_0 : i32, i32
  }
  func.func @transform_8(%arg0: i32) -> (i32, i32) {
    %c0_i32 = arith.constant 0 : i32
    %c0_i32_0 = arith.constant 0 : i32
    %c0_i32_1 = arith.constant 0 : i32
    return %c0_i32, %c0_i32_0 : i32, i32
  }
  func.func @transform_9(%arg0: i32) -> (i32, i32) {
    %c0_i32 = arith.constant 0 : i32
    %c0_i32_0 = arith.constant 0 : i32
    %c0_i32_1 = arith.constant 0 : i32
    return %c0_i32, %c0_i32_0 : i32, i32
  }
  func.func @transform_10(%arg0: i32) -> (i32, i32) {
    %c0_i32 = arith.constant 0 : i32
    %c0_i32_0 = arith.constant 0 : i32
    %c0_i32_1 = arith.constant 0 : i32
    return %c0_i32, %c0_i32_0 : i32, i32
  }
  func.func @transform_11(%arg0: i32) -> (i32, i32, i32) {
    %c0_i32 = arith.constant 0 : i32
    %c0_i32_0 = arith.constant 0 : i32
    %c0_i32_1 = arith.constant 0 : i32
    return %arg0, %c0_i32, %c0_i32_0 : i32, i32, i32
  }
}

</mosaic_0001>

<llo_original>
// kernel: tpu_custom_call.1
$region0: #{tpu_custom_call.1}
  #allocation0 [shape = 'u32[]', space=smem, size = 0x4, offset = 0x4, fixed_abs, tag = 'smem constant byte address 0x4 - core index']
  #allocation1 [shape = 'u32[144,128]{1,0:T(1,128)}', space=vmem, size = 0x12000, scoped, tag = 'internal scratch']
  #allocation2 [shape = 'f32[1,1]{1,0:T(1,128)S(6)}', space=smem, size = 0x200, scoped, tag = 'scoped memory for tpu_custom_call.1']
  %s0 = inlined_call_operand.vmem [shape: f32[16,256,32], index: 0, kind: input, shape index: {}]
  %s1 = inlined_call_operand.vmem [shape: f32[256,8], index: 1, kind: input, shape index: {}]
  %s2 = inlined_call_operand.vmem [shape: f32[2,32], index: 2, kind: input, shape index: {}]
  %s3 = inlined_call_operand.vmem [shape: f32[2,8], index: 3, kind: input, shape index: {}]
  %s4 = inlined_call_operand.vmem [shape: f32[32,32], index: 4, kind: input, shape index: {}]
  %s5 = inlined_call_operand.vmem [shape: f32[32,8], index: 5, kind: input, shape index: {}]
  %s6 = inlined_call_operand.vmem [shape: f32[8,8], index: 6, kind: input, shape index: {}]
  %s7 = inlined_call_operand.vmem [shape: f32[8,1], index: 7, kind: input, shape index: {}]
  %s8 = inlined_call_operand.vmem [shape: f32[32,128], index: 8, kind: input, shape index: {}]
  %s9 = inlined_call_operand.vmem [shape: f32[1,128], index: 9, kind: input, shape index: {}]
  %s10 = inlined_call_operand.<no memory space> [shape: f32[1,1], index: 10, kind: input, shape index: {}]
  %s11 = inlined_call_operand.hbm [shape: f32[2,8,128], index: 11, kind: output, shape index: {}]
  %s12 = sld [smem:[#allocation0]]
  $region77: #{tpu_custom_call.1} parent=0
    _
  %s14 = ssub.s32 1, %s12
  %s15 = scalar_select 0, %s14, %s12
  %16 = sst [smem:[#allocation2]] %s10
  $region1: #{tpu_custom_call.1} parent=0
    #allocation3 [shape = 'u8[8192]{0}', space=vmem, size = 0x2000, scoped, tag = 'output window, operand 0']
    #allocation4 [shape = 's32[2]{0}', space=sflag, size = 0x8, scoped, tag = 'scoped memory for tpu_custom_call.1']
    %17 = vsyncpa [#allocation4], 0
    %s18 = scalar_lea.sflag [#allocation4], 1
    %19 = vsyncpa %s18, 0
    loop: start=0, step=1, limit=4
    $region2: #{tpu_custom_call.1} parent=1 // loop_pre_header
      _
    $region3: #{tpu_custom_call.1} parent=1 // loop_header
      %s21 = sphi 0, %s25
      %p22 = scmp.ge.s32.totalorder %s21, 4
      %s31 = sphi 0, %s33
      %s34 = sphi 0, %s31
      %s35 = sphi 0, %s34
      %s51 = sphi 0, %s35
      %s55 = sphi 0, %s55
      %s57 = sphi 0, %s55
      %s58 = sphi 0, %s57
      %s72 = sphi 0, %s58
      %s76 = sphi 0, %s76
      %s78 = sphi 0, %s76
      %s79 = sphi 0, %s78
      %s93 = sphi 0, %s79
      %s97 = sphi 0, %s97
      %s99 = sphi 0, %s97
      %s100 = sphi 0, %s99
      %s114 = sphi 0, %s100
      %s118 = sphi 0, %s118
      %s120 = sphi 0, %s118
      %s121 = sphi 0, %s120
      %s135 = sphi 0, %s121
      %s139 = sphi 0, %s139
      %s141 = sphi 0, %s139
      %s142 = sphi 0, %s141
      %s156 = sphi 0, %s142
      %s160 = sphi 0, %s160
      %s162 = sphi 0, %s160
      %s163 = sphi 0, %s162
      %s177 = sphi 0, %s163
      %s181 = sphi 0, %s181
      %s183 = sphi 0, %s181
      %s184 = sphi 0, %s183
      %s198 = sphi 0, %s184
      %s202 = sphi 0, %s202
      %s204 = sphi 0, %s202
      %s205 = sphi 0, %s204
      %s219 = sphi 0, %s205
      %s223 = sphi 0, %s223
      %s225 = sphi 0, %s223
      %s226 = sphi 0, %s225
      %s240 = sphi 0, %s226
      %s244 = sphi 0, %s244
      %s246 = sphi 0, %s244
      %s247 = sphi 0, %s246
      %s261 = sphi 0, %s247
      %s267 = sphi 0, %s269
      %s270 = sphi 0, %s267
      %s271 = sphi 0, %s270
      %s287 = sphi 0, %s271
    $region4: #{tpu_custom_call.1} parent=1 // loop_header_branch
      %24 = sbr.rel (%p22) target = $region8
    $region5: #{tpu_custom_call.1} parent=1 // loop_body
      %s26 = ssub.s32 %s21, 1
      %s27 = ssub.s32 %s21, 2
      %s28 = sadd.s32 %s21, 1
      %s29 = ssub.s32 %s21, %s28
      %p30 = scmp.eq.s32.totalorder %s29, 0
      %s32 = sadd.s32 %s31, 1
      %s33 = scalar_select %p30, %s31, %s32
      %p36 = pneg %p30
      %p37 = scmp.eq.s32.totalorder %s21, 1
      %p38 = por %p36, %p37
      %p39 = scmp.ne.s32.totalorder %s31, %s34
      %p40 = scmp.eq.s32.totalorder %s21, 0
      %p41 = por %p39, %p40
      %p42 = scmp.ne.s32.totalorder %s31, %s34
      %p43 = scmp.eq.s32.totalorder %s26, 1
      %p44 = por %p42, %p43
      %p45 = scmp.ne.s32.totalorder %s34, %s35
      %p46 = scmp.eq.s32.totalorder %s26, 0
      %p47 = por %p45, %p46
      %p48 = scmp.ne.s32.totalorder %s34, %s35
      %p49 = scmp.eq.s32.totalorder %s27, 1
      %p50 = por %p48, %p49
      %p52 = scmp.ne.s32.totalorder %s35, %s51
      %p53 = scmp.eq.s32.totalorder %s27, 0
      %p54 = por %p52, %p53
      %s56 = sadd.s32 %s55, 1
      %p59 = scmp.eq.s32.totalorder %s21, 1
      %p60 = scmp.ne.s32.totalorder %s55, %s57
      %p61 = scmp.eq.s32.totalorder %s21, 0
      %p62 = por %p60, %p61
      %p63 = scmp.ne.s32.totalorder %s55, %s57
      %p64 = scmp.eq.s32.totalorder %s26, 1
      %p65 = por %p63, %p64
      %p66 = scmp.ne.s32.totalorder %s57, %s58
      %p67 = scmp.eq.s32.totalorder %s26, 0
      %p68 = por %p66, %p67
      %p69 = scmp.ne.s32.totalorder %s57, %s58
      %p70 = scmp.eq.s32.totalorder %s27, 1
      %p71 = por %p69, %p70
      %p73 = scmp.ne.s32.totalorder %s58, %s72
      %p74 = scmp.eq.s32.totalorder %s27, 0
      %p75 = por %p73, %p74
      %s77 = sadd.s32 %s76, 1
      %p80 = scmp.eq.s32.totalorder %s21, 1
      %p81 = scmp.ne.s32.totalorder %s76, %s78
      %p82 = scmp.eq.s32.totalorder %s21, 0
      %p83 = por %p81, %p82
      %p84 = scmp.ne.s32.totalorder %s76, %s78
      %p85 = scmp.eq.s32.totalorder %s26, 1
      %p86 = por %p84, %p85
      %p87 = scmp.ne.s32.totalorder %s78, %s79
      %p88 = scmp.eq.s32.totalorder %s26, 0
      %p89 = por %p87, %p88
      %p90 = scmp.ne.s32.totalorder %s78, %s79
      %p91 = scmp.eq.s32.totalorder %s27, 1
      %p92 = por %p90, %p91
      %p94 = scmp.ne.s32.totalorder %s79, %s93
      %p95 = scmp.eq.s32.totalorder %s27, 0
      %p96 = por %p94, %p95
      %s98 = sadd.s32 %s97, 1
      %p101 = scmp.eq.s32.totalorder %s21, 1
      %p102 = scmp.ne.s32.totalorder %s97, %s99
      %p103 = scmp.eq.s32.totalorder %s21, 0
      %p104 = por %p102, %p103
      %p105 = scmp.ne.s32.totalorder %s97, %s99
      %p106 = scmp.eq.s32.totalorder %s26, 1
      %p107 = por %p105, %p106
      %p108 = scmp.ne.s32.totalorder %s99, %s100
      %p109 = scmp.eq.s32.totalorder %s26, 0
      %p110 = por %p108, %p109
      %p111 = scmp.ne.s32.totalorder %s99, %s100
      %p112 = scmp.eq.s32.totalorder %s27, 1
      %p113 = por %p111, %p112
      %p115 = scmp.ne.s32.totalorder %s100, %s114
      %p116 = scmp.eq.s32.totalorder %s27, 0
      %p117 = por %p115, %p116
      %s119 = sadd.s32 %s118, 1
      %p122 = scmp.eq.s32.totalorder %s21, 1
      %p123 = scmp.ne.s32.totalorder %s118, %s120
      %p124 = scmp.eq.s32.totalorder %s21, 0
      %p125 = por %p123, %p124
      %p126 = scmp.ne.s32.totalorder %s118, %s120
      %p127 = scmp.eq.s32.totalorder %s26, 1
      %p128 = por %p126, %p127
      %p129 = scmp.ne.s32.totalorder %s120, %s121
      %p130 = scmp.eq.s32.totalorder %s26, 0
      %p131 = por %p129, %p130
      %p132 = scmp.ne.s32.totalorder %s120, %s121
      %p133 = scmp.eq.s32.totalorder %s27, 1
      %p134 = por %p132, %p133
      %p136 = scmp.ne.s32.totalorder %s121, %s135
      %p137 = scmp.eq.s32.totalorder %s27, 0
      %p138 = por %p136, %p137
      %s140 = sadd.s32 %s139, 1
      %p143 = scmp.eq.s32.totalorder %s21, 1
      %p144 = scmp.ne.s32.totalorder %s139, %s141
      %p145 = scmp.eq.s32.totalorder %s21, 0
      %p146 = por %p144, %p145
      %p147 = scmp.ne.s32.totalorder %s139, %s141
      %p148 = scmp.eq.s32.totalorder %s26, 1
      %p149 = por %p147, %p148
      %p150 = scmp.ne.s32.totalorder %s141, %s142
      %p151 = scmp.eq.s32.totalorder %s26, 0
      %p152 = por %p150, %p151
      %p153 = scmp.ne.s32.totalorder %s141, %s142
      %p154 = scmp.eq.s32.totalorder %s27, 1
      %p155 = por %p153, %p154
      %p157 = scmp.ne.s32.totalorder %s142, %s156
      %p158 = scmp.eq.s32.totalorder %s27, 0
      %p159 = por %p157, %p158
      %s161 = sadd.s32 %s160, 1
      %p164 = scmp.eq.s32.totalorder %s21, 1
      %p165 = scmp.ne.s32.totalorder %s160, %s162
      %p166 = scmp.eq.s32.totalorder %s21, 0
      %p167 = por %p165, %p166
      %p168 = scmp.ne.s32.totalorder %s160, %s162
      %p169 = scmp.eq.s32.totalorder %s26, 1
      %p170 = por %p168, %p169
      %p171 = scmp.ne.s32.totalorder %s162, %s163
      %p172 = scmp.eq.s32.totalorder %s26, 0
      %p173 = por %p171, %p172
      %p174 = scmp.ne.s32.totalorder %s162, %s163
      %p175 = scmp.eq.s32.totalorder %s27, 1
      %p176 = por %p174, %p175
      %p178 = scmp.ne.s32.totalorder %s163, %s177
      %p179 = scmp.eq.s32.totalorder %s27, 0
      %p180 = por %p178, %p179
      %s182 = sadd.s32 %s181, 1
      %p185 = scmp.eq.s32.totalorder %s21, 1
      %p186 = scmp.ne.s32.totalorder %s181, %s183
      %p187 = scmp.eq.s32.totalorder %s21, 0
      %p188 = por %p186, %p187
      %p189 = scmp.ne.s32.totalorder %s181, %s183
      %p190 = scmp.eq.s32.totalorder %s26, 1
      %p191 = por %p189, %p190
      %p192 = scmp.ne.s32.totalorder %s183, %s184
      %p193 = scmp.eq.s32.totalorder %s26, 0
      %p194 = por %p192, %p193
      %p195 = scmp.ne.s32.totalorder %s183, %s184
      %p196 = scmp.eq.s32.totalorder %s27, 1
      %p197 = por %p195, %p196
      %p199 = scmp.ne.s32.totalorder %s184, %s198
      %p200 = scmp.eq.s32.totalorder %s27, 0
      %p201 = por %p199, %p200
      %s203 = sadd.s32 %s202, 1
      %p206 = scmp.eq.s32.totalorder %s21, 1
      %p207 = scmp.ne.s32.totalorder %s202, %s204
      %p208 = scmp.eq.s32.totalorder %s21, 0
      %p209 = por %p207, %p208
      %p210 = scmp.ne.s32.totalorder %s202, %s204
      %p211 = scmp.eq.s32.totalorder %s26, 1
      %p212 = por %p210, %p211
      %p213 = scmp.ne.s32.totalorder %s204, %s205
      %p214 = scmp.eq.s32.totalorder %s26, 0
      %p215 = por %p213, %p214
      %p216 = scmp.ne.s32.totalorder %s204, %s205
      %p217 = scmp.eq.s32.totalorder %s27, 1
      %p218 = por %p216, %p217
      %p220 = scmp.ne.s32.totalorder %s205, %s219
      %p221 = scmp.eq.s32.totalorder %s27, 0
      %p222 = por %p220, %p221
      %s224 = sadd.s32 %s223, 1
      %p227 = scmp.eq.s32.totalorder %s21, 1
      %p228 = scmp.ne.s32.totalorder %s223, %s225
      %p229 = scmp.eq.s32.totalorder %s21, 0
      %p230 = por %p228, %p229
      %p231 = scmp.ne.s32.totalorder %s223, %s225
      %p232 = scmp.eq.s32.totalorder %s26, 1
      %p233 = por %p231, %p232
      %p234 = scmp.ne.s32.totalorder %s225, %s226
      %p235 = scmp.eq.s32.totalorder %s26, 0
      %p236 = por %p234, %p235
      %p237 = scmp.ne.s32.totalorder %s225, %s226
      %p238 = scmp.eq.s32.totalorder %s27, 1
      %p239 = por %p237, %p238
      %p241 = scmp.ne.s32.totalorder %s226, %s240
      %p242 = scmp.eq.s32.totalorder %s27, 0
      %p243 = por %p241, %p242
      %s245 = sadd.s32 %s244, 1
      %p248 = scmp.eq.s32.totalorder %s21, 1
      %p249 = scmp.ne.s32.totalorder %s244, %s246
      %p250 = scmp.eq.s32.totalorder %s21, 0
      %p251 = por %p249, %p250
      %p252 = scmp.ne.s32.totalorder %s244, %s246
      %p253 = scmp.eq.s32.totalorder %s26, 1
      %p254 = por %p252, %p253
      %p255 = scmp.ne.s32.totalorder %s246, %s247
      %p256 = scmp.eq.s32.totalorder %s26, 0
      %p257 = por %p255, %p256
      %p258 = scmp.ne.s32.totalorder %s246, %s247
      %p259 = scmp.eq.s32.totalorder %s27, 1
      %p260 = por %p258, %p259
      %p262 = scmp.ne.s32.totalorder %s247, %s261
      %p263 = scmp.eq.s32.totalorder %s27, 0
      %p264 = por %p262, %p263
      %s265 = ssub.s32 %s21, %s28
      %p266 = scmp.eq.s32.totalorder %s265, 0
      %s268 = sadd.s32 %s267, 1
      %s269 = scalar_select %p266, %s267, %s268
      %p272 = pneg %p266
      %p273 = scmp.eq.s32.totalorder %s21, 1
      %p274 = por %p272, %p273
      %p275 = scmp.ne.s32.totalorder %s267, %s270
      %p276 = scmp.eq.s32.totalorder %s21, 0
      %p277 = por %p275, %p276
      %p278 = scmp.ne.s32.totalorder %s267, %s270
      %p279 = scmp.eq.s32.totalorder %s26, 1
      %p280 = por %p278, %p279
      %p281 = scmp.ne.s32.totalorder %s270, %s271
      %p282 = scmp.eq.s32.totalorder %s26, 0
      %p283 = por %p281, %p282
      %p284 = scmp.ne.s32.totalorder %s270, %s271
      %p285 = scmp.eq.s32.totalorder %s27, 1
      %p286 = por %p284, %p285
      %p288 = scmp.ne.s32.totalorder %s271, %s287
      %p289 = scmp.eq.s32.totalorder %s27, 0
      %p290 = por %p288, %p289
      %p291 = scmp.le.s32.totalorder 1, %s21
      %p292 = scmp.lt.s32.totalorder %s21, 3
      %p293 = pnand %p291, %p292
      %p294 = pneg %p293
      // Predicated region
      $region9: #{tpu_custom_call.1} parent=5 // pred_check
        _
      $region10: #{tpu_custom_call.1} parent=5 // pred_check_branch
        %296 = sbr.rel (%p293) target = $region12
      $region11: #{tpu_custom_call.1} parent=5 // pred_region
        %s297 = ssub.s32 %s21, 1
        // Predicated region
        $region13: #{tpu_custom_call.1} parent=11 // pred_check
          %p298 = pneg %p68
        $region14: #{tpu_custom_call.1} parent=11 // pred_check_branch
          %300 = sbr.rel (%p298) target = $region16
        $region15: #{tpu_custom_call.1} parent=11 // pred_region
          _
        $region16: #{tpu_custom_call.1} parent=11 // pred_fallthru
          _
        // Predicated region
        $region17: #{tpu_custom_call.1} parent=11 // pred_check
          %p301 = pneg %p89
        $region18: #{tpu_custom_call.1} parent=11 // pred_check_branch
          %303 = sbr.rel (%p301) target = $region20
        $region19: #{tpu_custom_call.1} parent=11 // pred_region
          _
        $region20: #{tpu_custom_call.1} parent=11 // pred_fallthru
          _
        // Predicated region
        $region21: #{tpu_custom_call.1} parent=11 // pred_check
          %p304 = pneg %p110
        $region22: #{tpu_custom_call.1} parent=11 // pred_check_branch
          %306 = sbr.rel (%p304) target = $region24
        $region23: #{tpu_custom_call.1} parent=11 // pred_region
          _
        $region24: #{tpu_custom_call.1} parent=11 // pred_fallthru
          _
        // Predicated region
        $region25: #{tpu_custom_call.1} parent=11 // pred_check
          %p307 = pneg %p131
        $region26: #{tpu_custom_call.1} parent=11 // pred_check_branch
          %309 = sbr.rel (%p307) target = $region28
        $region27: #{tpu_custom_call.1} parent=11 // pred_region
          _
        $region28: #{tpu_custom_call.1} parent=11 // pred_fallthru
          _
        // Predicated region
        $region29: #{tpu_custom_call.1} parent=11 // pred_check
          %p310 = pneg %p152
        $region30: #{tpu_custom_call.1} parent=11 // pred_check_branch
          %312 = sbr.rel (%p310) target = $region32
        $region31: #{tpu_custom_call.1} parent=11 // pred_region
          _
        $region32: #{tpu_custom_call.1} parent=11 // pred_fallthru
          _
        // Predicated region
        $region33: #{tpu_custom_call.1} parent=11 // pred_check
          %p313 = pneg %p173
        $region34: #{tpu_custom_call.1} parent=11 // pred_check_branch
          %315 = sbr.rel (%p313) target = $region36
        $region35: #{tpu_custom_call.1} parent=11 // pred_region
          _
        $region36: #{tpu_custom_call.1} parent=11 // pred_fallthru
          _
        // Predicated region
        $region37: #{tpu_custom_call.1} parent=11 // pred_check
          %p316 = pneg %p194
        $region38: #{tpu_custom_call.1} parent=11 // pred_check_branch
          %318 = sbr.rel (%p316) target = $region40
        $region39: #{tpu_custom_call.1} parent=11 // pred_region
          _
        $region40: #{tpu_custom_call.1} parent=11 // pred_fallthru
          _
        // Predicated region
        $region41: #{tpu_custom_call.1} parent=11 // pred_check
          %p319 = pneg %p215
        $region42: #{tpu_custom_call.1} parent=11 // pred_check_branch
          %321 = sbr.rel (%p319) target = $region44
        $region43: #{tpu_custom_call.1} parent=11 // pred_region
          _
        $region44: #{tpu_custom_call.1} parent=11 // pred_fallthru
          _
        // Predicated region
        $region45: #{tpu_custom_call.1} parent=11 // pred_check
          %p322 = pneg %p236
        $region46: #{tpu_custom_call.1} parent=11 // pred_check_branch
          %324 = sbr.rel (%p322) target = $region48
        $region47: #{tpu_custom_call.1} parent=11 // pred_region
          _
        $region48: #{tpu_custom_call.1} parent=11 // pred_fallthru
          _
        // Predicated region
        $region49: #{tpu_custom_call.1} parent=11 // pred_check
          %p325 = pneg %p257
        $region50: #{tpu_custom_call.1} parent=11 // pred_check_branch
          %327 = sbr.rel (%p325) target = $region52
        $region51: #{tpu_custom_call.1} parent=11 // pred_region
          _
        $region52: #{tpu_custom_call.1} parent=11 // pred_fallthru
          _
      $region12: #{tpu_custom_call.1} parent=5 // pred_fallthru
        _
      %p328 = scmp.lt.s32.totalorder %s21, 2
      // Predicated region
      $region53: #{tpu_custom_call.1} parent=5 // pred_check
        %p329 = pneg %p328
      $region54: #{tpu_custom_call.1} parent=5 // pred_check_branch
        %331 = sbr.rel (%p329) target = $region56
      $region55: #{tpu_custom_call.1} parent=5 // pred_region
        // Predicated region
        $region57: #{tpu_custom_call.1} parent=55 // pred_check
          %p332 = pneg %p41
        $region58: #{tpu_custom_call.1} parent=55 // pred_check_branch
          %334 = sbr.rel (%p332) target = $region60
        $region59: #{tpu_custom_call.1} parent=55 // pred_region
          %s335 = smul.u32 8, %s21
          %p336 = scmp.lt.s32.totalorder %s335, 15
          %s337 = scalar_select %p336, %s335, 15
          %s338 = smul.addr %s337, 32
          %s339 = smul.addr %s338, 8
          %s340 = scalar_lea.vmem %s0, %s339
          %s341 = smul.u32 8, %s21
        $region60: #{tpu_custom_call.1} parent=55 // pred_fallthru
          _
      $region56: #{tpu_custom_call.1} parent=5 // pred_fallthru
        _
      %p342 = scmp.le.s32.totalorder 1, %s21
      %p343 = scmp.lt.s32.totalorder %s21, 3
      %p344 = pnand %p342, %p343
      %p345 = pneg %p344
      // Predicated region
      $region61: #{tpu_custom_call.1} parent=5 // pred_check
        _
      $region62: #{tpu_custom_call.1} parent=5 // pred_check_branch
        %347 = sbr.rel (%p344) target = $region64
      $region63: #{tpu_custom_call.1} parent=5 // pred_region
        %s348 = ssub.s32 %s21, 1
        %s349 = smul.u32 8, %s26
        %p350 = scmp.lt.s32.totalorder %s349, 15
        %s351 = scalar_select %p350, %s349, 15
        %s352 = smul.addr %s351, 32
        %s353 = smul.addr %s352, 8
        %s354 = scalar_lea.vmem %s0, %s353
        %p355 = pneg %p47
        %p356 = pneg %p44
        %p357 = pneg %p68
        %p358 = pneg %p65
        %p359 = pneg %p89
        %p360 = pneg %p86
        %p361 = pneg %p110
        %p362 = pneg %p107
        %p363 = pneg %p131
        %p364 = pneg %p128
        %p365 = pneg %p152
        %p366 = pneg %p149
        %p367 = pneg %p173
        %p368 = pneg %p170
        %p369 = pneg %p194
        %p370 = pneg %p191
        %p371 = pneg %p215
        %p372 = pneg %p212
        %p373 = pneg %p236
        %p374 = pneg %p233
        %p375 = pneg %p257
        %p376 = pneg %p254
        %p377 = pneg %p283
        %p378 = pneg %p280
        %s379 = sand.u32 %s270, 1
        %s380 = scalar_lea.sflag [#allocation4], %s379
        %s381 = sand.u32 %s270, 1
        %s382 = smul.addr %s381, 8
        %s383 = scalar_lea.vmem [#allocation3], %s382
        %s384 = smul.u32 8, %s26
        %p385 = scmp.lt.s32.totalorder %s384, 15
        %s386 = scalar_select %p385, %s384, 15
        %s387 = smul.addr %s386, 32
        %s388 = smul.addr %s387, 8
        %s389 = scalar_lea.vmem %s0, %s388
        %s390 = smul.u32 8, %s26
        %v391 = vld [vmem:[%s389] sm:$0xff]
        %v392 = vld [vmem:[%s389 + $0x8] sm:$0xff]
        %v393 = vld [vmem:[%s389 + $0x10] sm:$0xff]
        %v394 = vld [vmem:[%s389 + $0x18] sm:$0xff]
        %v395 = vld [vmem:[%s389 + $0x20] sm:$0xff]
        %v396 = vld [vmem:[%s389 + $0x28] sm:$0xff]
        %v397 = vld [vmem:[%s389 + $0x30] sm:$0xff]
        %v398 = vld [vmem:[%s389 + $0x38] sm:$0xff]
        %v399 = vld [vmem:[%s389 + $0x40] sm:$0xff]
        %v400 = vld [vmem:[%s389 + $0x48] sm:$0xff]
        %v401 = vld [vmem:[%s389 + $0x50] sm:$0xff]
        %v402 = vld [vmem:[%s389 + $0x58] sm:$0xff]
        %v403 = vld [vmem:[%s389 + $0x60] sm:$0xff]
        %v404 = vld [vmem:[%s389 + $0x68] sm:$0xff]
        %v405 = vld [vmem:[%s389 + $0x70] sm:$0xff]
        %v406 = vld [vmem:[%s389 + $0x78] sm:$0xff]
        %v407 = vld [vmem:[%s389 + $0x80] sm:$0xff]
        %v408 = vld [vmem:[%s389 + $0x88] sm:$0xff]
        %v409 = vld [vmem:[%s389 + $0x90] sm:$0xff]
        %v410 = vld [vmem:[%s389 + $0x98] sm:$0xff]
        %v411 = vld [vmem:[%s389 + $0xa0] sm:$0xff]
        %v412 = vld [vmem:[%s389 + $0xa8] sm:$0xff]
        %v413 = vld [vmem:[%s389 + $0xb0] sm:$0xff]
        %v414 = vld [vmem:[%s389 + $0xb8] sm:$0xff]
        %v415 = vld [vmem:[%s389 + $0xc0] sm:$0xff]
        %v416 = vld [vmem:[%s389 + $0xc8] sm:$0xff]
        %v417 = vld [vmem:[%s389 + $0xd0] sm:$0xff]
        %v418 = vld [vmem:[%s389 + $0xd8] sm:$0xff]
        %v419 = vld [vmem:[%s389 + $0xe0] sm:$0xff]
        %v420 = vld [vmem:[%s389 + $0xe8] sm:$0xff]
        %v421 = vld [vmem:[%s389 + $0xf0] sm:$0xff]
        %v422 = vld [vmem:[%s389 + $0xf8] sm:$0xff]
        %423 = vxpose.xlu0.b32.start [1/16] %v391, 128
        %424 = vxpose.xlu0.b32.cont [2/16] %v392, 128
        %425 = vxpose.xlu0.b32.cont [3/16] %v393, 128
        %426 = vxpose.xlu0.b32.cont [4/16] %v394, 128
        %427 = vxpose.xlu0.b32.cont [5/16] %v395, 128
        %428 = vxpose.xlu0.b32.cont [6/16] %v396, 128
        %429 = vxpose.xlu0.b32.cont [7/16] %v397, 128
        %430 = vxpose.xlu0.b32.cont [8/16] %v398, 128
        %431 = vxpose.xlu0.b32.cont [9/16] %v399, 128
        %432 = vxpose.xlu0.b32.cont [10/16] %v400, 128
        %433 = vxpose.xlu0.b32.cont [11/16] %v401, 128
        %434 = vxpose.xlu0.b32.cont [12/16] %v402, 128
        %435 = vxpose.xlu0.b32.cont [13/16] %v403, 128
        %436 = vxpose.xlu0.b32.cont [14/16] %v404, 128
        %437 = vxpose.xlu0.b32.cont [15/16] %v405, 128
        %438 = vxpose.xlu0.b32.end [16/16] %v406, 128
        %v439 = vpop.trf.xlu0
        %v440 = vpop.trf.xlu0
        %v441 = vpop.trf.xlu0
        %v442 = vpop.trf.xlu0
        %v443 = vpop.trf.xlu0
        %v444 = vpop.trf.xlu0
        %v445 = vpop.trf.xlu0
        %v446 = vpop.trf.xlu0
        %v447 = vpop.trf.xlu0
        %v448 = vpop.trf.xlu0
        %v449 = vpop.trf.xlu0
        %v450 = vpop.trf.xlu0
        %v451 = vpop.trf.xlu0
        %v452 = vpop.trf.xlu0
        %v453 = vpop.trf.xlu0
        %v454 = vpop.trf.xlu0
        %455 = vxpose.xlu0.b32.start [1/16] %v407, 128
        %456 = vxpose.xlu0.b32.cont [2/16] %v408, 128
        %457 = vxpose.xlu0.b32.cont [3/16] %v409, 128
        %458 = vxpose.xlu0.b32.cont [4/16] %v410, 128
        %459 = vxpose.xlu0.b32.cont [5/16] %v411, 128
        %460 = vxpose.xlu0.b32.cont [6/16] %v412, 128
        %461 = vxpose.xlu0.b32.cont [7/16] %v413, 128
        %462 = vxpose.xlu0.b32.cont [8/16] %v414, 128
        %463 = vxpose.xlu0.b32.cont [9/16] %v415, 128
        %464 = vxpose.xlu0.b32.cont [10/16] %v416, 128
        %465 = vxpose.xlu0.b32.cont [11/16] %v417, 128
        %466 = vxpose.xlu0.b32.cont [12/16] %v418, 128
        %467 = vxpose.xlu0.b32.cont [13/16] %v419, 128
        %468 = vxpose.xlu0.b32.cont [14/16] %v420, 128
        %469 = vxpose.xlu0.b32.cont [15/16] %v421, 128
        %470 = vxpose.xlu0.b32.end [16/16] %v422, 128
        %v471 = vpop.trf.xlu0
        %v472 = vpop.trf.xlu0
        %v473 = vpop.trf.xlu0
        %v474 = vpop.trf.xlu0
        %v475 = vpop.trf.xlu0
        %v476 = vpop.trf.xlu0
        %v477 = vpop.trf.xlu0
        %v478 = vpop.trf.xlu0
        %v479 = vpop.trf.xlu0
        %v480 = vpop.trf.xlu0
        %v481 = vpop.trf.xlu0
        %v482 = vpop.trf.xlu0
        %v483 = vpop.trf.xlu0
        %v484 = vpop.trf.xlu0
        %v485 = vpop.trf.xlu0
        %v486 = vpop.trf.xlu0
        %s487 = scalar_lea.vmem %s389, 256
        %v488 = vld [vmem:[%s487] sm:$0xff]
        %v489 = vld [vmem:[%s487 + $0x8] sm:$0xff]
        %v490 = vld [vmem:[%s487 + $0x10] sm:$0xff]
        %v491 = vld [vmem:[%s487 + $0x18] sm:$0xff]
        %v492 = vld [vmem:[%s487 + $0x20] sm:$0xff]
        %v493 = vld [vmem:[%s487 + $0x28] sm:$0xff]
        %v494 = vld [vmem:[%s487 + $0x30] sm:$0xff]
        %v495 = vld [vmem:[%s487 + $0x38] sm:$0xff]
        %v496 = vld [vmem:[%s487 + $0x40] sm:$0xff]
        %v497 = vld [vmem:[%s487 + $0x48] sm:$0xff]
        %v498 = vld [vmem:[%s487 + $0x50] sm:$0xff]
        %v499 = vld [vmem:[%s487 + $0x58] sm:$0xff]
        %v500 = vld [vmem:[%s487 + $0x60] sm:$0xff]
        %v501 = vld [vmem:[%s487 + $0x68] sm:$0xff]
        %v502 = vld [vmem:[%s487 + $0x70] sm:$0xff]
        %v503 = vld [vmem:[%s487 + $0x78] sm:$0xff]
        %v504 = vld [vmem:[%s487 + $0x80] sm:$0xff]
        %v505 = vld [vmem:[%s487 + $0x88] sm:$0xff]
        %v506 = vld [vmem:[%s487 + $0x90] sm:$0xff]
        %v507 = vld [vmem:[%s487 + $0x98] sm:$0xff]
        %v508 = vld [vmem:[%s487 + $0xa0] sm:$0xff]
        %v509 = vld [vmem:[%s487 + $0xa8] sm:$0xff]
        %v510 = vld [vmem:[%s487 + $0xb0] sm:$0xff]
        %v511 = vld [vmem:[%s487 + $0xb8] sm:$0xff]
        %v512 = vld [vmem:[%s487 + $0xc0] sm:$0xff]
        %v513 = vld [vmem:[%s487 + $0xc8] sm:$0xff]
        %v514 = vld [vmem:[%s487 + $0xd0] sm:$0xff]
        %v515 = vld [vmem:[%s487 + $0xd8] sm:$0xff]
        %v516 = vld [vmem:[%s487 + $0xe0] sm:$0xff]
        %v517 = vld [vmem:[%s487 + $0xe8] sm:$0xff]
        %v518 = vld [vmem:[%s487 + $0xf0] sm:$0xff]
        %v519 = vld [vmem:[%s487 + $0xf8] sm:$0xff]
        %520 = vxpose.xlu0.b32.start [1/16] %v488, 128
        %521 = vxpose.xlu0.b32.cont [2/16] %v489, 128
        %522 = vxpose.xlu0.b32.cont [3/16] %v490, 128
        %523 = vxpose.xlu0.b32.cont [4/16] %v491, 128
        %524 = vxpose.xlu0.b32.cont [5/16] %v492, 128
        %525 = vxpose.xlu0.b32.cont [6/16] %v493, 128
        %526 = vxpose.xlu0.b32.cont [7/16] %v494, 128
        %527 = vxpose.xlu0.b32.cont [8/16] %v495, 128
        %528 = vxpose.xlu0.b32.cont [9/16] %v496, 128
        %529 = vxpose.xlu0.b32.cont [10/16] %v497, 128
        %530 = vxpose.xlu0.b32.cont [11/16] %v498, 128
        %531 = vxpose.xlu0.b32.cont [12/16] %v499, 128
        %532 = vxpose.xlu0.b32.cont [13/16] %v500, 128
        %533 = vxpose.xlu0.b32.cont [14/16] %v501, 128
        %534 = vxpose.xlu0.b32.cont [15/16] %v502, 128
        %535 = vxpose.xlu0.b32.end [16/16] %v503, 128
        %v536 = vpop.trf.xlu0
        %v537 = vpop.trf.xlu0
        %v538 = vpop.trf.xlu0
        %v539 = vpop.trf.xlu0
        %v540 = vpop.trf.xlu0
        %v541 = vpop.trf.xlu0
        %v542 = vpop.trf.xlu0
        %v543 = vpop.trf.xlu0
        %v544 = vpop.trf.xlu0
        %v545 = vpop.trf.xlu0
        %v546 = vpop.trf.xlu0
        %v547 = vpop.trf.xlu0
        %v548 = vpop.trf.xlu0
        %v549 = vpop.trf.xlu0
        %v550 = vpop.trf.xlu0
        %v551 = vpop.trf.xlu0
        %552 = vxpose.xlu0.b32.start [1/16] %v504, 128
        %553 = vxpose.xlu0.b32.cont [2/16] %v505, 128
        %554 = vxpose.xlu0.b32.cont [3/16] %v506, 128
        %555 = vxpose.xlu0.b32.cont [4/16] %v507, 128
        %556 = vxpose.xlu0.b32.cont [5/16] %v508, 128
        %557 = vxpose.xlu0.b32.cont [6/16] %v509, 128
        %558 = vxpose.xlu0.b32.cont [7/16] %v510, 128
        %559 = vxpose.xlu0.b32.cont [8/16] %v511, 128
        %560 = vxpose.xlu0.b32.cont [9/16] %v512, 128
        %561 = vxpose.xlu0.b32.cont [10/16] %v513, 128
        %562 = vxpose.xlu0.b32.cont [11/16] %v514, 128
        %563 = vxpose.xlu0.b32.cont [12/16] %v515, 128
        %564 = vxpose.xlu0.b32.cont [13/16] %v516, 128
        %565 = vxpose.xlu0.b32.cont [14/16] %v517, 128
        %566 = vxpose.xlu0.b32.cont [15/16] %v518, 128
        %567 = vxpose.xlu0.b32.end [16/16] %v519, 128
        %v568 = vpop.trf.xlu0
        %v569 = vpop.trf.xlu0
        %v570 = vpop.trf.xlu0
        %v571 = vpop.trf.xlu0
        %v572 = vpop.trf.xlu0
        %v573 = vpop.trf.xlu0
        %v574 = vpop.trf.xlu0
        %v575 = vpop.trf.xlu0
        %v576 = vpop.trf.xlu0
        %v577 = vpop.trf.xlu0
        %v578 = vpop.trf.xlu0
        %v579 = vpop.trf.xlu0
        %v580 = vpop.trf.xlu0
        %v581 = vpop.trf.xlu0
        %v582 = vpop.trf.xlu0
        %v583 = vpop.trf.xlu0
        %s584 = scalar_lea.vmem %s389, 512
        %v585 = vld [vmem:[%s584] sm:$0xff]
        %v586 = vld [vmem:[%s584 + $0x8] sm:$0xff]
        %v587 = vld [vmem:[%s584 + $0x10] sm:$0xff]
        %v588 = vld [vmem:[%s584 + $0x18] sm:$0xff]
        %v589 = vld [vmem:[%s584 + $0x20] sm:$0xff]
        %v590 = vld [vmem:[%s584 + $0x28] sm:$0xff]
        %v591 = vld [vmem:[%s584 + $0x30] sm:$0xff]
        %v592 = vld [vmem:[%s584 + $0x38] sm:$0xff]
        %v593 = vld [vmem:[%s584 + $0x40] sm:$0xff]
        %v594 = vld [vmem:[%s584 + $0x48] sm:$0xff]
        %v595 = vld [vmem:[%s584 + $0x50] sm:$0xff]
        %v596 = vld [vmem:[%s584 + $0x58] sm:$0xff]
        %v597 = vld [vmem:[%s584 + $0x60] sm:$0xff]
        %v598 = vld [vmem:[%s584 + $0x68] sm:$0xff]
        %v599 = vld [vmem:[%s584 + $0x70] sm:$0xff]
        %v600 = vld [vmem:[%s584 + $0x78] sm:$0xff]
        %v601 = vld [vmem:[%s584 + $0x80] sm:$0xff]
        %v602 = vld [vmem:[%s584 + $0x88] sm:$0xff]
        %v603 = vld [vmem:[%s584 + $0x90] sm:$0xff]
        %v604 = vld [vmem:[%s584 + $0x98] sm:$0xff]
        %v605 = vld [vmem:[%s584 + $0xa0] sm:$0xff]
        %v606 = vld [vmem:[%s584 + $0xa8] sm:$0xff]
        %v607 = vld [vmem:[%s584 + $0xb0] sm:$0xff]
        %v608 = vld [vmem:[%s584 + $0xb8] sm:$0xff]
        %v609 = vld [vmem:[%s584 + $0xc0] sm:$0xff]
        %v610 = vld [vmem:[%s584 + $0xc8] sm:$0xff]
        %v611 = vld [vmem:[%s584 + $0xd0] sm:$0xff]
        %v612 = vld [vmem:[%s584 + $0xd8] sm:$0xff]
        %v613 = vld [vmem:[%s584 + $0xe0] sm:$0xff]
        %v614 = vld [vmem:[%s584 + $0xe8] sm:$0xff]
        %v615 = vld [vmem:[%s584 + $0xf0] sm:$0xff]
        %v616 = vld [vmem:[%s584 + $0xf8] sm:$0xff]
        %617 = vxpose.xlu0.b32.start [1/16] %v585, 128
        %618 = vxpose.xlu0.b32.cont [2/16] %v586, 128
        %619 = vxpose.xlu0.b32.cont [3/16] %v587, 128
        %620 = vxpose.xlu0.b32.cont [4/16] %v588, 128
        %621 = vxpose.xlu0.b32.cont [5/16] %v589, 128
        %622 = vxpose.xlu0.b32.cont [6/16] %v590, 128
        %623 = vxpose.xlu0.b32.cont [7/16] %v591, 128
        %624 = vxpose.xlu0.b32.cont [8/16] %v592, 128
        %625 = vxpose.xlu0.b32.cont [9/16] %v593, 128
        %626 = vxpose.xlu0.b32.cont [10/16] %v594, 128
        %627 = vxpose.xlu0.b32.cont [11/16] %v595, 128
        %628 = vxpose.xlu0.b32.cont [12/16] %v596, 128
        %629 = vxpose.xlu0.b32.cont [13/16] %v597, 128
        %630 = vxpose.xlu0.b32.cont [14/16] %v598, 128
        %631 = vxpose.xlu0.b32.cont [15/16] %v599, 128
        %632 = vxpose.xlu0.b32.end [16/16] %v600, 128
        %v633 = vpop.trf.xlu0
        %v634 = vpop.trf.xlu0
        %v635 = vpop.trf.xlu0
        %v636 = vpop.trf.xlu0
        %v637 = vpop.trf.xlu0
        %v638 = vpop.trf.xlu0
        %v639 = vpop.trf.xlu0
        %v640 = vpop.trf.xlu0
        %v641 = vpop.trf.xlu0
        %v642 = vpop.trf.xlu0
        %v643 = vpop.trf.xlu0
        %v644 = vpop.trf.xlu0
        %v645 = vpop.trf.xlu0
        %v646 = vpop.trf.xlu0
        %v647 = vpop.trf.xlu0
        %v648 = vpop.trf.xlu0
        %649 = vxpose.xlu0.b32.start [1/16] %v601, 128
        %650 = vxpose.xlu0.b32.cont [2/16] %v602, 128
        %651 = vxpose.xlu0.b32.cont [3/16] %v603, 128
        %652 = vxpose.xlu0.b32.cont [4/16] %v604, 128
        %653 = vxpose.xlu0.b32.cont [5/16] %v605, 128
        %654 = vxpose.xlu0.b32.cont [6/16] %v606, 128
        %655 = vxpose.xlu0.b32.cont [7/16] %v607, 128
        %656 = vxpose.xlu0.b32.cont [8/16] %v608, 128
        %657 = vxpose.xlu0.b32.cont [9/16] %v609, 128
        %658 = vxpose.xlu0.b32.cont [10/16] %v610, 128
        %659 = vxpose.xlu0.b32.cont [11/16] %v611, 128
        %660 = vxpose.xlu0.b32.cont [12/16] %v612, 128
        %661 = vxpose.xlu0.b32.cont [13/16] %v613, 128
        %662 = vxpose.xlu0.b32.cont [14/16] %v614, 128
        %663 = vxpose.xlu0.b32.cont [15/16] %v615, 128
        %664 = vxpose.xlu0.b32.end [16/16] %v616, 128
        %v665 = vpop.trf.xlu0
        %v666 = vpop.trf.xlu0
        %v667 = vpop.trf.xlu0
        %v668 = vpop.trf.xlu0
        %v669 = vpop.trf.xlu0
        %v670 = vpop.trf.xlu0
        %v671 = vpop.trf.xlu0
        %v672 = vpop.trf.xlu0
        %v673 = vpop.trf.xlu0
        %v674 = vpop.trf.xlu0
        %v675 = vpop.trf.xlu0
        %v676 = vpop.trf.xlu0
        %v677 = vpop.trf.xlu0
        %v678 = vpop.trf.xlu0
        %v679 = vpop.trf.xlu0
        %v680 = vpop.trf.xlu0
        %s681 = scalar_lea.vmem %s389, 768
        %v682 = vld [vmem:[%s681] sm:$0xff]
        %v683 = vld [vmem:[%s681 + $0x8] sm:$0xff]
        %v684 = vld [vmem:[%s681 + $0x10] sm:$0xff]
        %v685 = vld [vmem:[%s681 + $0x18] sm:$0xff]
        %v686 = vld [vmem:[%s681 + $0x20] sm:$0xff]
        %v687 = vld [vmem:[%s681 + $0x28] sm:$0xff]
        %v688 = vld [vmem:[%s681 + $0x30] sm:$0xff]
        %v689 = vld [vmem:[%s681 + $0x38] sm:$0xff]
        %v690 = vld [vmem:[%s681 + $0x40] sm:$0xff]
        %v691 = vld [vmem:[%s681 + $0x48] sm:$0xff]
        %v692 = vld [vmem:[%s681 + $0x50] sm:$0xff]
        %v693 = vld [vmem:[%s681 + $0x58] sm:$0xff]
        %v694 = vld [vmem:[%s681 + $0x60] sm:$0xff]
        %v695 = vld [vmem:[%s681 + $0x68] sm:$0xff]
        %v696 = vld [vmem:[%s681 + $0x70] sm:$0xff]
        %v697 = vld [vmem:[%s681 + $0x78] sm:$0xff]
        %v698 = vld [vmem:[%s681 + $0x80] sm:$0xff]
        %v699 = vld [vmem:[%s681 + $0x88] sm:$0xff]
        %v700 = vld [vmem:[%s681 + $0x90] sm:$0xff]
        %v701 = vld [vmem:[%s681 + $0x98] sm:$0xff]
        %v702 = vld [vmem:[%s681 + $0xa0] sm:$0xff]
        %v703 = vld [vmem:[%s681 + $0xa8] sm:$0xff]
        %v704 = vld [vmem:[%s681 + $0xb0] sm:$0xff]
        %v705 = vld [vmem:[%s681 + $0xb8] sm:$0xff]
        %v706 = vld [vmem:[%s681 + $0xc0] sm:$0xff]
        %v707 = vld [vmem:[%s681 + $0xc8] sm:$0xff]
        %v708 = vld [vmem:[%s681 + $0xd0] sm:$0xff]
        %v709 = vld [vmem:[%s681 + $0xd8] sm:$0xff]
        %v710 = vld [vmem:[%s681 + $0xe0] sm:$0xff]
        %v711 = vld [vmem:[%s681 + $0xe8] sm:$0xff]
        %v712 = vld [vmem:[%s681 + $0xf0] sm:$0xff]
        %v713 = vld [vmem:[%s681 + $0xf8] sm:$0xff]
        %714 = vxpose.xlu0.b32.start [1/16] %v682, 128
        %715 = vxpose.xlu0.b32.cont [2/16] %v683, 128
        %716 = vxpose.xlu0.b32.cont [3/16] %v684, 128
        %717 = vxpose.xlu0.b32.cont [4/16] %v685, 128
        %718 = vxpose.xlu0.b32.cont [5/16] %v686, 128
        %719 = vxpose.xlu0.b32.cont [6/16] %v687, 128
        %720 = vxpose.xlu0.b32.cont [7/16] %v688, 128
        %721 = vxpose.xlu0.b32.cont [8/16] %v689, 128
        %722 = vxpose.xlu0.b32.cont [9/16] %v690, 128
        %723 = vxpose.xlu0.b32.cont [10/16] %v691, 128
        %724 = vxpose.xlu0.b32.cont [11/16] %v692, 128
        %725 = vxpose.xlu0.b32.cont [12/16] %v693, 128
        %726 = vxpose.xlu0.b32.cont [13/16] %v694, 128
        %727 = vxpose.xlu0.b32.cont [14/16] %v695, 128
        %728 = vxpose.xlu0.b32.cont [15/16] %v696, 128
        %729 = vxpose.xlu0.b32.end [16/16] %v697, 128
        %v730 = vpop.trf.xlu0
        %v731 = vpop.trf.xlu0
        %v732 = vpop.trf.xlu0
        %v733 = vpop.trf.xlu0
        %v734 = vpop.trf.xlu0
        %v735 = vpop.trf.xlu0
        %v736 = vpop.trf.xlu0
        %v737 = vpop.trf.xlu0
        %v738 = vpop.trf.xlu0
        %v739 = vpop.trf.xlu0
        %v740 = vpop.trf.xlu0
        %v741 = vpop.trf.xlu0
        %v742 = vpop.trf.xlu0
        %v743 = vpop.trf.xlu0
        %v744 = vpop.trf.xlu0
        %v745 = vpop.trf.xlu0
        %746 = vxpose.xlu0.b32.start [1/16] %v698, 128
        %747 = vxpose.xlu0.b32.cont [2/16] %v699, 128
        %748 = vxpose.xlu0.b32.cont [3/16] %v700, 128
        %749 = vxpose.xlu0.b32.cont [4/16] %v701, 128
        %750 = vxpose.xlu0.b32.cont [5/16] %v702, 128
        %751 = vxpose.xlu0.b32.cont [6/16] %v703, 128
        %752 = vxpose.xlu0.b32.cont [7/16] %v704, 128
        %753 = vxpose.xlu0.b32.cont [8/16] %v705, 128
        %754 = vxpose.xlu0.b32.cont [9/16] %v706, 128
        %755 = vxpose.xlu0.b32.cont [10/16] %v707, 128
        %756 = vxpose.xlu0.b32.cont [11/16] %v708, 128
        %757 = vxpose.xlu0.b32.cont [12/16] %v709, 128
        %758 = vxpose.xlu0.b32.cont [13/16] %v710, 128
        %759 = vxpose.xlu0.b32.cont [14/16] %v711, 128
        %760 = vxpose.xlu0.b32.cont [15/16] %v712, 128
        %761 = vxpose.xlu0.b32.end [16/16] %v713, 128
        %v762 = vpop.trf.xlu0
        %v763 = vpop.trf.xlu0
        %v764 = vpop.trf.xlu0
        %v765 = vpop.trf.xlu0
        %v766 = vpop.trf.xlu0
        %v767 = vpop.trf.xlu0
        %v768 = vpop.trf.xlu0
        %v769 = vpop.trf.xlu0
        %v770 = vpop.trf.xlu0
        %v771 = vpop.trf.xlu0
        %v772 = vpop.trf.xlu0
        %v773 = vpop.trf.xlu0
        %v774 = vpop.trf.xlu0
        %v775 = vpop.trf.xlu0
        %v776 = vpop.trf.xlu0
        %v777 = vpop.trf.xlu0
        %s778 = scalar_lea.vmem %s389, 1024
        %v779 = vld [vmem:[%s778] sm:$0xff]
        %v780 = vld [vmem:[%s778 + $0x8] sm:$0xff]
        %v781 = vld [vmem:[%s778 + $0x10] sm:$0xff]
        %v782 = vld [vmem:[%s778 + $0x18] sm:$0xff]
        %v783 = vld [vmem:[%s778 + $0x20] sm:$0xff]
        %v784 = vld [vmem:[%s778 + $0x28] sm:$0xff]
        %v785 = vld [vmem:[%s778 + $0x30] sm:$0xff]
        %v786 = vld [vmem:[%s778 + $0x38] sm:$0xff]
        %v787 = vld [vmem:[%s778 + $0x40] sm:$0xff]
        %v788 = vld [vmem:[%s778 + $0x48] sm:$0xff]
        %v789 = vld [vmem:[%s778 + $0x50] sm:$0xff]
        %v790 = vld [vmem:[%s778 + $0x58] sm:$0xff]
        %v791 = vld [vmem:[%s778 + $0x60] sm:$0xff]
        %v792 = vld [vmem:[%s778 + $0x68] sm:$0xff]
        %v793 = vld [vmem:[%s778 + $0x70] sm:$0xff]
        %v794 = vld [vmem:[%s778 + $0x78] sm:$0xff]
        %v795 = vld [vmem:[%s778 + $0x80] sm:$0xff]
        %v796 = vld [vmem:[%s778 + $0x88] sm:$0xff]
        %v797 = vld [vmem:[%s778 + $0x90] sm:$0xff]
        %v798 = vld [vmem:[%s778 + $0x98] sm:$0xff]
        %v799 = vld [vmem:[%s778 + $0xa0] sm:$0xff]
        %v800 = vld [vmem:[%s778 + $0xa8] sm:$0xff]
        %v801 = vld [vmem:[%s778 + $0xb0] sm:$0xff]
        %v802 = vld [vmem:[%s778 + $0xb8] sm:$0xff]
        %v803 = vld [vmem:[%s778 + $0xc0] sm:$0xff]
        %v804 = vld [vmem:[%s778 + $0xc8] sm:$0xff]
        %v805 = vld [vmem:[%s778 + $0xd0] sm:$0xff]
        %v806 = vld [vmem:[%s778 + $0xd8] sm:$0xff]
        %v807 = vld [vmem:[%s778 + $0xe0] sm:$0xff]
        %v808 = vld [vmem:[%s778 + $0xe8] sm:$0xff]
        %v809 = vld [vmem:[%s778 + $0xf0] sm:$0xff]
        %v810 = vld [vmem:[%s778 + $0xf8] sm:$0xff]
        %811 = vxpose.xlu0.b32.start [1/16] %v779, 128
        %812 = vxpose.xlu0.b32.cont [2/16] %v780, 128
        %813 = vxpose.xlu0.b32.cont [3/16] %v781, 128
        %814 = vxpose.xlu0.b32.cont [4/16] %v782, 128
        %815 = vxpose.xlu0.b32.cont [5/16] %v783, 128
        %816 = vxpose.xlu0.b32.cont [6/16] %v784, 128
        %817 = vxpose.xlu0.b32.cont [7/16] %v785, 128
        %818 = vxpose.xlu0.b32.cont [8/16] %v786, 128
        %819 = vxpose.xlu0.b32.cont [9/16] %v787, 128
        %820 = vxpose.xlu0.b32.cont [10/16] %v788, 128
        %821 = vxpose.xlu0.b32.cont [11/16] %v789, 128
        %822 = vxpose.xlu0.b32.cont [12/16] %v790, 128
        %823 = vxpose.xlu0.b32.cont [13/16] %v791, 128
        %824 = vxpose.xlu0.b32.cont [14/16] %v792, 128
        %825 = vxpose.xlu0.b32.cont [15/16] %v793, 128
        %826 = vxpose.xlu0.b32.end [16/16] %v794, 128
        %v827 = vpop.trf.xlu0
        %v828 = vpop.trf.xlu0
        %v829 = vpop.trf.xlu0
        %v830 = vpop.trf.xlu0
        %v831 = vpop.trf.xlu0
        %v832 = vpop.trf.xlu0
        %v833 = vpop.trf.xlu0
        %v834 = vpop.trf.xlu0
        %v835 = vpop.trf.xlu0
        %v836 = vpop.trf.xlu0
        %v837 = vpop.trf.xlu0
        %v838 = vpop.trf.xlu0
        %v839 = vpop.trf.xlu0
        %v840 = vpop.trf.xlu0
        %v841 = vpop.trf.xlu0
        %v842 = vpop.trf.xlu0
        %843 = vxpose.xlu0.b32.start [1/16] %v795, 128
        %844 = vxpose.xlu0.b32.cont [2/16] %v796, 128
        %845 = vxpose.xlu0.b32.cont [3/16] %v797, 128
        %846 = vxpose.xlu0.b32.cont [4/16] %v798, 128
        %847 = vxpose.xlu0.b32.cont [5/16] %v799, 128
        %848 = vxpose.xlu0.b32.cont [6/16] %v800, 128
        %849 = vxpose.xlu0.b32.cont [7/16] %v801, 128
        %850 = vxpose.xlu0.b32.cont [8/16] %v802, 128
        %851 = vxpose.xlu0.b32.cont [9/16] %v803, 128
        %852 = vxpose.xlu0.b32.cont [10/16] %v804, 128
        %853 = vxpose.xlu0.b32.cont [11/16] %v805, 128
        %854 = vxpose.xlu0.b32.cont [12/16] %v806, 128
        %855 = vxpose.xlu0.b32.cont [13/16] %v807, 128
        %856 = vxpose.xlu0.b32.cont [14/16] %v808, 128
        %857 = vxpose.xlu0.b32.cont [15/16] %v809, 128
        %858 = vxpose.xlu0.b32.end [16/16] %v810, 128
        %v859 = vpop.trf.xlu0
        %v860 = vpop.trf.xlu0
        %v861 = vpop.trf.xlu0
        %v862 = vpop.trf.xlu0
        %v863 = vpop.trf.xlu0
        %v864 = vpop.trf.xlu0
        %v865 = vpop.trf.xlu0
        %v866 = vpop.trf.xlu0
        %v867 = vpop.trf.xlu0
        %v868 = vpop.trf.xlu0
        %v869 = vpop.trf.xlu0
        %v870 = vpop.trf.xlu0
        %v871 = vpop.trf.xlu0
        %v872 = vpop.trf.xlu0
        %v873 = vpop.trf.xlu0
        %v874 = vpop.trf.xlu0
        %s875 = scalar_lea.vmem %s389, 1280
        %v876 = vld [vmem:[%s875] sm:$0xff]
        %v877 = vld [vmem:[%s875 + $0x8] sm:$0xff]
        %v878 = vld [vmem:[%s875 + $0x10] sm:$0xff]
        %v879 = vld [vmem:[%s875 + $0x18] sm:$0xff]
        %v880 = vld [vmem:[%s875 + $0x20] sm:$0xff]
        %v881 = vld [vmem:[%s875 + $0x28] sm:$0xff]
        %v882 = vld [vmem:[%s875 + $0x30] sm:$0xff]
        %v883 = vld [vmem:[%s875 + $0x38] sm:$0xff]
        %v884 = vld [vmem:[%s875 + $0x40] sm:$0xff]
        %v885 = vld [vmem:[%s875 + $0x48] sm:$0xff]
        %v886 = vld [vmem:[%s875 + $0x50] sm:$0xff]
        %v887 = vld [vmem:[%s875 + $0x58] sm:$0xff]
        %v888 = vld [vmem:[%s875 + $0x60] sm:$0xff]
        %v889 = vld [vmem:[%s875 + $0x68] sm:$0xff]
        %v890 = vld [vmem:[%s875 + $0x70] sm:$0xff]
        %v891 = vld [vmem:[%s875 + $0x78] sm:$0xff]
        %v892 = vld [vmem:[%s875 + $0x80] sm:$0xff]
        %v893 = vld [vmem:[%s875 + $0x88] sm:$0xff]
        %v894 = vld [vmem:[%s875 + $0x90] sm:$0xff]
        %v895 = vld [vmem:[%s875 + $0x98] sm:$0xff]
        %v896 = vld [vmem:[%s875 + $0xa0] sm:$0xff]
        %v897 = vld [vmem:[%s875 + $0xa8] sm:$0xff]
        %v898 = vld [vmem:[%s875 + $0xb0] sm:$0xff]
        %v899 = vld [vmem:[%s875 + $0xb8] sm:$0xff]
        %v900 = vld [vmem:[%s875 + $0xc0] sm:$0xff]
        %v901 = vld [vmem:[%s875 + $0xc8] sm:$0xff]
        %v902 = vld [vmem:[%s875 + $0xd0] sm:$0xff]
        %v903 = vld [vmem:[%s875 + $0xd8] sm:$0xff]
        %v904 = vld [vmem:[%s875 + $0xe0] sm:$0xff]
        %v905 = vld [vmem:[%s875 + $0xe8] sm:$0xff]
        %v906 = vld [vmem:[%s875 + $0xf0] sm:$0xff]
        %v907 = vld [vmem:[%s875 + $0xf8] sm:$0xff]
        %908 = vxpose.xlu0.b32.start [1/16] %v876, 128
        %909 = vxpose.xlu0.b32.cont [2/16] %v877, 128
        %910 = vxpose.xlu0.b32.cont [3/16] %v878, 128
        %911 = vxpose.xlu0.b32.cont [4/16] %v879, 128
        %912 = vxpose.xlu0.b32.cont [5/16] %v880, 128
        %913 = vxpose.xlu0.b32.cont [6/16] %v881, 128
        %914 = vxpose.xlu0.b32.cont [7/16] %v882, 128
        %915 = vxpose.xlu0.b32.cont [8/16] %v883, 128
        %916 = vxpose.xlu0.b32.cont [9/16] %v884, 128
        %917 = vxpose.xlu0.b32.cont [10/16] %v885, 128
        %918 = vxpose.xlu0.b32.cont [11/16] %v886, 128
        %919 = vxpose.xlu0.b32.cont [12/16] %v887, 128
        %920 = vxpose.xlu0.b32.cont [13/16] %v888, 128
        %921 = vxpose.xlu0.b32.cont [14/16] %v889, 128
        %922 = vxpose.xlu0.b32.cont [15/16] %v890, 128
        %923 = vxpose.xlu0.b32.end [16/16] %v891, 128
        %v924 = vpop.trf.xlu0
        %v925 = vpop.trf.xlu0
        %v926 = vpop.trf.xlu0
        %v927 = vpop.trf.xlu0
        %v928 = vpop.trf.xlu0
        %v929 = vpop.trf.xlu0
        %v930 = vpop.trf.xlu0
        %v931 = vpop.trf.xlu0
        %v932 = vpop.trf.xlu0
        %v933 = vpop.trf.xlu0
        %v934 = vpop.trf.xlu0
        %v935 = vpop.trf.xlu0
        %v936 = vpop.trf.xlu0
        %v937 = vpop.trf.xlu0
        %v938 = vpop.trf.xlu0
        %v939 = vpop.trf.xlu0
        %940 = vxpose.xlu0.b32.start [1/16] %v892, 128
        %941 = vxpose.xlu0.b32.cont [2/16] %v893, 128
        %942 = vxpose.xlu0.b32.cont [3/16] %v894, 128
        %943 = vxpose.xlu0.b32.cont [4/16] %v895, 128
        %944 = vxpose.xlu0.b32.cont [5/16] %v896, 128
        %945 = vxpose.xlu0.b32.cont [6/16] %v897, 128
        %946 = vxpose.xlu0.b32.cont [7/16] %v898, 128
        %947 = vxpose.xlu0.b32.cont [8/16] %v899, 128
        %948 = vxpose.xlu0.b32.cont [9/16] %v900, 128
        %949 = vxpose.xlu0.b32.cont [10/16] %v901, 128
        %950 = vxpose.xlu0.b32.cont [11/16] %v902, 128
        %951 = vxpose.xlu0.b32.cont [12/16] %v903, 128
        %952 = vxpose.xlu0.b32.cont [13/16] %v904, 128
        %953 = vxpose.xlu0.b32.cont [14/16] %v905, 128
        %954 = vxpose.xlu0.b32.cont [15/16] %v906, 128
        %955 = vxpose.xlu0.b32.end [16/16] %v907, 128
        %v956 = vpop.trf.xlu0
        %v957 = vpop.trf.xlu0
        %v958 = vpop.trf.xlu0
        %v959 = vpop.trf.xlu0
        %v960 = vpop.trf.xlu0
        %v961 = vpop.trf.xlu0
        %v962 = vpop.trf.xlu0
        %v963 = vpop.trf.xlu0
        %v964 = vpop.trf.xlu0
        %v965 = vpop.trf.xlu0
        %v966 = vpop.trf.xlu0
        %v967 = vpop.trf.xlu0
        %v968 = vpop.trf.xlu0
        %v969 = vpop.trf.xlu0
        %v970 = vpop.trf.xlu0
        %v971 = vpop.trf.xlu0
        %s972 = scalar_lea.vmem %s389, 1536
        %v973 = vld [vmem:[%s972] sm:$0xff]
        %v974 = vld [vmem:[%s972 + $0x8] sm:$0xff]
        %v975 = vld [vmem:[%s972 + $0x10] sm:$0xff]
        %v976 = vld [vmem:[%s972 + $0x18] sm:$0xff]
        %v977 = vld [vmem:[%s972 + $0x20] sm:$0xff]
        %v978 = vld [vmem:[%s972 + $0x28] sm:$0xff]
        %v979 = vld [vmem:[%s972 + $0x30] sm:$0xff]
        %v980 = vld [vmem:[%s972 + $0x38] sm:$0xff]
        %v981 = vld [vmem:[%s972 + $0x40] sm:$0xff]
        %v982 = vld [vmem:[%s972 + $0x48] sm:$0xff]
        %v983 = vld [vmem:[%s972 + $0x50] sm:$0xff]
        %v984 = vld [vmem:[%s972 + $0x58] sm:$0xff]
        %v985 = vld [vmem:[%s972 + $0x60] sm:$0xff]
        %v986 = vld [vmem:[%s972 + $0x68] sm:$0xff]
        %v987 = vld [vmem:[%s972 + $0x70] sm:$0xff]
        %v988 = vld [vmem:[%s972 + $0x78] sm:$0xff]
        %v989 = vld [vmem:[%s972 + $0x80] sm:$0xff]
        %v990 = vld [vmem:[%s972 + $0x88] sm:$0xff]
        %v991 = vld [vmem:[%s972 + $0x90] sm:$0xff]
        %v992 = vld [vmem:[%s972 + $0x98] sm:$0xff]
        %v993 = vld [vmem:[%s972 + $0xa0] sm:$0xff]
        %v994 = vld [vmem:[%s972 + $0xa8] sm:$0xff]
        %v995 = vld [vmem:[%s972 + $0xb0] sm:$0xff]
        %v996 = vld [vmem:[%s972 + $0xb8] sm:$0xff]
        %v997 = vld [vmem:[%s972 + $0xc0] sm:$0xff]
        %v998 = vld [vmem:[%s972 + $0xc8] sm:$0xff]
        %v999 = vld [vmem:[%s972 + $0xd0] sm:$0xff]
        %v1000 = vld [vmem:[%s972 + $0xd8] sm:$0xff]
        %v1001 = vld [vmem:[%s972 + $0xe0] sm:$0xff]
        %v1002 = vld [vmem:[%s972 + $0xe8] sm:$0xff]
        %v1003 = vld [vmem:[%s972 + $0xf0] sm:$0xff]
        %v1004 = vld [vmem:[%s972 + $0xf8] sm:$0xff]
        %1005 = vxpose.xlu0.b32.start [1/16] %v973, 128
        %1006 = vxpose.xlu0.b32.cont [2/16] %v974, 128
        %1007 = vxpose.xlu0.b32.cont [3/16] %v975, 128
        %1008 = vxpose.xlu0.b32.cont [4/16] %v976, 128
        %1009 = vxpose.xlu0.b32.cont [5/16] %v977, 128
        %1010 = vxpose.xlu0.b32.cont [6/16] %v978, 128
        %1011 = vxpose.xlu0.b32.cont [7/16] %v979, 128
        %1012 = vxpose.xlu0.b32.cont [8/16] %v980, 128
        %1013 = vxpose.xlu0.b32.cont [9/16] %v981, 128
        %1014 = vxpose.xlu0.b32.cont [10/16] %v982, 128
        %1015 = vxpose.xlu0.b32.cont [11/16] %v983, 128
        %1016 = vxpose.xlu0.b32.cont [12/16] %v984, 128
        %1017 = vxpose.xlu0.b32.cont [13/16] %v985, 128
        %1018 = vxpose.xlu0.b32.cont [14/16] %v986, 128
        %1019 = vxpose.xlu0.b32.cont [15/16] %v987, 128
        %1020 = vxpose.xlu0.b32.end [16/16] %v988, 128
        %v1021 = vpop.trf.xlu0
        %v1022 = vpop.trf.xlu0
        %v1023 = vpop.trf.xlu0
        %v1024 = vpop.trf.xlu0
        %v1025 = vpop.trf.xlu0
        %v1026 = vpop.trf.xlu0
        %v1027 = vpop.trf.xlu0
        %v1028 = vpop.trf.xlu0
        %v1029 = vpop.trf.xlu0
        %v1030 = vpop.trf.xlu0
        %v1031 = vpop.trf.xlu0
        %v1032 = vpop.trf.xlu0
        %v1033 = vpop.trf.xlu0
        %v1034 = vpop.trf.xlu0
        %v1035 = vpop.trf.xlu0
        %v1036 = vpop.trf.xlu0
        %1037 = vxpose.xlu0.b32.start [1/16] %v989, 128
        %1038 = vxpose.xlu0.b32.cont [2/16] %v990, 128
        %1039 = vxpose.xlu0.b32.cont [3/16] %v991, 128
        %1040 = vxpose.xlu0.b32.cont [4/16] %v992, 128
        %1041 = vxpose.xlu0.b32.cont [5/16] %v993, 128
        %1042 = vxpose.xlu0.b32.cont [6/16] %v994, 128
        %1043 = vxpose.xlu0.b32.cont [7/16] %v995, 128
        %1044 = vxpose.xlu0.b32.cont [8/16] %v996, 128
        %1045 = vxpose.xlu0.b32.cont [9/16] %v997, 128
        %1046 = vxpose.xlu0.b32.cont [10/16] %v998, 128
        %1047 = vxpose.xlu0.b32.cont [11/16] %v999, 128
        %1048 = vxpose.xlu0.b32.cont [12/16] %v1000, 128
        %1049 = vxpose.xlu0.b32.cont [13/16] %v1001, 128
        %1050 = vxpose.xlu0.b32.cont [14/16] %v1002, 128
        %1051 = vxpose.xlu0.b32.cont [15/16] %v1003, 128
        %1052 = vxpose.xlu0.b32.end [16/16] %v1004, 128
        %v1053 = vpop.trf.xlu0
        %v1054 = vpop.trf.xlu0
        %v1055 = vpop.trf.xlu0
        %v1056 = vpop.trf.xlu0
        %v1057 = vpop.trf.xlu0
        %v1058 = vpop.trf.xlu0
        %v1059 = vpop.trf.xlu0
        %v1060 = vpop.trf.xlu0
        %v1061 = vpop.trf.xlu0
        %v1062 = vpop.trf.xlu0
        %v1063 = vpop.trf.xlu0
        %v1064 = vpop.trf.xlu0
        %v1065 = vpop.trf.xlu0
        %v1066 = vpop.trf.xlu0
        %v1067 = vpop.trf.xlu0
        %v1068 = vpop.trf.xlu0
        %s1069 = scalar_lea.vmem %s389, 1792
        %v1070 = vld [vmem:[%s1069] sm:$0xff]
        %v1071 = vld [vmem:[%s1069 + $0x8] sm:$0xff]
        %v1072 = vld [vmem:[%s1069 + $0x10] sm:$0xff]
        %v1073 = vld [vmem:[%s1069 + $0x18] sm:$0xff]
        %v1074 = vld [vmem:[%s1069 + $0x20] sm:$0xff]
        %v1075 = vld [vmem:[%s1069 + $0x28] sm:$0xff]
        %v1076 = vld [vmem:[%s1069 + $0x30] sm:$0xff]
        %v1077 = vld [vmem:[%s1069 + $0x38] sm:$0xff]
        %v1078 = vld [vmem:[%s1069 + $0x40] sm:$0xff]
        %v1079 = vld [vmem:[%s1069 + $0x48] sm:$0xff]
        %v1080 = vld [vmem:[%s1069 + $0x50] sm:$0xff]
        %v1081 = vld [vmem:[%s1069 + $0x58] sm:$0xff]
        %v1082 = vld [vmem:[%s1069 + $0x60] sm:$0xff]
        %v1083 = vld [vmem:[%s1069 + $0x68] sm:$0xff]
        %v1084 = vld [vmem:[%s1069 + $0x70] sm:$0xff]
        %v1085 = vld [vmem:[%s1069 + $0x78] sm:$0xff]
        %v1086 = vld [vmem:[%s1069 + $0x80] sm:$0xff]
        %v1087 = vld [vmem:[%s1069 + $0x88] sm:$0xff]
        %v1088 = vld [vmem:[%s1069 + $0x90] sm:$0xff]
        %v1089 = vld [vmem:[%s1069 + $0x98] sm:$0xff]
        %v1090 = vld [vmem:[%s1069 + $0xa0] sm:$0xff]
        %v1091 = vld [vmem:[%s1069 + $0xa8] sm:$0xff]
        %v1092 = vld [vmem:[%s1069 + $0xb0] sm:$0xff]
        %v1093 = vld [vmem:[%s1069 + $0xb8] sm:$0xff]
        %v1094 = vld [vmem:[%s1069 + $0xc0] sm:$0xff]
        %v1095 = vld [vmem:[%s1069 + $0xc8] sm:$0xff]
        %v1096 = vld [vmem:[%s1069 + $0xd0] sm:$0xff]
        %v1097 = vld [vmem:[%s1069 + $0xd8] sm:$0xff]
        %v1098 = vld [vmem:[%s1069 + $0xe0] sm:$0xff]
        %v1099 = vld [vmem:[%s1069 + $0xe8] sm:$0xff]
        %v1100 = vld [vmem:[%s1069 + $0xf0] sm:$0xff]
        %v1101 = vld [vmem:[%s1069 + $0xf8] sm:$0xff]
        %1102 = vxpose.xlu0.b32.start [1/16] %v1070, 128
        %1103 = vxpose.xlu0.b32.cont [2/16] %v1071, 128
        %1104 = vxpose.xlu0.b32.cont [3/16] %v1072, 128
        %1105 = vxpose.xlu0.b32.cont [4/16] %v1073, 128
        %1106 = vxpose.xlu0.b32.cont [5/16] %v1074, 128
        %1107 = vxpose.xlu0.b32.cont [6/16] %v1075, 128
        %1108 = vxpose.xlu0.b32.cont [7/16] %v1076, 128
        %1109 = vxpose.xlu0.b32.cont [8/16] %v1077, 128
        %1110 = vxpose.xlu0.b32.cont [9/16] %v1078, 128
        %1111 = vxpose.xlu0.b32.cont [10/16] %v1079, 128
        %1112 = vxpose.xlu0.b32.cont [11/16] %v1080, 128
        %1113 = vxpose.xlu0.b32.cont [12/16] %v1081, 128
        %1114 = vxpose.xlu0.b32.cont [13/16] %v1082, 128
        %1115 = vxpose.xlu0.b32.cont [14/16] %v1083, 128
        %1116 = vxpose.xlu0.b32.cont [15/16] %v1084, 128
        %1117 = vxpose.xlu0.b32.end [16/16] %v1085, 128
        %v1118 = vpop.trf.xlu0
        %v1119 = vpop.trf.xlu0
        %v1120 = vpop.trf.xlu0
        %v1121 = vpop.trf.xlu0
        %v1122 = vpop.trf.xlu0
        %v1123 = vpop.trf.xlu0
        %v1124 = vpop.trf.xlu0
        %v1125 = vpop.trf.xlu0
        %v1126 = vpop.trf.xlu0
        %v1127 = vpop.trf.xlu0
        %v1128 = vpop.trf.xlu0
        %v1129 = vpop.trf.xlu0
        %v1130 = vpop.trf.xlu0
        %v1131 = vpop.trf.xlu0
        %v1132 = vpop.trf.xlu0
        %v1133 = vpop.trf.xlu0
        %1134 = vxpose.xlu0.b32.start [1/16] %v1086, 128
        %1135 = vxpose.xlu0.b32.cont [2/16] %v1087, 128
        %1136 = vxpose.xlu0.b32.cont [3/16] %v1088, 128
        %1137 = vxpose.xlu0.b32.cont [4/16] %v1089, 128
        %1138 = vxpose.xlu0.b32.cont [5/16] %v1090, 128
        %1139 = vxpose.xlu0.b32.cont [6/16] %v1091, 128
        %1140 = vxpose.xlu0.b32.cont [7/16] %v1092, 128
        %1141 = vxpose.xlu0.b32.cont [8/16] %v1093, 128
        %1142 = vxpose.xlu0.b32.cont [9/16] %v1094, 128
        %1143 = vxpose.xlu0.b32.cont [10/16] %v1095, 128
        %1144 = vxpose.xlu0.b32.cont [11/16] %v1096, 128
        %1145 = vxpose.xlu0.b32.cont [12/16] %v1097, 128
        %1146 = vxpose.xlu0.b32.cont [13/16] %v1098, 128
        %1147 = vxpose.xlu0.b32.cont [14/16] %v1099, 128
        %1148 = vxpose.xlu0.b32.cont [15/16] %v1100, 128
        %1149 = vxpose.xlu0.b32.end [16/16] %v1101, 128
        %v1150 = vpop.trf.xlu0
        %v1151 = vpop.trf.xlu0
        %v1152 = vpop.trf.xlu0
        %v1153 = vpop.trf.xlu0
        %v1154 = vpop.trf.xlu0
        %v1155 = vpop.trf.xlu0
        %v1156 = vpop.trf.xlu0
        %v1157 = vpop.trf.xlu0
        %v1158 = vpop.trf.xlu0
        %v1159 = vpop.trf.xlu0
        %v1160 = vpop.trf.xlu0
        %v1161 = vpop.trf.xlu0
        %v1162 = vpop.trf.xlu0
        %v1163 = vpop.trf.xlu0
        %v1164 = vpop.trf.xlu0
        %v1165 = vpop.trf.xlu0
        %v1166 = vld [vmem:[%s1] sm:$0xff]
        %v1167 = vld [vmem:[%s1 + $0x8] sm:$0xff]
        %v1168 = vld [vmem:[%s1 + $0x10] sm:$0xff]
        %v1169 = vld [vmem:[%s1 + $0x18] sm:$0xff]
        %v1170 = vld [vmem:[%s1 + $0x20] sm:$0xff]
        %v1171 = vld [vmem:[%s1 + $0x28] sm:$0xff]
        %v1172 = vld [vmem:[%s1 + $0x30] sm:$0xff]
        %v1173 = vld [vmem:[%s1 + $0x38] sm:$0xff]
        %v1174 = vld [vmem:[%s1 + $0x40] sm:$0xff]
        %v1175 = vld [vmem:[%s1 + $0x48] sm:$0xff]
        %v1176 = vld [vmem:[%s1 + $0x50] sm:$0xff]
        %v1177 = vld [vmem:[%s1 + $0x58] sm:$0xff]
        %v1178 = vld [vmem:[%s1 + $0x60] sm:$0xff]
        %v1179 = vld [vmem:[%s1 + $0x68] sm:$0xff]
        %v1180 = vld [vmem:[%s1 + $0x70] sm:$0xff]
        %v1181 = vld [vmem:[%s1 + $0x78] sm:$0xff]
        %v1182 = vld [vmem:[%s1 + $0x80] sm:$0xff]
        %v1183 = vld [vmem:[%s1 + $0x88] sm:$0xff]
        %v1184 = vld [vmem:[%s1 + $0x90] sm:$0xff]
        %v1185 = vld [vmem:[%s1 + $0x98] sm:$0xff]
        %v1186 = vld [vmem:[%s1 + $0xa0] sm:$0xff]
        %v1187 = vld [vmem:[%s1 + $0xa8] sm:$0xff]
        %v1188 = vld [vmem:[%s1 + $0xb0] sm:$0xff]
        %v1189 = vld [vmem:[%s1 + $0xb8] sm:$0xff]
        %v1190 = vld [vmem:[%s1 + $0xc0] sm:$0xff]
        %v1191 = vld [vmem:[%s1 + $0xc8] sm:$0xff]
        %v1192 = vld [vmem:[%s1 + $0xd0] sm:$0xff]
        %v1193 = vld [vmem:[%s1 + $0xd8] sm:$0xff]
        %v1194 = vld [vmem:[%s1 + $0xe0] sm:$0xff]
        %v1195 = vld [vmem:[%s1 + $0xe8] sm:$0xff]
        %v1196 = vld [vmem:[%s1 + $0xf0] sm:$0xff]
        %v1197 = vld [vmem:[%s1 + $0xf8] sm:$0xff]
        %1198 = vmatprep.subr.mxu0 0.0
        %1199 = vmatpush1.msra.mxu0 %v1166
        %1200 = vmatprep.subr.mxu0 0.0
        %1201 = vmatpush1.msra.mxu0 %v1167
        %1202 = vmatprep.subr.mxu0 0.0
        %1203 = vmatpush1.msra.mxu0 %v1168
        %1204 = vmatprep.subr.mxu0 0.0
        %1205 = vmatpush1.msra.mxu0 %v1169
        %1206 = vmatprep.subr.mxu0 0.0
        %1207 = vmatpush1.msra.mxu0 %v1170
        %1208 = vmatprep.subr.mxu0 0.0
        %1209 = vmatpush1.msra.mxu0 %v1171
        %1210 = vmatprep.subr.mxu0 0.0
        %1211 = vmatpush1.msra.mxu0 %v1172
        %1212 = vmatprep.subr.mxu0 0.0
        %1213 = vmatpush1.msra.mxu0 %v1173
        %1214 = vmatprep.subr.mxu0 0.0
        %1215 = vmatpush1.msra.mxu0 %v1174
        %1216 = vmatprep.subr.mxu0 0.0
        %1217 = vmatpush1.msra.mxu0 %v1175
        %1218 = vmatprep.subr.mxu0 0.0
        %1219 = vmatpush1.msra.mxu0 %v1176
        %1220 = vmatprep.subr.mxu0 0.0
        %1221 = vmatpush1.msra.mxu0 %v1177
        %1222 = vmatprep.subr.mxu0 0.0
        %1223 = vmatpush1.msra.mxu0 %v1178
        %1224 = vmatprep.subr.mxu0 0.0
        %1225 = vmatpush1.msra.mxu0 %v1179
        %1226 = vmatprep.subr.mxu0 0.0
        %1227 = vmatpush1.msra.mxu0 %v1180
        %1228 = vmatprep.subr.mxu0 0.0
        %1229 = vmatpush1.msra.mxu0 %v1181
        %1230 = vmatprep.subr.mxu0 0.0
        %1231 = vmatpush1.msra.mxu0 %v1182
        %1232 = vmatprep.subr.mxu0 0.0
        %1233 = vmatpush1.msra.mxu0 %v1183
        %1234 = vmatprep.subr.mxu0 0.0
        %1235 = vmatpush1.msra.mxu0 %v1184
        %1236 = vmatprep.subr.mxu0 0.0
        %1237 = vmatpush1.msra.mxu0 %v1185
        %1238 = vmatprep.subr.mxu0 0.0
        %1239 = vmatpush1.msra.mxu0 %v1186
        %1240 = vmatprep.subr.mxu0 0.0
        %1241 = vmatpush1.msra.mxu0 %v1187
        %1242 = vmatprep.subr.mxu0 0.0
        %1243 = vmatpush1.msra.mxu0 %v1188
        %1244 = vmatprep.subr.mxu0 0.0
        %1245 = vmatpush1.msra.mxu0 %v1189
        %1246 = vmatprep.subr.mxu0 0.0
        %1247 = vmatpush1.msra.mxu0 %v1190
        %1248 = vmatprep.subr.mxu0 0.0
        %1249 = vmatpush1.msra.mxu0 %v1191
        %1250 = vmatprep.subr.mxu0 0.0
        %1251 = vmatpush1.msra.mxu0 %v1192
        %1252 = vmatprep.subr.mxu0 0.0
        %1253 = vmatpush1.msra.mxu0 %v1193
        %1254 = vmatprep.subr.mxu0 0.0
        %1255 = vmatpush1.msra.mxu0 %v1194
        %1256 = vmatprep.subr.mxu0 0.0
        %1257 = vmatpush1.msra.mxu0 %v1195
        %1258 = vmatprep.subr.mxu0 0.0
        %1259 = vmatpush1.msra.mxu0 %v1196
        %1260 = vmatprep.subr.mxu0 0.0
        %1261 = vmatpush1.msra.mxu0 %v1197
        %1262 = vmatprep.mubr.f32.mxu0 %v471
        %1263 = vmatmul.mubr.f32.gmra.mrb[0].mxu0 %v439
        %v1264 = vpop.f32.mrb[0].mxu0
        %v1265 = vadd.f32 0.0, %v1264
        %v1266 = vpop.f32.mrb[0].mxu0
        %1267 = vmatprep.mubr.f32.mxu0 %v472
        %1268 = vmatmul.mubr.f32.gmra.mrb[0].mxu0 %v440
        %v1269 = vpop.f32.mrb[0].mxu0
        %v1270 = vadd.f32 0.0, %v1269
        %v1271 = vpop.f32.mrb[0].mxu0
        %1272 = vmatprep.mubr.f32.mxu0 %v473
        %1273 = vmatmul.mubr.f32.gmra.mrb[0].mxu0 %v441
        %v1274 = vpop.f32.mrb[0].mxu0
        %v1275 = vadd.f32 0.0, %v1274
        %v1276 = vpop.f32.mrb[0].mxu0
        %1277 = vmatprep.mubr.f32.mxu0 %v474
        %1278 = vmatmul.mubr.f32.gmra.mrb[0].mxu0 %v442
        %v1279 = vpop.f32.mrb[0].mxu0
        %v1280 = vadd.f32 0.0, %v1279
        %v1281 = vpop.f32.mrb[0].mxu0
        %1282 = vmatprep.mubr.f32.mxu0 %v568
        %1283 = vmatmul.mubr.f32.gmra.mrb[0].mxu0 %v536
        %v1284 = vpop.f32.mrb[0].mxu0
        %v1285 = vadd.f32 0.0, %v1284
        %v1286 = vpop.f32.mrb[0].mxu0
        %1287 = vmatprep.mubr.f32.mxu0 %v569
        %1288 = vmatmul.mubr.f32.gmra.mrb[0].mxu0 %v537
        %v1289 = vpop.f32.mrb[0].mxu0
        %v1290 = vadd.f32 0.0, %v1289
        %v1291 = vpop.f32.mrb[0].mxu0
        %1292 = vmatprep.mubr.f32.mxu0 %v570
        %1293 = vmatmul.mubr.f32.gmra.mrb[0].mxu0 %v538
        %v1294 = vpop.f32.mrb[0].mxu0
        %v1295 = vadd.f32 0.0, %v1294
        %v1296 = vpop.f32.mrb[0].mxu0
        %1297 = vmatprep.mubr.f32.mxu0 %v571
        %1298 = vmatmul.mubr.f32.gmra.mrb[0].mxu0 %v539
        %v1299 = vpop.f32.mrb[0].mxu0
        %v1300 = vadd.f32 0.0, %v1299
        %v1301 = vpop.f32.mrb[0].mxu0
        %1302 = vmatprep.mubr.f32.mxu0 %v665
        %1303 = vmatmul.mubr.f32.gmra.mrb[0].mxu0 %v633
        %v1304 = vpop.f32.mrb[0].mxu0
        %v1305 = vadd.f32 0.0, %v1304
        %v1306 = vpop.f32.mrb[0].mxu0
        %1307 = vmatprep.mubr.f32.mxu0 %v666
        %1308 = vmatmul.mubr.f32.gmra.mrb[0].mxu0 %v634
        %v1309 = vpop.f32.mrb[0].mxu0
        %v1310 = vadd.f32 0.0, %v1309
        %v1311 = vpop.f32.mrb[0].mxu0
        %1312 = vmatprep.mubr.f32.mxu0 %v667
        %1313 = vmatmul.mubr.f32.gmra.mrb[0].mxu0 %v635
        %v1314 = vpop.f32.mrb[0].mxu0
        %v1315 = vadd.f32 0.0, %v1314
        %v1316 = vpop.f32.mrb[0].mxu0
        %1317 = vmatprep.mubr.f32.mxu0 %v668
        %1318 = vmatmul.mubr.f32.gmra.mrb[0].mxu0 %v636
        %v1319 = vpop.f32.mrb[0].mxu0
        %v1320 = vadd.f32 0.0, %v1319
        %v1321 = vpop.f32.mrb[0].mxu0
        %1322 = vmatprep.mubr.f32.mxu0 %v762
        %1323 = vmatmul.mubr.f32.gmra.mrb[0].mxu0 %v730
        %v1324 = vpop.f32.mrb[0].mxu0
        %v1325 = vadd.f32 0.0, %v1324
        %v1326 = vpop.f32.mrb[0].mxu0
        %1327 = vmatprep.mubr.f32.mxu0 %v763
        %1328 = vmatmul.mubr.f32.gmra.mrb[0].mxu0 %v731
        %v1329 = vpop.f32.mrb[0].mxu0
        %v1330 = vadd.f32 0.0, %v1329
        %v1331 = vpop.f32.mrb[0].mxu0
        %1332 = vmatprep.mubr.f32.mxu0 %v764
        %1333 = vmatmul.mubr.f32.gmra.mrb[0].mxu0 %v732
        %v1334 = vpop.f32.mrb[0].mxu0
        %v1335 = vadd.f32 0.0, %v1334
        %v1336 = vpop.f32.mrb[0].mxu0
        %1337 = vmatprep.mubr.f32.mxu0 %v765
        %1338 = vmatmul.mubr.f32.gmra.mrb[0].mxu0 %v733
        %v1339 = vpop.f32.mrb[0].mxu0
        %v1340 = vadd.f32 0.0, %v1339
        %v1341 = vpop.f32.mrb[0].mxu0
        %1342 = vmatprep.mubr.f32.mxu0 %v859
        %1343 = vmatmul.mubr.f32.gmra.mrb[0].mxu0 %v827
        %v1344 = vpop.f32.mrb[0].mxu0
        %v1345 = vadd.f32 0.0, %v1344
        %v1346 = vpop.f32.mrb[0].mxu0
        %1347 = vmatprep.mubr.f32.mxu0 %v860
        %1348 = vmatmul.mubr.f32.gmra.mrb[0].mxu0 %v828
        %v1349 = vpop.f32.mrb[0].mxu0
        %v1350 = vadd.f32 0.0, %v1349
        %v1351 = vpop.f32.mrb[0].mxu0
        %1352 = vmatprep.mubr.f32.mxu0 %v861
        %1353 = vmatmul.mubr.f32.gmra.mrb[0].mxu0 %v829
        %v1354 = vpop.f32.mrb[0].mxu0
        %v1355 = vadd.f32 0.0, %v1354
        %v1356 = vpop.f32.mrb[0].mxu0
        %1357 = vmatprep.mubr.f32.mxu0 %v862
        %1358 = vmatmul.mubr.f32.gmra.mrb[0].mxu0 %v830
        %v1359 = vpop.f32.mrb[0].mxu0
        %v1360 = vadd.f32 0.0, %v1359
        %v1361 = vpop.f32.mrb[0].mxu0
        %1362 = vmatprep.mubr.f32.mxu0 %v956
        %1363 = vmatmul.mubr.f32.gmra.mrb[0].mxu0 %v924
        %v1364 = vpop.f32.mrb[0].mxu0
        %v1365 = vadd.f32 0.0, %v1364
        %v1366 = vpop.f32.mrb[0].mxu0
        %1367 = vmatprep.mubr.f32.mxu0 %v957
        %1368 = vmatmul.mubr.f32.gmra.mrb[0].mxu0 %v925
        %v1369 = vpop.f32.mrb[0].mxu0
        %v1370 = vadd.f32 0.0, %v1369
        %v1371 = vpop.f32.mrb[0].mxu0
        %1372 = vmatprep.mubr.f32.mxu0 %v958
        %1373 = vmatmul.mubr.f32.gmra.mrb[0].mxu0 %v926
        %v1374 = vpop.f32.mrb[0].mxu0
        %v1375 = vadd.f32 0.0, %v1374
        %v1376 = vpop.f32.mrb[0].mxu0
        %1377 = vmatprep.mubr.f32.mxu0 %v959
        %1378 = vmatmul.mubr.f32.gmra.mrb[0].mxu0 %v927
        %v1379 = vpop.f32.mrb[0].mxu0
        %v1380 = vadd.f32 0.0, %v1379
        %v1381 = vpop.f32.mrb[0].mxu0
        %1382 = vmatprep.mubr.f32.mxu0 %v1053
        %1383 = vmatmul.mubr.f32.gmra.mrb[0].mxu0 %v1021
        %v1384 = vpop.f32.mrb[0].mxu0
        %v1385 = vadd.f32 0.0, %v1384
        %v1386 = vpop.f32.mrb[0].mxu0
        %1387 = vmatprep.mubr.f32.mxu0 %v1054
        %1388 = vmatmul.mubr.f32.gmra.mrb[0].mxu0 %v1022
        %v1389 = vpop.f32.mrb[0].mxu0
        %v1390 = vadd.f32 0.0, %v1389
        %v1391 = vpop.f32.mrb[0].mxu0
        %1392 = vmatprep.mubr.f32.mxu0 %v1055
        %1393 = vmatmul.mubr.f32.gmra.mrb[0].mxu0 %v1023
        %v1394 = vpop.f32.mrb[0].mxu0
        %v1395 = vadd.f32 0.0, %v1394
        %v1396 = vpop.f32.mrb[0].mxu0
        %1397 = vmatprep.mubr.f32.mxu0 %v1056
        %1398 = vmatmul.mubr.f32.gmra.mrb[0].mxu0 %v1024
        %v1399 = vpop.f32.mrb[0].mxu0
        %v1400 = vadd.f32 0.0, %v1399
        %v1401 = vpop.f32.mrb[0].mxu0
        %1402 = vmatprep.mubr.f32.mxu0 %v1150
        %1403 = vmatmul.mubr.f32.gmra.mrb[0].mxu0 %v1118
        %v1404 = vpop.f32.mrb[0].mxu0
        %v1405 = vadd.f32 0.0, %v1404
        %v1406 = vpop.f32.mrb[0].mxu0
        %1407 = vmatprep.mubr.f32.mxu0 %v1151
        %1408 = vmatmul.mubr.f32.gmra.mrb[0].mxu0 %v1119
        %v1409 = vpop.f32.mrb[0].mxu0
        %v1410 = vadd.f32 0.0, %v1409
        %v1411 = vpop.f32.mrb[0].mxu0
        %1412 = vmatprep.mubr.f32.mxu0 %v1152
        %1413 = vmatmul.mubr.f32.gmra.mrb[0].mxu0 %v1120
        %v1414 = vpop.f32.mrb[0].mxu0
        %v1415 = vadd.f32 0.0, %v1414
        %v1416 = vpop.f32.mrb[0].mxu0
        %1417 = vmatprep.mubr.f32.mxu0 %v1153
        %1418 = vmatmul.mubr.f32.gmra.mrb[0].mxu0 %v1121
        %v1419 = vpop.f32.mrb[0].mxu0
        %v1420 = vadd.f32 0.0, %v1419
        %v1421 = vpop.f32.mrb[0].mxu0
        %1422 = vdwg.mxu0
        %s1423 = sld [smem:[#allocation2]]
        %v1424 = vld [vmem:[%s2] sm:$0x3]
        %v1425 = vld [vmem:[%s3] sm:$0x3]
        %v1426 = vld [vmem:[%s4] sm:$0xff]
        %v1427 = vld [vmem:[%s4 + $0x8] sm:$0xff]
        %v1428 = vld [vmem:[%s4 + $0x10] sm:$0xff]
        %v1429 = vld [vmem:[%s4 + $0x18] sm:$0xff]
        %v1430 = vld [vmem:[%s5] sm:$0xff]
        %v1431 = vld [vmem:[%s5 + $0x8] sm:$0xff]
        %v1432 = vld [vmem:[%s5 + $0x10] sm:$0xff]
        %v1433 = vld [vmem:[%s5 + $0x18] sm:$0xff]
        %v1434 = vld [vmem:[%s6] sm:$0xff]
        %v1435 = vld [vmem:[%s7] sm:$0xff]
        %vm1436 = vcmask 261120
        %v1438 = vsel %vm1436, %v1424, 0
        %1440 = vmatprep.subr.mxu0 0.0
        %1441 = vmatpush1.msra.mxu0 %v1265
        %1442 = vmatprep.subr.mxu0 0.0
        %1443 = vmatpush1.msra.mxu0 %v1270
        %1444 = vmatprep.subr.mxu0 0.0
        %1445 = vmatpush1.msra.mxu0 %v1275
        %1446 = vmatprep.subr.mxu0 0.0
        %1447 = vmatpush1.msra.mxu0 %v1280
        %1448 = vmatprep.subr.mxu0 0.0
        %1449 = vmatpush1.msra.mxu0 0.0
        %1450 = vmatprep.subr.mxu0 0.0
        %1451 = vmatpush1.msra.mxu0 0.0
        %1452 = vmatprep.subr.mxu0 0.0
        %1453 = vmatpush1.msra.mxu0 0.0
        %1454 = vmatprep.subr.mxu0 0.0
        %1455 = vmatpush1.msra.mxu0 0.0
        %1456 = vmatprep.subr.mxu0 0.0
        %1457 = vmatpush1.msra.mxu0 0.0
        %1458 = vmatprep.subr.mxu0 0.0
        %1459 = vmatpush1.msra.mxu0 0.0
        %1460 = vmatprep.subr.mxu0 0.0
        %1461 = vmatpush1.msra.mxu0 0.0
        %1462 = vmatprep.subr.mxu0 0.0
        %1463 = vmatpush1.msra.mxu0 0.0
        %1464 = vmatprep.subr.mxu0 0.0
        %1465 = vmatpush1.msra.mxu0 0.0
        %1466 = vmatprep.subr.mxu0 0.0
        %1467 = vmatpush1.msra.mxu0 0.0
        %1468 = vmatprep.subr.mxu0 0.0
        %1469 = vmatpush1.msra.mxu0 0.0
        %1470 = vmatprep.subr.mxu0 0.0
        %1471 = vmatpush1.msra.mxu0 0.0
        %1472 = vmatprep.subr.mxu0 0.0
        %1473 = vmatpush1.msra.mxu0 0.0
        %1474 = vmatprep.subr.mxu0 0.0
        %1475 = vmatpush1.msra.mxu0 0.0
        %1476 = vmatprep.subr.mxu0 0.0
        %1477 = vmatpush1.msra.mxu0 0.0
        %1478 = vmatprep.subr.mxu0 0.0
        %1479 = vmatpush1.msra.mxu0 0.0
        %1480 = vmatprep.subr.mxu0 0.0
        %1481 = vmatpush1.msra.mxu0 0.0
        %1482 = vmatprep.subr.mxu0 0.0
        %1483 = vmatpush1.msra.mxu0 0.0
        %1484 = vmatprep.subr.mxu0 0.0
        %1485 = vmatpush1.msra.mxu0 0.0
        %1486 = vmatprep.subr.mxu0 0.0
        %1487 = vmatpush1.msra.mxu0 0.0
        %1488 = vmatprep.subr.mxu0 0.0
        %1489 = vmatpush1.msra.mxu0 0.0
        %1490 = vmatprep.subr.mxu0 0.0
        %1491 = vmatpush1.msra.mxu0 0.0
        %1492 = vmatprep.subr.mxu0 0.0
        %1493 = vmatpush1.msra.mxu0 0.0
        %1494 = vmatprep.subr.mxu0 0.0
        %1495 = vmatpush1.msra.mxu0 0.0
        %1496 = vmatprep.subr.mxu0 0.0
        %1497 = vmatpush1.msra.mxu0 0.0
        %1498 = vmatprep.subr.mxu0 0.0
        %1499 = vmatpush1.msra.mxu0 0.0
        %1500 = vmatprep.subr.mxu0 0.0
        %1501 = vmatpush1.msra.mxu0 0.0
        %1502 = vmatprep.subr.mxu0 0.0
        %1503 = vmatpush1.msra.mxu0 0.0
        %1504 = vmatprep.mubr.f32.mxu0 0.0
        %1505 = vmatmul.mubr.f32.gmra.mrb[0].mxu0 %v1438
        %v1506 = vpop.f32.mrb[0].mxu0
        %v1507 = vadd.f32 %v1425, %v1506
        %v1508 = vpop.f32.mrb[0].mxu0
        %1509 = vdwg.mxu0
        %1510 = vxpose.xlu0.b32.start [1/16] %v1507, 128
        %1511 = vxpose.xlu0.b32.cont [2/16] 0.0, 128
        %1512 = vxpose.xlu0.b32.cont [3/16] 0.0, 128
        %1513 = vxpose.xlu0.b32.cont [4/16] 0.0, 128
        %1514 = vxpose.xlu0.b32.cont [5/16] 0.0, 128
        %1515 = vxpose.xlu0.b32.cont [6/16] 0.0, 128
        %1516 = vxpose.xlu0.b32.cont [7/16] 0.0, 128
        %1517 = vxpose.xlu0.b32.cont [8/16] 0.0, 128
        %1518 = vxpose.xlu0.b32.cont [9/16] 0.0, 128
        %1519 = vxpose.xlu0.b32.cont [10/16] 0.0, 128
        %1520 = vxpose.xlu0.b32.cont [11/16] 0.0, 128
        %1521 = vxpose.xlu0.b32.cont [12/16] 0.0, 128
        %1522 = vxpose.xlu0.b32.cont [13/16] 0.0, 128
        %1523 = vxpose.xlu0.b32.cont [14/16] 0.0, 128
        %1524 = vxpose.xlu0.b32.cont [15/16] 0.0, 128
        %1525 = vxpose.xlu0.b32.end [16/16] 0.0, 128
        %v1526 = vpop.trf.xlu0
        %v1527 = vpop.trf.xlu0
        %v1528 = vpop.trf.xlu0
        %v1529 = vpop.trf.xlu0
        %v1530 = vpop.trf.xlu0
        %v1531 = vpop.trf.xlu0
        %v1532 = vpop.trf.xlu0
        %v1533 = vpop.trf.xlu0
        %v1534 = vpop.trf.xlu0
        %v1535 = vpop.trf.xlu0
        %v1536 = vpop.trf.xlu0
        %v1537 = vpop.trf.xlu0
        %v1538 = vpop.trf.xlu0
        %v1539 = vpop.trf.xlu0
        %v1540 = vpop.trf.xlu0
        %v1541 = vpop.trf.xlu0
        %1543 = vset.pattern.permute.xlu0 0
        %1544 = vperm.xlu0 %1543, %v1526
        %v1545 = vpop.permute.xlu0 %1544
        %v1547 = vlaneseq
        %v1548 = vshrl.u32 %v1547, 7
        %v1549 = vsub.s32 1, %v1548
        %v1550 = vrot.slane %v1507, %v1549
        %v1551 = vsub.f32 %v1545, %v1550
        %v1552 = vtanh.pop %v1551
        %v1553 = vstv %s1423
        %v1554 = vmul.f32 %v1553, %v1552
        %v1555 = vadd.f32 %v1434, %v1554
        %v1556 = vand.u32 2147483647, %v1555
        %vm1557 = vcmask 64512
        %v1559 = vsel %vm1557, %v1556, 0
        %1561 = vmatprep.subr.mxu0 0.0
        %1562 = vmatpush1.msra.mxu0 %v1435
        %1563 = vmatprep.subr.mxu0 0.0
        %1564 = vmatpush1.msra.mxu0 0.0
        %1565 = vmatprep.subr.mxu0 0.0
        %1566 = vmatpush1.msra.mxu0 0.0
        %1567 = vmatprep.subr.mxu0 0.0
        %1568 = vmatpush1.msra.mxu0 0.0
        %1569 = vmatprep.subr.mxu0 0.0
        %1570 = vmatpush1.msra.mxu0 0.0
        %1571 = vmatprep.subr.mxu0 0.0
        %1572 = vmatpush1.msra.mxu0 0.0
        %1573 = vmatprep.subr.mxu0 0.0
        %1574 = vmatpush1.msra.mxu0 0.0
        %1575 = vmatprep.subr.mxu0 0.0
        %1576 = vmatpush1.msra.mxu0 0.0
        %1577 = vmatprep.subr.mxu0 0.0
        %1578 = vmatpush1.msra.mxu0 0.0
        %1579 = vmatprep.subr.mxu0 0.0
        %1580 = vmatpush1.msra.mxu0 0.0
        %1581 = vmatprep.subr.mxu0 0.0
        %1582 = vmatpush1.msra.mxu0 0.0
        %1583 = vmatprep.subr.mxu0 0.0
        %1584 = vmatpush1.msra.mxu0 0.0
        %1585 = vmatprep.subr.mxu0 0.0
        %1586 = vmatpush1.msra.mxu0 0.0
        %1587 = vmatprep.subr.mxu0 0.0
        %1588 = vmatpush1.msra.mxu0 0.0
        %1589 = vmatprep.subr.mxu0 0.0
        %1590 = vmatpush1.msra.mxu0 0.0
        %1591 = vmatprep.subr.mxu0 0.0
        %1592 = vmatpush1.msra.mxu0 0.0
        %1593 = vmatprep.subr.mxu0 0.0
        %1594 = vmatpush1.msra.mxu0 0.0
        %1595 = vmatprep.subr.mxu0 0.0
        %1596 = vmatpush1.msra.mxu0 0.0
        %1597 = vmatprep.subr.mxu0 0.0
        %1598 = vmatpush1.msra.mxu0 0.0
        %1599 = vmatprep.subr.mxu0 0.0
        %1600 = vmatpush1.msra.mxu0 0.0
        %1601 = vmatprep.subr.mxu0 0.0
        %1602 = vmatpush1.msra.mxu0 0.0
        %1603 = vmatprep.subr.mxu0 0.0
        %1604 = vmatpush1.msra.mxu0 0.0
        %1605 = vmatprep.subr.mxu0 0.0
        %1606 = vmatpush1.msra.mxu0 0.0
        %1607 = vmatprep.subr.mxu0 0.0
        %1608 = vmatpush1.msra.mxu0 0.0
        %1609 = vmatprep.subr.mxu0 0.0
        %1610 = vmatpush1.msra.mxu0 0.0
        %1611 = vmatprep.subr.mxu0 0.0
        %1612 = vmatpush1.msra.mxu0 0.0
        %1613 = vmatprep.subr.mxu0 0.0
        %1614 = vmatpush1.msra.mxu0 0.0
        %1615 = vmatprep.subr.mxu0 0.0
        %1616 = vmatpush1.msra.mxu0 0.0
        %1617 = vmatprep.subr.mxu0 0.0
        %1618 = vmatpush1.msra.mxu0 0.0
        %1619 = vmatprep.subr.mxu0 0.0
        %1620 = vmatpush1.msra.mxu0 0.0
        %1621 = vmatprep.subr.mxu0 0.0
        %1622 = vmatpush1.msra.mxu0 0.0
        %1623 = vmatprep.subr.mxu0 0.0
        %1624 = vmatpush1.msra.mxu0 0.0
        %1625 = vmatprep.mubr.f32.mxu0 0.0
        %1626 = vmatmul.mubr.f32.gmra.mrb[0].mxu0 %v1559
        %v1627 = vpop.f32.mrb[0].mxu0
        %v1628 = vadd.f32 0.0, %v1627
        %v1629 = vpop.f32.mrb[0].mxu0
        %1630 = vdwg.mxu0
        %v1632 = vsel %vm1436, %v1426, 0
        %v1635 = vsel %vm1436, %v1427, 0
        %v1638 = vsel %vm1436, %v1428, 0
        %v1641 = vsel %vm1436, %v1429, 0
        %1643 = vmatprep.subr.mxu0 0.0
        %1644 = vmatpush1.msra.mxu0 %v1265
        %1645 = vmatprep.subr.mxu0 0.0
        %1646 = vmatpush1.msra.mxu0 %v1270
        %1647 = vmatprep.subr.mxu0 0.0
        %1648 = vmatpush1.msra.mxu0 %v1275
        %1649 = vmatprep.subr.mxu0 0.0
        %1650 = vmatpush1.msra.mxu0 %v1280
        %1651 = vmatprep.subr.mxu0 0.0
        %1652 = vmatpush1.msra.mxu0 0.0
        %1653 = vmatprep.subr.mxu0 0.0
        %1654 = vmatpush1.msra.mxu0 0.0
        %1655 = vmatprep.subr.mxu0 0.0
        %1656 = vmatpush1.msra.mxu0 0.0
        %1657 = vmatprep.subr.mxu0 0.0
        %1658 = vmatpush1.msra.mxu0 0.0
        %1659 = vmatprep.subr.mxu0 0.0
        %1660 = vmatpush1.msra.mxu0 0.0
        %1661 = vmatprep.subr.mxu0 0.0
        %1662 = vmatpush1.msra.mxu0 0.0
        %1663 = vmatprep.subr.mxu0 0.0
        %1664 = vmatpush1.msra.mxu0 0.0
        %1665 = vmatprep.subr.mxu0 0.0
        %1666 = vmatpush1.msra.mxu0 0.0
        %1667 = vmatprep.subr.mxu0 0.0
        %1668 = vmatpush1.msra.mxu0 0.0
        %1669 = vmatprep.subr.mxu0 0.0
        %1670 = vmatpush1.msra.mxu0 0.0
        %1671 = vmatprep.subr.mxu0 0.0
        %1672 = vmatpush1.msra.mxu0 0.0
        %1673 = vmatprep.subr.mxu0 0.0
        %1674 = vmatpush1.msra.mxu0 0.0
        %1675 = vmatprep.subr.mxu0 0.0
        %1676 = vmatpush1.msra.mxu0 0.0
        %1677 = vmatprep.subr.mxu0 0.0
        %1678 = vmatpush1.msra.mxu0 0.0
        %1679 = vmatprep.subr.mxu0 0.0
        %1680 = vmatpush1.msra.mxu0 0.0
        %1681 = vmatprep.subr.mxu0 0.0
        %1682 = vmatpush1.msra.mxu0 0.0
        %1683 = vmatprep.subr.mxu0 0.0
        %1684 = vmatpush1.msra.mxu0 0.0
        %1685 = vmatprep.subr.mxu0 0.0
        %1686 = vmatpush1.msra.mxu0 0.0
        %1687 = vmatprep.subr.mxu0 0.0
        %1688 = vmatpush1.msra.mxu0 0.0
        %1689 = vmatprep.subr.mxu0 0.0
        %1690 = vmatpush1.msra.mxu0 0.0
        %1691 = vmatprep.subr.mxu0 0.0
        %1692 = vmatpush1.msra.mxu0 0.0
        %1693 = vmatprep.subr.mxu0 0.0
        %1694 = vmatpush1.msra.mxu0 0.0
        %1695 = vmatprep.subr.mxu0 0.0
        %1696 = vmatpush1.msra.mxu0 0.0
        %1697 = vmatprep.subr.mxu0 0.0
        %1698 = vmatpush1.msra.mxu0 0.0
        %1699 = vmatprep.subr.mxu0 0.0
        %1700 = vmatpush1.msra.mxu0 0.0
        %1701 = vmatprep.subr.mxu0 0.0
        %1702 = vmatpush1.msra.mxu0 0.0
        %1703 = vmatprep.subr.mxu0 0.0
        %1704 = vmatpush1.msra.mxu0 0.0
        %1705 = vmatprep.subr.mxu0 0.0
        %1706 = vmatpush1.msra.mxu0 0.0
        %1707 = vmatprep.mubr.f32.mxu0 0.0
        %1708 = vmatmul.mubr.f32.gmra.mrb[0].mxu0 %v1632
        %v1709 = vpop.f32.mrb[0].mxu0
        %v1710 = vadd.f32 %v1430, %v1709
        %v1711 = vpop.f32.mrb[0].mxu0
        %1712 = vmatprep.mubr.f32.mxu0 0.0
        %1713 = vmatmul.mubr.f32.gmra.mrb[0].mxu0 %v1635
        %v1714 = vpop.f32.mrb[0].mxu0
        %v1715 = vadd.f32 %v1431, %v1714
        %v1716 = vpop.f32.mrb[0].mxu0
        %1717 = vmatprep.mubr.f32.mxu0 0.0
        %1718 = vmatmul.mubr.f32.gmra.mrb[0].mxu0 %v1638
        %v1719 = vpop.f32.mrb[0].mxu0
        %v1720 = vadd.f32 %v1432, %v1719
        %v1721 = vpop.f32.mrb[0].mxu0
        %1722 = vmatprep.mubr.f32.mxu0 0.0
        %1723 = vmatmul.mubr.f32.gmra.mrb[0].mxu0 %v1641
        %v1724 = vpop.f32.mrb[0].mxu0
        %v1725 = vadd.f32 %v1433, %v1724
        %v1726 = vpop.f32.mrb[0].mxu0
        %1727 = vdwg.mxu0
        %v1729 = vsel %vm1557, %v1710, 0
        %v1732 = vsel %vm1557, %v1715, 0
        %v1735 = vsel %vm1557, %v1720, 0
        %v1738 = vsel %vm1557, %v1725, 0
        %1740 = vmatprep.subr.mxu0 0.0
        %1741 = vmatpush1.msra.mxu0 %v1628
        %1742 = vmatprep.subr.mxu0 0.0
        %1743 = vmatpush1.msra.mxu0 0.0
        %1744 = vmatprep.subr.mxu0 0.0
        %1745 = vmatpush1.msra.mxu0 0.0
        %1746 = vmatprep.subr.mxu0 0.0
        %1747 = vmatpush1.msra.mxu0 0.0
        %1748 = vmatprep.subr.mxu0 0.0
        %1749 = vmatpush1.msra.mxu0 0.0
        %1750 = vmatprep.subr.mxu0 0.0
        %1751 = vmatpush1.msra.mxu0 0.0
        %1752 = vmatprep.subr.mxu0 0.0
        %1753 = vmatpush1.msra.mxu0 0.0
        %1754 = vmatprep.subr.mxu0 0.0
        %1755 = vmatpush1.msra.mxu0 0.0
        %1756 = vmatprep.subr.mxu0 0.0
        %1757 = vmatpush1.msra.mxu0 0.0
        %1758 = vmatprep.subr.mxu0 0.0
        %1759 = vmatpush1.msra.mxu0 0.0
        %1760 = vmatprep.subr.mxu0 0.0
        %1761 = vmatpush1.msra.mxu0 0.0
        %1762 = vmatprep.subr.mxu0 0.0
        %1763 = vmatpush1.msra.mxu0 0.0
        %1764 = vmatprep.subr.mxu0 0.0
        %1765 = vmatpush1.msra.mxu0 0.0
        %1766 = vmatprep.subr.mxu0 0.0
        %1767 = vmatpush1.msra.mxu0 0.0
        %1768 = vmatprep.subr.mxu0 0.0
        %1769 = vmatpush1.msra.mxu0 0.0
        %1770 = vmatprep.subr.mxu0 0.0
        %1771 = vmatpush1.msra.mxu0 0.0
        %1772 = vmatprep.subr.mxu0 0.0
        %1773 = vmatpush1.msra.mxu0 0.0
        %1774 = vmatprep.subr.mxu0 0.0
        %1775 = vmatpush1.msra.mxu0 0.0
        %1776 = vmatprep.subr.mxu0 0.0
        %1777 = vmatpush1.msra.mxu0 0.0
        %1778 = vmatprep.subr.mxu0 0.0
        %1779 = vmatpush1.msra.mxu0 0.0
        %1780 = vmatprep.subr.mxu0 0.0
        %1781 = vmatpush1.msra.mxu0 0.0
        %1782 = vmatprep.subr.mxu0 0.0
        %1783 = vmatpush1.msra.mxu0 0.0
        %1784 = vmatprep.subr.mxu0 0.0
        %1785 = vmatpush1.msra.mxu0 0.0
        %1786 = vmatprep.subr.mxu0 0.0
        %1787 = vmatpush1.msra.mxu0 0.0
        %1788 = vmatprep.subr.mxu0 0.0
        %1789 = vmatpush1.msra.mxu0 0.0
        %1790 = vmatprep.subr.mxu0 0.0
        %1791 = vmatpush1.msra.mxu0 0.0
        %1792 = vmatprep.subr.mxu0 0.0
        %1793 = vmatpush1.msra.mxu0 0.0
        %1794 = vmatprep.subr.mxu0 0.0
        %1795 = vmatpush1.msra.mxu0 0.0
        %1796 = vmatprep.subr.mxu0 0.0
        %1797 = vmatpush1.msra.mxu0 0.0
        %1798 = vmatprep.subr.mxu0 0.0
        %1799 = vmatpush1.msra.mxu0 0.0
        %1800 = vmatprep.subr.mxu0 0.0
        %1801 = vmatpush1.msra.mxu0 0.0
        %1802 = vmatprep.subr.mxu0 0.0
        %1803 = vmatpush1.msra.mxu0 0.0
        %1804 = vmatprep.mubr.f32.mxu0 0.0
        %1805 = vmatmul.mubr.f32.gmra.mrb[0].mxu0 %v1729
        %v1806 = vpop.f32.mrb[0].mxu0
        %v1807 = vadd.f32 0.0, %v1806
        %v1808 = vpop.f32.mrb[0].mxu0
        %1809 = vmatprep.mubr.f32.mxu0 0.0
        %1810 = vmatmul.mubr.f32.gmra.mrb[0].mxu0 %v1732
        %v1811 = vpop.f32.mrb[0].mxu0
        %v1812 = vadd.f32 0.0, %v1811
        %v1813 = vpop.f32.mrb[0].mxu0
        %1814 = vmatprep.mubr.f32.mxu0 0.0
        %1815 = vmatmul.mubr.f32.gmra.mrb[0].mxu0 %v1735
        %v1816 = vpop.f32.mrb[0].mxu0
        %v1817 = vadd.f32 0.0, %v1816
        %v1818 = vpop.f32.mrb[0].mxu0
        %1819 = vmatprep.mubr.f32.mxu0 0.0
        %1820 = vmatmul.mubr.f32.gmra.mrb[0].mxu0 %v1738
        %v1821 = vpop.f32.mrb[0].mxu0
        %v1822 = vadd.f32 0.0, %v1821
        %v1823 = vpop.f32.mrb[0].mxu0
        %1824 = vdwg.mxu0
        %1825 = vmatprep.subr.mxu0 0.0
        %1826 = vmatpush1.msra.mxu0 %v1285
        %1827 = vmatprep.subr.mxu0 0.0
        %1828 = vmatpush1.msra.mxu0 %v1290
        %1829 = vmatprep.subr.mxu0 0.0
        %1830 = vmatpush1.msra.mxu0 %v1295
        %1831 = vmatprep.subr.mxu0 0.0
        %1832 = vmatpush1.msra.mxu0 %v1300
        %1833 = vmatprep.subr.mxu0 0.0
        %1834 = vmatpush1.msra.mxu0 0.0
        %1835 = vmatprep.subr.mxu0 0.0
        %1836 = vmatpush1.msra.mxu0 0.0
        %1837 = vmatprep.subr.mxu0 0.0
        %1838 = vmatpush1.msra.mxu0 0.0
        %1839 = vmatprep.subr.mxu0 0.0
        %1840 = vmatpush1.msra.mxu0 0.0
        %1841 = vmatprep.subr.mxu0 0.0
        %1842 = vmatpush1.msra.mxu0 0.0
        %1843 = vmatprep.subr.mxu0 0.0
        %1844 = vmatpush1.msra.mxu0 0.0
        %1845 = vmatprep.subr.mxu0 0.0
        %1846 = vmatpush1.msra.mxu0 0.0
        %1847 = vmatprep.subr.mxu0 0.0
        %1848 = vmatpush1.msra.mxu0 0.0
        %1849 = vmatprep.subr.mxu0 0.0
        %1850 = vmatpush1.msra.mxu0 0.0
        %1851 = vmatprep.subr.mxu0 0.0
        %1852 = vmatpush1.msra.mxu0 0.0
        %1853 = vmatprep.subr.mxu0 0.0
        %1854 = vmatpush1.msra.mxu0 0.0
        %1855 = vmatprep.subr.mxu0 0.0
        %1856 = vmatpush1.msra.mxu0 0.0
        %1857 = vmatprep.subr.mxu0 0.0
        %1858 = vmatpush1.msra.mxu0 0.0
        %1859 = vmatprep.subr.mxu0 0.0
        %1860 = vmatpush1.msra.mxu0 0.0
        %1861 = vmatprep.subr.mxu0 0.0
        %1862 = vmatpush1.msra.mxu0 0.0
        %1863 = vmatprep.subr.mxu0 0.0
        %1864 = vmatpush1.msra.mxu0 0.0
        %1865 = vmatprep.subr.mxu0 0.0
        %1866 = vmatpush1.msra.mxu0 0.0
        %1867 = vmatprep.subr.mxu0 0.0
        %1868 = vmatpush1.msra.mxu0 0.0
        %1869 = vmatprep.subr.mxu0 0.0
        %1870 = vmatpush1.msra.mxu0 0.0
        %1871 = vmatprep.subr.mxu0 0.0
        %1872 = vmatpush1.msra.mxu0 0.0
        %1873 = vmatprep.subr.mxu0 0.0
        %1874 = vmatpush1.msra.mxu0 0.0
        %1875 = vmatprep.subr.mxu0 0.0
        %1876 = vmatpush1.msra.mxu0 0.0
        %1877 = vmatprep.subr.mxu0 0.0
        %1878 = vmatpush1.msra.mxu0 0.0
        %1879 = vmatprep.subr.mxu0 0.0
        %1880 = vmatpush1.msra.mxu0 0.0
        %1881 = vmatprep.subr.mxu0 0.0
        %1882 = vmatpush1.msra.mxu0 0.0
        %1883 = vmatprep.subr.mxu0 0.0
        %1884 = vmatpush1.msra.mxu0 0.0
        %1885 = vmatprep.subr.mxu0 0.0
        %1886 = vmatpush1.msra.mxu0 0.0
        %1887 = vmatprep.subr.mxu0 0.0
        %1888 = vmatpush1.msra.mxu0 0.0
        %1889 = vmatprep.mubr.f32.mxu0 0.0
        %1890 = vmatmul.mubr.f32.gmra.mrb[0].mxu0 %v1438
        %v1891 = vpop.f32.mrb[0].mxu0
        %v1892 = vadd.f32 %v1425, %v1891
        %v1893 = vpop.f32.mrb[0].mxu0
        %1894 = vdwg.mxu0
        %1895 = vxpose.xlu0.b32.start [1/16] %v1892, 128
        %1896 = vxpose.xlu0.b32.cont [2/16] 0.0, 128
        %1897 = vxpose.xlu0.b32.cont [3/16] 0.0, 128
        %1898 = vxpose.xlu0.b32.cont [4/16] 0.0, 128
        %1899 = vxpose.xlu0.b32.cont [5/16] 0.0, 128
        %1900 = vxpose.xlu0.b32.cont [6/16] 0.0, 128
        %1901 = vxpose.xlu0.b32.cont [7/16] 0.0, 128
        %1902 = vxpose.xlu0.b32.cont [8/16] 0.0, 128
        %1903 = vxpose.xlu0.b32.cont [9/16] 0.0, 128
        %1904 = vxpose.xlu0.b32.cont [10/16] 0.0, 128
        %1905 = vxpose.xlu0.b32.cont [11/16] 0.0, 128
        %1906 = vxpose.xlu0.b32.cont [12/16] 0.0, 128
        %1907 = vxpose.xlu0.b32.cont [13/16] 0.0, 128
        %1908 = vxpose.xlu0.b32.cont [14/16] 0.0, 128
        %1909 = vxpose.xlu0.b32.cont [15/16] 0.0, 128
        %1910 = vxpose.xlu0.b32.end [16/16] 0.0, 128
        %v1911 = vpop.trf.xlu0
        %v1912 = vpop.trf.xlu0
        %v1913 = vpop.trf.xlu0
        %v1914 = vpop.trf.xlu0
        %v1915 = vpop.trf.xlu0
        %v1916 = vpop.trf.xlu0
        %v1917 = vpop.trf.xlu0
        %v1918 = vpop.trf.xlu0
        %v1919 = vpop.trf.xlu0
        %v1920 = vpop.trf.xlu0
        %v1921 = vpop.trf.xlu0
        %v1922 = vpop.trf.xlu0
        %v1923 = vpop.trf.xlu0
        %v1924 = vpop.trf.xlu0
        %v1925 = vpop.trf.xlu0
        %v1926 = vpop.trf.xlu0
        %1928 = vset.pattern.permute.xlu0 0
        %1929 = vperm.xlu0 %1928, %v1911
        %v1930 = vpop.permute.xlu0 %1929
        %v1932 = vlaneseq
        %v1933 = vshrl.u32 %v1932, 7
        %v1934 = vsub.s32 1, %v1933
        %v1935 = vrot.slane %v1892, %v1934
        %v1936 = vsub.f32 %v1930, %v1935
        %v1937 = vtanh.pop %v1936
        %v1938 = vmul.f32 %v1553, %v1937
        %v1939 = vadd.f32 %v1434, %v1938
        %v1940 = vand.u32 2147483647, %v1939
        %v1942 = vsel %vm1557, %v1940, 0
        %1944 = vmatprep.subr.mxu0 0.0
        %1945 = vmatpush1.msra.mxu0 %v1435
        %1946 = vmatprep.subr.mxu0 0.0
        %1947 = vmatpush1.msra.mxu0 0.0
        %1948 = vmatprep.subr.mxu0 0.0
        %1949 = vmatpush1.msra.mxu0 0.0
        %1950 = vmatprep.subr.mxu0 0.0
        %1951 = vmatpush1.msra.mxu0 0.0
        %1952 = vmatprep.subr.mxu0 0.0
        %1953 = vmatpush1.msra.mxu0 0.0
        %1954 = vmatprep.subr.mxu0 0.0
        %1955 = vmatpush1.msra.mxu0 0.0
        %1956 = vmatprep.subr.mxu0 0.0
        %1957 = vmatpush1.msra.mxu0 0.0
        %1958 = vmatprep.subr.mxu0 0.0
        %1959 = vmatpush1.msra.mxu0 0.0
        %1960 = vmatprep.subr.mxu0 0.0
        %1961 = vmatpush1.msra.mxu0 0.0
        %1962 = vmatprep.subr.mxu0 0.0
        %1963 = vmatpush1.msra.mxu0 0.0
        %1964 = vmatprep.subr.mxu0 0.0
        %1965 = vmatpush1.msra.mxu0 0.0
        %1966 = vmatprep.subr.mxu0 0.0
        %1967 = vmatpush1.msra.mxu0 0.0
        %1968 = vmatprep.subr.mxu0 0.0
        %1969 = vmatpush1.msra.mxu0 0.0
        %1970 = vmatprep.subr.mxu0 0.0
        %1971 = vmatpush1.msra.mxu0 0.0
        %1972 = vmatprep.subr.mxu0 0.0
        %1973 = vmatpush1.msra.mxu0 0.0
        %1974 = vmatprep.subr.mxu0 0.0
        %1975 = vmatpush1.msra.mxu0 0.0
        %1976 = vmatprep.subr.mxu0 0.0
        %1977 = vmatpush1.msra.mxu0 0.0
        %1978 = vmatprep.subr.mxu0 0.0
        %1979 = vmatpush1.msra.mxu0 0.0
        %1980 = vmatprep.subr.mxu0 0.0
        %1981 = vmatpush1.msra.mxu0 0.0
        %1982 = vmatprep.subr.mxu0 0.0
        %1983 = vmatpush1.msra.mxu0 0.0
        %1984 = vmatprep.subr.mxu0 0.0
        %1985 = vmatpush1.msra.mxu0 0.0
        %1986 = vmatprep.subr.mxu0 0.0
        %1987 = vmatpush1.msra.mxu0 0.0
        %1988 = vmatprep.subr.mxu0 0.0
        %1989 = vmatpush1.msra.mxu0 0.0
        %1990 = vmatprep.subr.mxu0 0.0
        %1991 = vmatpush1.msra.mxu0 0.0
        %1992 = vmatprep.subr.mxu0 0.0
        %1993 = vmatpush1.msra.mxu0 0.0
        %1994 = vmatprep.subr.mxu0 0.0
        %1995 = vmatpush1.msra.mxu0 0.0
        %1996 = vmatprep.subr.mxu0 0.0
        %1997 = vmatpush1.msra.mxu0 0.0
        %1998 = vmatprep.subr.mxu0 0.0
        %1999 = vmatpush1.msra.mxu0 0.0
        %2000 = vmatprep.subr.mxu0 0.0
        %2001 = vmatpush1.msra.mxu0 0.0
        %2002 = vmatprep.subr.mxu0 0.0
        %2003 = vmatpush1.msra.mxu0 0.0
        %2004 = vmatprep.subr.mxu0 0.0
        %2005 = vmatpush1.msra.mxu0 0.0
        %2006 = vmatprep.subr.mxu0 0.0
        %2007 = vmatpush1.msra.mxu0 0.0
        %2008 = vmatprep.mubr.f32.mxu0 0.0
        %2009 = vmatmul.mubr.f32.gmra.mrb[0].mxu0 %v1942
        %v2010 = vpop.f32.mrb[0].mxu0
        %v2011 = vadd.f32 0.0, %v2010
        %v2012 = vpop.f32.mrb[0].mxu0
        %2013 = vdwg.mxu0
        %2014 = vmatprep.subr.mxu0 0.0
        %2015 = vmatpush1.msra.mxu0 %v1285
        %2016 = vmatprep.subr.mxu0 0.0
        %2017 = vmatpush1.msra.mxu0 %v1290
        %2018 = vmatprep.subr.mxu0 0.0
        %2019 = vmatpush1.msra.mxu0 %v1295
        %2020 = vmatprep.subr.mxu0 0.0
        %2021 = vmatpush1.msra.mxu0 %v1300
        %2022 = vmatprep.subr.mxu0 0.0
        %2023 = vmatpush1.msra.mxu0 0.0
        %2024 = vmatprep.subr.mxu0 0.0
        %2025 = vmatpush1.msra.mxu0 0.0
        %2026 = vmatprep.subr.mxu0 0.0
        %2027 = vmatpush1.msra.mxu0 0.0
        %2028 = vmatprep.subr.mxu0 0.0
        %2029 = vmatpush1.msra.mxu0 0.0
        %2030 = vmatprep.subr.mxu0 0.0
        %2031 = vmatpush1.msra.mxu0 0.0
        %2032 = vmatprep.subr.mxu0 0.0
        %2033 = vmatpush1.msra.mxu0 0.0
        %2034 = vmatprep.subr.mxu0 0.0
        %2035 = vmatpush1.msra.mxu0 0.0
        %2036 = vmatprep.subr.mxu0 0.0
        %2037 = vmatpush1.msra.mxu0 0.0
        %2038 = vmatprep.subr.mxu0 0.0
        %2039 = vmatpush1.msra.mxu0 0.0
        %2040 = vmatprep.subr.mxu0 0.0
        %2041 = vmatpush1.msra.mxu0 0.0
        %2042 = vmatprep.subr.mxu0 0.0
        %2043 = vmatpush1.msra.mxu0 0.0
        %2044 = vmatprep.subr.mxu0 0.0
        %2045 = vmatpush1.msra.mxu0 0.0
        %2046 = vmatprep.subr.mxu0 0.0
        %2047 = vmatpush1.msra.mxu0 0.0
        %2048 = vmatprep.subr.mxu0 0.0
        %2049 = vmatpush1.msra.mxu0 0.0
        %2050 = vmatprep.subr.mxu0 0.0
        %2051 = vmatpush1.msra.mxu0 0.0
        %2052 = vmatprep.subr.mxu0 0.0
        %2053 = vmatpush1.msra.mxu0 0.0
        %2054 = vmatprep.subr.mxu0 0.0
        %2055 = vmatpush1.msra.mxu0 0.0
        %2056 = vmatprep.subr.mxu0 0.0
        %2057 = vmatpush1.msra.mxu0 0.0
        %2058 = vmatprep.subr.mxu0 0.0
        %2059 = vmatpush1.msra.mxu0 0.0
        %2060 = vmatprep.subr.mxu0 0.0
        %2061 = vmatpush1.msra.mxu0 0.0
        %2062 = vmatprep.subr.mxu0 0.0
        %2063 = vmatpush1.msra.mxu0 0.0
        %2064 = vmatprep.subr.mxu0 0.0
        %2065 = vmatpush1.msra.mxu0 0.0
        %2066 = vmatprep.subr.mxu0 0.0
        %2067 = vmatpush1.msra.mxu0 0.0
        %2068 = vmatprep.subr.mxu0 0.0
        %2069 = vmatpush1.msra.mxu0 0.0
        %2070 = vmatprep.subr.mxu0 0.0
        %2071 = vmatpush1.msra.mxu0 0.0
        %2072 = vmatprep.subr.mxu0 0.0
        %2073 = vmatpush1.msra.mxu0 0.0
        %2074 = vmatprep.subr.mxu0 0.0
        %2075 = vmatpush1.msra.mxu0 0.0
        %2076 = vmatprep.subr.mxu0 0.0
        %2077 = vmatpush1.msra.mxu0 0.0
        %2078 = vmatprep.mubr.f32.mxu0 0.0
        %2079 = vmatmul.mubr.f32.gmra.mrb[0].mxu0 %v1632
        %v2080 = vpop.f32.mrb[0].mxu0
        %v2081 = vadd.f32 %v1430, %v2080
        %v2082 = vpop.f32.mrb[0].mxu0
        %2083 = vmatprep.mubr.f32.mxu0 0.0
        %2084 = vmatmul.mubr.f32.gmra.mrb[0].mxu0 %v1635
        %v2085 = vpop.f32.mrb[0].mxu0
        %v2086 = vadd.f32 %v1431, %v2085
        %v2087 = vpop.f32.mrb[0].mxu0
        %2088 = vmatprep.mubr.f32.mxu0 0.0
        %2089 = vmatmul.mubr.f32.gmra.mrb[0].mxu0 %v1638
        %v2090 = vpop.f32.mrb[0].mxu0
        %v2091 = vadd.f32 %v1432, %v2090
        %v2092 = vpop.f32.mrb[0].mxu0
        %2093 = vmatprep.mubr.f32.mxu0 0.0
        %2094 = vmatmul.mubr.f32.gmra.mrb[0].mxu0 %v1641
        %v2095 = vpop.f32.mrb[0].mxu0
        %v2096 = vadd.f32 %v1433, %v2095
        %v2097 = vpop.f32.mrb[0].mxu0
        %2098 = vdwg.mxu0
        %v2100 = vsel %vm1557, %v2081, 0
        %v2103 = vsel %vm1557, %v2086, 0
        %v2106 = vsel %vm1557, %v2091, 0
        %v2109 = vsel %vm1557, %v2096, 0
        %2111 = vmatprep.subr.mxu0 0.0
        %2112 = vmatpush1.msra.mxu0 %v2011
        %2113 = vmatprep.subr.mxu0 0.0
        %2114 = vmatpush1.msra.mxu0 0.0
        %2115 = vmatprep.subr.mxu0 0.0
        %2116 = vmatpush1.msra.mxu0 0.0
        %2117 = vmatprep.subr.mxu0 0.0
        %2118 = vmatpush1.msra.mxu0 0.0
        %2119 = vmatprep.subr.mxu0 0.0
        %2120 = vmatpush1.msra.mxu0 0.0
        %2121 = vmatprep.subr.mxu0 0.0
        %2122 = vmatpush1.msra.mxu0 0.0
        %2123 = vmatprep.subr.mxu0 0.0
        %2124 = vmatpush1.msra.mxu0 0.0
        %2125 = vmatprep.subr.mxu0 0.0
        %2126 = vmatpush1.msra.mxu0 0.0
        %2127 = vmatprep.subr.mxu0 0.0
        %2128 = vmatpush1.msra.mxu0 0.0
        %2129 = vmatprep.subr.mxu0 0.0
        %2130 = vmatpush1.msra.mxu0 0.0
        %2131 = vmatprep.subr.mxu0 0.0
        %2132 = vmatpush1.msra.mxu0 0.0
        %2133 = vmatprep.subr.mxu0 0.0
        %2134 = vmatpush1.msra.mxu0 0.0
        %2135 = vmatprep.subr.mxu0 0.0
        %2136 = vmatpush1.msra.mxu0 0.0
        %2137 = vmatprep.subr.mxu0 0.0
        %2138 = vmatpush1.msra.mxu0 0.0
        %2139 = vmatprep.subr.mxu0 0.0
        %2140 = vmatpush1.msra.mxu0 0.0
        %2141 = vmatprep.subr.mxu0 0.0
        %2142 = vmatpush1.msra.mxu0 0.0
        %2143 = vmatprep.subr.mxu0 0.0
        %2144 = vmatpush1.msra.mxu0 0.0
        %2145 = vmatprep.subr.mxu0 0.0
        %2146 = vmatpush1.msra.mxu0 0.0
        %2147 = vmatprep.subr.mxu0 0.0
        %2148 = vmatpush1.msra.mxu0 0.0
        %2149 = vmatprep.subr.mxu0 0.0
        %2150 = vmatpush1.msra.mxu0 0.0
        %2151 = vmatprep.subr.mxu0 0.0
        %2152 = vmatpush1.msra.mxu0 0.0
        %2153 = vmatprep.subr.mxu0 0.0
        %2154 = vmatpush1.msra.mxu0 0.0
        %2155 = vmatprep.subr.mxu0 0.0
        %2156 = vmatpush1.msra.mxu0 0.0
        %2157 = vmatprep.subr.mxu0 0.0
        %2158 = vmatpush1.msra.mxu0 0.0
        %2159 = vmatprep.subr.mxu0 0.0
        %2160 = vmatpush1.msra.mxu0 0.0
        %2161 = vmatprep.subr.mxu0 0.0
        %2162 = vmatpush1.msra.mxu0 0.0
        %2163 = vmatprep.subr.mxu0 0.0
        %2164 = vmatpush1.msra.mxu0 0.0
        %2165 = vmatprep.subr.mxu0 0.0
        %2166 = vmatpush1.msra.mxu0 0.0
        %2167 = vmatprep.subr.mxu0 0.0
        %2168 = vmatpush1.msra.mxu0 0.0
        %2169 = vmatprep.subr.mxu0 0.0
        %2170 = vmatpush1.msra.mxu0 0.0
        %2171 = vmatprep.subr.mxu0 0.0
        %2172 = vmatpush1.msra.mxu0 0.0
        %2173 = vmatprep.subr.mxu0 0.0
        %2174 = vmatpush1.msra.mxu0 0.0
        %2175 = vmatprep.mubr.f32.mxu0 0.0
        %2176 = vmatmul.mubr.f32.gmra.mrb[0].mxu0 %v2100
        %v2177 = vpop.f32.mrb[0].mxu0
        %v2178 = vadd.f32 0.0, %v2177
        %v2179 = vpop.f32.mrb[0].mxu0
        %2180 = vmatprep.mubr.f32.mxu0 0.0
        %2181 = vmatmul.mubr.f32.gmra.mrb[0].mxu0 %v2103
        %v2182 = vpop.f32.mrb[0].mxu0
        %v2183 = vadd.f32 0.0, %v2182
        %v2184 = vpop.f32.mrb[0].mxu0
        %2185 = vmatprep.mubr.f32.mxu0 0.0
        %2186 = vmatmul.mubr.f32.gmra.mrb[0].mxu0 %v2106
        %v2187 = vpop.f32.mrb[0].mxu0
        %v2188 = vadd.f32 0.0, %v2187
        %v2189 = vpop.f32.mrb[0].mxu0
        %2190 = vmatprep.mubr.f32.mxu0 0.0
        %2191 = vmatmul.mubr.f32.gmra.mrb[0].mxu0 %v2109
        %v2192 = vpop.f32.mrb[0].mxu0
        %v2193 = vadd.f32 0.0, %v2192
        %v2194 = vpop.f32.mrb[0].mxu0
        %2195 = vdwg.mxu0
        %2196 = vmatprep.subr.mxu0 0.0
        %2197 = vmatpush1.msra.mxu0 %v1305
        %2198 = vmatprep.subr.mxu0 0.0
        %2199 = vmatpush1.msra.mxu0 %v1310
        %2200 = vmatprep.subr.mxu0 0.0
        %2201 = vmatpush1.msra.mxu0 %v1315
        %2202 = vmatprep.subr.mxu0 0.0
        %2203 = vmatpush1.msra.mxu0 %v1320
        %2204 = vmatprep.subr.mxu0 0.0
        %2205 = vmatpush1.msra.mxu0 0.0
        %2206 = vmatprep.subr.mxu0 0.0
        %2207 = vmatpush1.msra.mxu0 0.0
        %2208 = vmatprep.subr.mxu0 0.0
        %2209 = vmatpush1.msra.mxu0 0.0
        %2210 = vmatprep.subr.mxu0 0.0
        %2211 = vmatpush1.msra.mxu0 0.0
        %2212 = vmatprep.subr.mxu0 0.0
        %2213 = vmatpush1.msra.mxu0 0.0
        %2214 = vmatprep.subr.mxu0 0.0
        %2215 = vmatpush1.msra.mxu0 0.0
        %2216 = vmatprep.subr.mxu0 0.0
        %2217 = vmatpush1.msra.mxu0 0.0
        %2218 = vmatprep.subr.mxu0 0.0
        %2219 = vmatpush1.msra.mxu0 0.0
        %2220 = vmatprep.subr.mxu0 0.0
        %2221 = vmatpush1.msra.mxu0 0.0
        %2222 = vmatprep.subr.mxu0 0.0
        %2223 = vmatpush1.msra.mxu0 0.0
        %2224 = vmatprep.subr.mxu0 0.0
        %2225 = vmatpush1.msra.mxu0 0.0
        %2226 = vmatprep.subr.mxu0 0.0
        %2227 = vmatpush1.msra.mxu0 0.0
        %2228 = vmatprep.subr.mxu0 0.0
        %2229 = vmatpush1.msra.mxu0 0.0
        %2230 = vmatprep.subr.mxu0 0.0
        %2231 = vmatpush1.msra.mxu0 0.0
        %2232 = vmatprep.subr.mxu0 0.0
        %2233 = vmatpush1.msra.mxu0 0.0
        %2234 = vmatprep.subr.mxu0 0.0
        %2235 = vmatpush1.msra.mxu0 0.0
        %2236 = vmatprep.subr.mxu0 0.0
        %2237 = vmatpush1.msra.mxu0 0.0
        %2238 = vmatprep.subr.mxu0 0.0
        %2239 = vmatpush1.msra.mxu0 0.0
        %2240 = vmatprep.subr.mxu0 0.0
        %2241 = vmatpush1.msra.mxu0 0.0
        %2242 = vmatprep.subr.mxu0 0.0
        %2243 = vmatpush1.msra.mxu0 0.0
        %2244 = vmatprep.subr.mxu0 0.0
        %2245 = vmatpush1.msra.mxu0 0.0
        %2246 = vmatprep.subr.mxu0 0.0
        %2247 = vmatpush1.msra.mxu0 0.0
        %2248 = vmatprep.subr.mxu0 0.0
        %2249 = vmatpush1.msra.mxu0 0.0
        %2250 = vmatprep.subr.mxu0 0.0
        %2251 = vmatpush1.msra.mxu0 0.0
        %2252 = vmatprep.subr.mxu0 0.0
        %2253 = vmatpush1.msra.mxu0 0.0
        %2254 = vmatprep.subr.mxu0 0.0
        %2255 = vmatpush1.msra.mxu0 0.0
        %2256 = vmatprep.subr.mxu0 0.0
        %2257 = vmatpush1.msra.mxu0 0.0
        %2258 = vmatprep.subr.mxu0 0.0
        %2259 = vmatpush1.msra.mxu0 0.0
        %2260 = vmatprep.mubr.f32.mxu0 0.0
        %2261 = vmatmul.mubr.f32.gmra.mrb[0].mxu0 %v1438
        %v2262 = vpop.f32.mrb[0].mxu0
        %v2263 = vadd.f32 %v1425, %v2262
        %v2264 = vpop.f32.mrb[0].mxu0
        %2265 = vdwg.mxu0
        %2266 = vxpose.xlu0.b32.start [1/16] %v2263, 128
        %2267 = vxpose.xlu0.b32.cont [2/16] 0.0, 128
        %2268 = vxpose.xlu0.b32.cont [3/16] 0.0, 128
        %2269 = vxpose.xlu0.b32.cont [4/16] 0.0, 128
        %2270 = vxpose.xlu0.b32.cont [5/16] 0.0, 128
        %2271 = vxpose.xlu0.b32.cont [6/16] 0.0, 128
        %2272 = vxpose.xlu0.b32.cont [7/16] 0.0, 128
        %2273 = vxpose.xlu0.b32.cont [8/16] 0.0, 128
        %2274 = vxpose.xlu0.b32.cont [9/16] 0.0, 128
        %2275 = vxpose.xlu0.b32.cont [10/16] 0.0, 128
        %2276 = vxpose.xlu0.b32.cont [11/16] 0.0, 128
        %2277 = vxpose.xlu0.b32.cont [12/16] 0.0, 128
        %2278 = vxpose.xlu0.b32.cont [13/16] 0.0, 128
        %2279 = vxpose.xlu0.b32.cont [14/16] 0.0, 128
        %2280 = vxpose.xlu0.b32.cont [15/16] 0.0, 128
        %2281 = vxpose.xlu0.b32.end [16/16] 0.0, 128
        %v2282 = vpop.trf.xlu0
        %v2283 = vpop.trf.xlu0
        %v2284 = vpop.trf.xlu0
        %v2285 = vpop.trf.xlu0
        %v2286 = vpop.trf.xlu0
        %v2287 = vpop.trf.xlu0
        %v2288 = vpop.trf.xlu0
        %v2289 = vpop.trf.xlu0
        %v2290 = vpop.trf.xlu0
        %v2291 = vpop.trf.xlu0
        %v2292 = vpop.trf.xlu0
        %v2293 = vpop.trf.xlu0
        %v2294 = vpop.trf.xlu0
        %v2295 = vpop.trf.xlu0
        %v2296 = vpop.trf.xlu0
        %v2297 = vpop.trf.xlu0
        %2299 = vset.pattern.permute.xlu0 0
        %2300 = vperm.xlu0 %2299, %v2282
        %v2301 = vpop.permute.xlu0 %2300
        %v2303 = vlaneseq
        %v2304 = vshrl.u32 %v2303, 7
        %v2305 = vsub.s32 1, %v2304
        %v2306 = vrot.slane %v2263, %v2305
        %v2307 = vsub.f32 %v2301, %v2306
        %v2308 = vtanh.pop %v2307
        %v2309 = vmul.f32 %v1553, %v2308
        %v2310 = vadd.f32 %v1434, %v2309
        %v2311 = vand.u32 2147483647, %v2310
        %v2313 = vsel %vm1557, %v2311, 0
        %2315 = vmatprep.subr.mxu0 0.0
        %2316 = vmatpush1.msra.mxu0 %v1435
        %2317 = vmatprep.subr.mxu0 0.0
        %2318 = vmatpush1.msra.mxu0 0.0
        %2319 = vmatprep.subr.mxu0 0.0
        %2320 = vmatpush1.msra.mxu0 0.0
        %2321 = vmatprep.subr.mxu0 0.0
        %2322 = vmatpush1.msra.mxu0 0.0
        %2323 = vmatprep.subr.mxu0 0.0
        %2324 = vmatpush1.msra.mxu0 0.0
        %2325 = vmatprep.subr.mxu0 0.0
        %2326 = vmatpush1.msra.mxu0 0.0
        %2327 = vmatprep.subr.mxu0 0.0
        %2328 = vmatpush1.msra.mxu0 0.0
        %2329 = vmatprep.subr.mxu0 0.0
        %2330 = vmatpush1.msra.mxu0 0.0
        %2331 = vmatprep.subr.mxu0 0.0
        %2332 = vmatpush1.msra.mxu0 0.0
        %2333 = vmatprep.subr.mxu0 0.0
        %2334 = vmatpush1.msra.mxu0 0.0
        %2335 = vmatprep.subr.mxu0 0.0
        %2336 = vmatpush1.msra.mxu0 0.0
        %2337 = vmatprep.subr.mxu0 0.0
        %2338 = vmatpush1.msra.mxu0 0.0
        %2339 = vmatprep.subr.mxu0 0.0
        %2340 = vmatpush1.msra.mxu0 0.0
        %2341 = vmatprep.subr.mxu0 0.0
        %2342 = vmatpush1.msra.mxu0 0.0
        %2343 = vmatprep.subr.mxu0 0.0
        %2344 = vmatpush1.msra.mxu0 0.0
        %2345 = vmatprep.subr.mxu0 0.0
        %2346 = vmatpush1.msra.mxu0 0.0
        %2347 = vmatprep.subr.mxu0 0.0
        %2348 = vmatpush1.msra.mxu0 0.0
        %2349 = vmatprep.subr.mxu0 0.0
        %2350 = vmatpush1.msra.mxu0 0.0
        %2351 = vmatprep.subr.mxu0 0.0
        %2352 = vmatpush1.msra.mxu0 0.0
        %2353 = vmatprep.subr.mxu0 0.0
        %2354 = vmatpush1.msra.mxu0 0.0
        %2355 = vmatprep.subr.mxu0 0.0
        %2356 = vmatpush1.msra.mxu0 0.0
        %2357 = vmatprep.subr.mxu0 0.0
        %2358 = vmatpush1.msra.mxu0 0.0
        %2359 = vmatprep.subr.mxu0 0.0
        %2360 = vmatpush1.msra.mxu0 0.0
        %2361 = vmatprep.subr.mxu0 0.0
        %2362 = vmatpush1.msra.mxu0 0.0
        %2363 = vmatprep.subr.mxu0 0.0
        %2364 = vmatpush1.msra.mxu0 0.0
        %2365 = vmatprep.subr.mxu0 0.0
        %2366 = vmatpush1.msra.mxu0 0.0
        %2367 = vmatprep.subr.mxu0 0.0
        %2368 = vmatpush1.msra.mxu0 0.0
        %2369 = vmatprep.subr.mxu0 0.0
        %2370 = vmatpush1.msra.mxu0 0.0
        %2371 = vmatprep.subr.mxu0 0.0
        %2372 = vmatpush1.msra.mxu0 0.0
        %2373 = vmatprep.subr.mxu0 0.0
        %2374 = vmatpush1.msra.mxu0 0.0
        %2375 = vmatprep.subr.mxu0 0.0
        %2376 = vmatpush1.msra.mxu0 0.0
        %2377 = vmatprep.subr.mxu0 0.0
        %2378 = vmatpush1.msra.mxu0 0.0
        %2379 = vmatprep.mubr.f32.mxu0 0.0
        %2380 = vmatmul.mubr.f32.gmra.mrb[0].mxu0 %v2313
        %v2381 = vpop.f32.mrb[0].mxu0
        %v2382 = vadd.f32 0.0, %v2381
        %v2383 = vpop.f32.mrb[0].mxu0
        %2384 = vdwg.mxu0
        %2385 = vmatprep.subr.mxu0 0.0
        %2386 = vmatpush1.msra.mxu0 %v1305
        %2387 = vmatprep.subr.mxu0 0.0
        %2388 = vmatpush1.msra.mxu0 %v1310
        %2389 = vmatprep.subr.mxu0 0.0
        %2390 = vmatpush1.msra.mxu0 %v1315
        %2391 = vmatprep.subr.mxu0 0.0
        %2392 = vmatpush1.msra.mxu0 %v1320
        %2393 = vmatprep.subr.mxu0 0.0
        %2394 = vmatpush1.msra.mxu0 0.0
        %2395 = vmatprep.subr.mxu0 0.0
        %2396 = vmatpush1.msra.mxu0 0.0
        %2397 = vmatprep.subr.mxu0 0.0
        %2398 = vmatpush1.msra.mxu0 0.0
        %2399 = vmatprep.subr.mxu0 0.0
        %2400 = vmatpush1.msra.mxu0 0.0
        %2401 = vmatprep.subr.mxu0 0.0
        %2402 = vmatpush1.msra.mxu0 0.0
        %2403 = vmatprep.subr.mxu0 0.0
        %2404 = vmatpush1.msra.mxu0 0.0
        %2405 = vmatprep.subr.mxu0 0.0
        %2406 = vmatpush1.msra.mxu0 0.0
        %2407 = vmatprep.subr.mxu0 0.0
        %2408 = vmatpush1.msra.mxu0 0.0
        %2409 = vmatprep.subr.mxu0 0.0
        %2410 = vmatpush1.msra.mxu0 0.0
        %2411 = vmatprep.subr.mxu0 0.0
        %2412 = vmatpush1.msra.mxu0 0.0
        %2413 = vmatprep.subr.mxu0 0.0
        %2414 = vmatpush1.msra.mxu0 0.0
        %2415 = vmatprep.subr.mxu0 0.0
        %2416 = vmatpush1.msra.mxu0 0.0
        %2417 = vmatprep.subr.mxu0 0.0
        %2418 = vmatpush1.msra.mxu0 0.0
        %2419 = vmatprep.subr.mxu0 0.0
        %2420 = vmatpush1.msra.mxu0 0.0
        %2421 = vmatprep.subr.mxu0 0.0
        %2422 = vmatpush1.msra.mxu0 0.0
        %2423 = vmatprep.subr.mxu0 0.0
        %2424 = vmatpush1.msra.mxu0 0.0
        %2425 = vmatprep.subr.mxu0 0.0
        %2426 = vmatpush1.msra.mxu0 0.0
        %2427 = vmatprep.subr.mxu0 0.0
        %2428 = vmatpush1.msra.mxu0 0.0
        %2429 = vmatprep.subr.mxu0 0.0
        %2430 = vmatpush1.msra.mxu0 0.0
        %2431 = vmatprep.subr.mxu0 0.0
        %2432 = vmatpush1.msra.mxu0 0.0
        %2433 = vmatprep.subr.mxu0 0.0
        %2434 = vmatpush1.msra.mxu0 0.0
        %2435 = vmatprep.subr.mxu0 0.0
        %2436 = vmatpush1.msra.mxu0 0.0
        %2437 = vmatprep.subr.mxu0 0.0
        %2438 = vmatpush1.msra.mxu0 0.0
        %2439 = vmatprep.subr.mxu0 0.0
        %2440 = vmatpush1.msra.mxu0 0.0
        %2441 = vmatprep.subr.mxu0 0.0
        %2442 = vmatpush1.msra.mxu0 0.0
        %2443 = vmatprep.subr.mxu0 0.0
        %2444 = vmatpush1.msra.mxu0 0.0
        %2445 = vmatprep.subr.mxu0 0.0
        %2446 = vmatpush1.msra.mxu0 0.0
        %2447 = vmatprep.subr.mxu0 0.0
        %2448 = vmatpush1.msra.mxu0 0.0
        %2449 = vmatprep.mubr.f32.mxu0 0.0
        %2450 = vmatmul.mubr.f32.gmra.mrb[0].mxu0 %v1632
        %v2451 = vpop.f32.mrb[0].mxu0
        %v2452 = vadd.f32 %v1430, %v2451
        %v2453 = vpop.f32.mrb[0].mxu0
        %2454 = vmatprep.mubr.f32.mxu0 0.0
        %2455 = vmatmul.mubr.f32.gmra.mrb[0].mxu0 %v1635
        %v2456 = vpop.f32.mrb[0].mxu0
        %v2457 = vadd.f32 %v1431, %v2456
        %v2458 = vpop.f32.mrb[0].mxu0
        %2459 = vmatprep.mubr.f32.mxu0 0.0
        %2460 = vmatmul.mubr.f32.gmra.mrb[0].mxu0 %v1638
        %v2461 = vpop.f32.mrb[0].mxu0
        %v2462 = vadd.f32 %v1432, %v2461
        %v2463 = vpop.f32.mrb[0].mxu0
        %2464 = vmatprep.mubr.f32.mxu0 0.0
        %2465 = vmatmul.mubr.f32.gmra.mrb[0].mxu0 %v1641
        %v2466 = vpop.f32.mrb[0].mxu0
        %v2467 = vadd.f32 %v1433, %v2466
        %v2468 = vpop.f32.mrb[0].mxu0
        %2469 = vdwg.mxu0
        %v2471 = vsel %vm1557, %v2452, 0
        %v2474 = vsel %vm1557, %v2457, 0
        %v2477 = vsel %vm1557, %v2462, 0
        %v2480 = vsel %vm1557, %v2467, 0
        %2482 = vmatprep.subr.mxu0 0.0
        %2483 = vmatpush1.msra.mxu0 %v2382
        %2484 = vmatprep.subr.mxu0 0.0
        %2485 = vmatpush1.msra.mxu0 0.0
        %2486 = vmatprep.subr.mxu0 0.0
        %2487 = vmatpush1.msra.mxu0 0.0
        %2488 = vmatprep.subr.mxu0 0.0
        %2489 = vmatpush1.msra.mxu0 0.0
        %2490 = vmatprep.subr.mxu0 0.0
        %2491 = vmatpush1.msra.mxu0 0.0
        %2492 = vmatprep.subr.mxu0 0.0
        %2493 = vmatpush1.msra.mxu0 0.0
        %2494 = vmatprep.subr.mxu0 0.0
        %2495 = vmatpush1.msra.mxu0 0.0
        %2496 = vmatprep.subr.mxu0 0.0
        %2497 = vmatpush1.msra.mxu0 0.0
        %2498 = vmatprep.subr.mxu0 0.0
        %2499 = vmatpush1.msra.mxu0 0.0
        %2500 = vmatprep.subr.mxu0 0.0
        %2501 = vmatpush1.msra.mxu0 0.0
        %2502 = vmatprep.subr.mxu0 0.0
        %2503 = vmatpush1.msra.mxu0 0.0
        %2504 = vmatprep.subr.mxu0 0.0
        %2505 = vmatpush1.msra.mxu0 0.0
        %2506 = vmatprep.subr.mxu0 0.0
        %2507 = vmatpush1.msra.mxu0 0.0
        %2508 = vmatprep.subr.mxu0 0.0
        %2509 = vmatpush1.msra.mxu0 0.0
        %2510 = vmatprep.subr.mxu0 0.0
        %2511 = vmatpush1.msra.mxu0 0.0
        %2512 = vmatprep.subr.mxu0 0.0
        %2513 = vmatpush1.msra.mxu0 0.0
        %2514 = vmatprep.subr.mxu0 0.0
        %2515 = vmatpush1.msra.mxu0 0.0
        %2516 = vmatprep.subr.mxu0 0.0
        %2517 = vmatpush1.msra.mxu0 0.0
        %2518 = vmatprep.subr.mxu0 0.0
        %2519 = vmatpush1.msra.mxu0 0.0
        %2520 = vmatprep.subr.mxu0 0.0
        %2521 = vmatpush1.msra.mxu0 0.0
        %2522 = vmatprep.subr.mxu0 0.0
        %2523 = vmatpush1.msra.mxu0 0.0
        %2524 = vmatprep.subr.mxu0 0.0
        %2525 = vmatpush1.msra.mxu0 0.0
        %2526 = vmatprep.subr.mxu0 0.0
        %2527 = vmatpush1.msra.mxu0 0.0
        %2528 = vmatprep.subr.mxu0 0.0
        %2529 = vmatpush1.msra.mxu0 0.0
        %2530 = vmatprep.subr.mxu0 0.0
        %2531 = vmatpush1.msra.mxu0 0.0
        %2532 = vmatprep.subr.mxu0 0.0
        %2533 = vmatpush1.msra.mxu0 0.0
        %2534 = vmatprep.subr.mxu0 0.0
        %2535 = vmatpush1.msra.mxu0 0.0
        %2536 = vmatprep.subr.mxu0 0.0
        %2537 = vmatpush1.msra.mxu0 0.0
        %2538 = vmatprep.subr.mxu0 0.0
        %2539 = vmatpush1.msra.mxu0 0.0
        %2540 = vmatprep.subr.mxu0 0.0
        %2541 = vmatpush1.msra.mxu0 0.0
        %2542 = vmatprep.subr.mxu0 0.0
        %2543 = vmatpush1.msra.mxu0 0.0
        %2544 = vmatprep.subr.mxu0 0.0
        %2545 = vmatpush1.msra.mxu0 0.0
        %2546 = vmatprep.mubr.f32.mxu0 0.0
        %2547 = vmatmul.mubr.f32.gmra.mrb[0].mxu0 %v2471
        %v2548 = vpop.f32.mrb[0].mxu0
        %v2549 = vadd.f32 0.0, %v2548
        %v2550 = vpop.f32.mrb[0].mxu0
        %2551 = vmatprep.mubr.f32.mxu0 0.0
        %2552 = vmatmul.mubr.f32.gmra.mrb[0].mxu0 %v2474
        %v2553 = vpop.f32.mrb[0].mxu0
        %v2554 = vadd.f32 0.0, %v2553
        %v2555 = vpop.f32.mrb[0].mxu0
        %2556 = vmatprep.mubr.f32.mxu0 0.0
        %2557 = vmatmul.mubr.f32.gmra.mrb[0].mxu0 %v2477
        %v2558 = vpop.f32.mrb[0].mxu0
        %v2559 = vadd.f32 0.0, %v2558
        %v2560 = vpop.f32.mrb[0].mxu0
        %2561 = vmatprep.mubr.f32.mxu0 0.0
        %2562 = vmatmul.mubr.f32.gmra.mrb[0].mxu0 %v2480
        %v2563 = vpop.f32.mrb[0].mxu0
        %v2564 = vadd.f32 0.0, %v2563
        %v2565 = vpop.f32.mrb[0].mxu0
        %2566 = vdwg.mxu0
        %2567 = vmatprep.subr.mxu0 0.0
        %2568 = vmatpush1.msra.mxu0 %v1325
        %2569 = vmatprep.subr.mxu0 0.0
        %2570 = vmatpush1.msra.mxu0 %v1330
        %2571 = vmatprep.subr.mxu0 0.0
        %2572 = vmatpush1.msra.mxu0 %v1335
        %2573 = vmatprep.subr.mxu0 0.0
        %2574 = vmatpush1.msra.mxu0 %v1340
        %2575 = vmatprep.subr.mxu0 0.0
        %2576 = vmatpush1.msra.mxu0 0.0
        %2577 = vmatprep.subr.mxu0 0.0
        %2578 = vmatpush1.msra.mxu0 0.0
        %2579 = vmatprep.subr.mxu0 0.0
        %2580 = vmatpush1.msra.mxu0 0.0
        %2581 = vmatprep.subr.mxu0 0.0
        %2582 = vmatpush1.msra.mxu0 0.0
        %2583 = vmatprep.subr.mxu0 0.0
        %2584 = vmatpush1.msra.mxu0 0.0
        %2585 = vmatprep.subr.mxu0 0.0
        %2586 = vmatpush1.msra.mxu0 0.0
        %2587 = vmatprep.subr.mxu0 0.0
        %2588 = vmatpush1.msra.mxu0 0.0
        %2589 = vmatprep.subr.mxu0 0.0
        %2590 = vmatpush1.msra.mxu0 0.0
        %2591 = vmatprep.subr.mxu0 0.0
        %2592 = vmatpush1.msra.mxu0 0.0
        %2593 = vmatprep.subr.mxu0 0.0
        %2594 = vmatpush1.msra.mxu0 0.0
        %2595 = vmatprep.subr.mxu0 0.0
        %2596 = vmatpush1.msra.mxu0 0.0
        %2597 = vmatprep.subr.mxu0 0.0
        %2598 = vmatpush1.msra.mxu0 0.0
        %2599 = vmatprep.subr.mxu0 0.0
        %2600 = vmatpush1.msra.mxu0 0.0
        %2601 = vmatprep.subr.mxu0 0.0
        %2602 = vmatpush1.msra.mxu0 0.0
        %2603 = vmatprep.subr.mxu0 0.0
        %2604 = vmatpush1.msra.mxu0 0.0
        %2605 = vmatprep.subr.mxu0 0.0
        %2606 = vmatpush1.msra.mxu0 0.0
        %2607 = vmatprep.subr.mxu0 0.0
        %2608 = vmatpush1.msra.mxu0 0.0
        %2609 = vmatprep.subr.mxu0 0.0
        %2610 = vmatpush1.msra.mxu0 0.0
        %2611 = vmatprep.subr.mxu0 0.0
        %2612 = vmatpush1.msra.mxu0 0.0
        %2613 = vmatprep.subr.mxu0 0.0
        %2614 = vmatpush1.msra.mxu0 0.0
        %2615 = vmatprep.subr.mxu0 0.0
        %2616 = vmatpush1.msra.mxu0 0.0
        %2617 = vmatprep.subr.mxu0 0.0
        %2618 = vmatpush1.msra.mxu0 0.0
        %2619 = vmatprep.subr.mxu0 0.0
        %2620 = vmatpush1.msra.mxu0 0.0
        %2621 = vmatprep.subr.mxu0 0.0
        %2622 = vmatpush1.msra.mxu0 0.0
        %2623 = vmatprep.subr.mxu0 0.0
        %2624 = vmatpush1.msra.mxu0 0.0
        %2625 = vmatprep.subr.mxu0 0.0
        %2626 = vmatpush1.msra.mxu0 0.0
        %2627 = vmatprep.subr.mxu0 0.0
        %2628 = vmatpush1.msra.mxu0 0.0
        %2629 = vmatprep.subr.mxu0 0.0
        %2630 = vmatpush1.msra.mxu0 0.0
        %2631 = vmatprep.mubr.f32.mxu0 0.0
        %2632 = vmatmul.mubr.f32.gmra.mrb[0].mxu0 %v1438
        %v2633 = vpop.f32.mrb[0].mxu0
        %v2634 = vadd.f32 %v1425, %v2633
        %v2635 = vpop.f32.mrb[0].mxu0
        %2636 = vdwg.mxu0
        %2637 = vxpose.xlu0.b32.start [1/16] %v2634, 128
        %2638 = vxpose.xlu0.b32.cont [2/16] 0.0, 128
        %2639 = vxpose.xlu0.b32.cont [3/16] 0.0, 128
        %2640 = vxpose.xlu0.b32.cont [4/16] 0.0, 128
        %2641 = vxpose.xlu0.b32.cont [5/16] 0.0, 128
        %2642 = vxpose.xlu0.b32.cont [6/16] 0.0, 128
        %2643 = vxpose.xlu0.b32.cont [7/16] 0.0, 128
        %2644 = vxpose.xlu0.b32.cont [8/16] 0.0, 128
        %2645 = vxpose.xlu0.b32.cont [9/16] 0.0, 128
        %2646 = vxpose.xlu0.b32.cont [10/16] 0.0, 128
        %2647 = vxpose.xlu0.b32.cont [11/16] 0.0, 128
        %2648 = vxpose.xlu0.b32.cont [12/16] 0.0, 128
        %2649 = vxpose.xlu0.b32.cont [13/16] 0.0, 128
        %2650 = vxpose.xlu0.b32.cont [14/16] 0.0, 128
        %2651 = vxpose.xlu0.b32.cont [15/16] 0.0, 128
        %2652 = vxpose.xlu0.b32.end [16/16] 0.0, 128
        %v2653 = vpop.trf.xlu0
        %v2654 = vpop.trf.xlu0
        %v2655 = vpop.trf.xlu0
        %v2656 = vpop.trf.xlu0
        %v2657 = vpop.trf.xlu0
        %v2658 = vpop.trf.xlu0
        %v2659 = vpop.trf.xlu0
        %v2660 = vpop.trf.xlu0
        %v2661 = vpop.trf.xlu0
        %v2662 = vpop.trf.xlu0
        %v2663 = vpop.trf.xlu0
        %v2664 = vpop.trf.xlu0
        %v2665 = vpop.trf.xlu0
        %v2666 = vpop.trf.xlu0
        %v2667 = vpop.trf.xlu0
        %v2668 = vpop.trf.xlu0
        %2670 = vset.pattern.permute.xlu0 0
        %2671 = vperm.xlu0 %2670, %v2653
        %v2672 = vpop.permute.xlu0 %2671
        %v2674 = vlaneseq
        %v2675 = vshrl.u32 %v2674, 7
        %v2676 = vsub.s32 1, %v2675
        %v2677 = vrot.slane %v2634, %v2676
        %v2678 = vsub.f32 %v2672, %v2677
        %v2679 = vtanh.pop %v2678
        %v2680 = vmul.f32 %v1553, %v2679
        %v2681 = vadd.f32 %v1434, %v2680
        %v2682 = vand.u32 2147483647, %v2681
        %v2684 = vsel %vm1557, %v2682, 0
        %2686 = vmatprep.subr.mxu0 0.0
        %2687 = vmatpush1.msra.mxu0 %v1435
        %2688 = vmatprep.subr.mxu0 0.0
        %2689 = vmatpush1.msra.mxu0 0.0
        %2690 = vmatprep.subr.mxu0 0.0
        %2691 = vmatpush1.msra.mxu0 0.0
        %2692 = vmatprep.subr.mxu0 0.0
        %2693 = vmatpush1.msra.mxu0 0.0
        %2694 = vmatprep.subr.mxu0 0.0
        %2695 = vmatpush1.msra.mxu0 0.0
        %2696 = vmatprep.subr.mxu0 0.0
        %2697 = vmatpush1.msra.mxu0 0.0
        %2698 = vmatprep.subr.mxu0 0.0
        %2699 = vmatpush1.msra.mxu0 0.0
        %2700 = vmatprep.subr.mxu0 0.0
        %2701 = vmatpush1.msra.mxu0 0.0
        %2702 = vmatprep.subr.mxu0 0.0
        %2703 = vmatpush1.msra.mxu0 0.0
        %2704 = vmatprep.subr.mxu0 0.0
        %2705 = vmatpush1.msra.mxu0 0.0
        %2706 = vmatprep.subr.mxu0 0.0
        %2707 = vmatpush1.msra.mxu0 0.0
        %2708 = vmatprep.subr.mxu0 0.0
        %2709 = vmatpush1.msra.mxu0 0.0
        %2710 = vmatprep.subr.mxu0 0.0
        %2711 = vmatpush1.msra.mxu0 0.0
        %2712 = vmatprep.subr.mxu0 0.0
        %2713 = vmatpush1.msra.mxu0 0.0
        %2714 = vmatprep.subr.mxu0 0.0
        %2715 = vmatpush1.msra.mxu0 0.0
        %2716 = vmatprep.subr.mxu0 0.0
        %2717 = vmatpush1.msra.mxu0 0.0
        %2718 = vmatprep.subr.mxu0 0.0
        %2719 = vmatpush1.msra.mxu0 0.0
        %2720 = vmatprep.subr.mxu0 0.0
        %2721 = vmatpush1.msra.mxu0 0.0
        %2722 = vmatprep.subr.mxu0 0.0
        %2723 = vmatpush1.msra.mxu0 0.0
        %2724 = vmatprep.subr.mxu0 0.0
        %2725 = vmatpush1.msra.mxu0 0.0
        %2726 = vmatprep.subr.mxu0 0.0
        %2727 = vmatpush1.msra.mxu0 0.0
        %2728 = vmatprep.subr.mxu0 0.0
        %2729 = vmatpush1.msra.mxu0 0.0
        %2730 = vmatprep.subr.mxu0 0.0
        %2731 = vmatpush1.msra.mxu0 0.0
        %2732 = vmatprep.subr.mxu0 0.0
        %2733 = vmatpush1.msra.mxu0 0.0
        %2734 = vmatprep.subr.mxu0 0.0
        %2735 = vmatpush1.msra.mxu0 0.0
        %2736 = vmatprep.subr.mxu0 0.0
        %2737 = vmatpush1.msra.mxu0 0.0
        %2738 = vmatprep.subr.mxu0 0.0
        %2739 = vmatpush1.msra.mxu0 0.0
        %2740 = vmatprep.subr.mxu0 0.0
        %2741 = vmatpush1.msra.mxu0 0.0
        %2742 = vmatprep.subr.mxu0 0.0
        %2743 = vmatpush1.msra.mxu0 0.0
        %2744 = vmatprep.subr.mxu0 0.0
        %2745 = vmatpush1.msra.mxu0 0.0
        %2746 = vmatprep.subr.mxu0 0.0
        %2747 = vmatpush1.msra.mxu0 0.0
        %2748 = vmatprep.subr.mxu0 0.0
        %2749 = vmatpush1.msra.mxu0 0.0
        %2750 = vmatprep.mubr.f32.mxu0 0.0
        %2751 = vmatmul.mubr.f32.gmra.mrb[0].mxu0 %v2684
        %v2752 = vpop.f32.mrb[0].mxu0
        %v2753 = vadd.f32 0.0, %v2752
        %v2754 = vpop.f32.mrb[0].mxu0
        %2755 = vdwg.mxu0
        %2756 = vmatprep.subr.mxu0 0.0
        %2757 = vmatpush1.msra.mxu0 %v1325
        %2758 = vmatprep.subr.mxu0 0.0
        %2759 = vmatpush1.msra.mxu0 %v1330
        %2760 = vmatprep.subr.mxu0 0.0
        %2761 = vmatpush1.msra.mxu0 %v1335
        %2762 = vmatprep.subr.mxu0 0.0
        %2763 = vmatpush1.msra.mxu0 %v1340
        %2764 = vmatprep.subr.mxu0 0.0
        %2765 = vmatpush1.msra.mxu0 0.0
        %2766 = vmatprep.subr.mxu0 0.0
        %2767 = vmatpush1.msra.mxu0 0.0
        %2768 = vmatprep.subr.mxu0 0.0
        %2769 = vmatpush1.msra.mxu0 0.0
        %2770 = vmatprep.subr.mxu0 0.0
        %2771 = vmatpush1.msra.mxu0 0.0
        %2772 = vmatprep.subr.mxu0 0.0
        %2773 = vmatpush1.msra.mxu0 0.0
        %2774 = vmatprep.subr.mxu0 0.0
        %2775 = vmatpush1.msra.mxu0 0.0
        %2776 = vmatprep.subr.mxu0 0.0
        %2777 = vmatpush1.msra.mxu0 0.0
        %2778 = vmatprep.subr.mxu0 0.0
        %2779 = vmatpush1.msra.mxu0 0.0
        %2780 = vmatprep.subr.mxu0 0.0
        %2781 = vmatpush1.msra.mxu0 0.0
        %2782 = vmatprep.subr.mxu0 0.0
        %2783 = vmatpush1.msra.mxu0 0.0
        %2784 = vmatprep.subr.mxu0 0.0
        %2785 = vmatpush1.msra.mxu0 0.0
        %2786 = vmatprep.subr.mxu0 0.0
        %2787 = vmatpush1.msra.mxu0 0.0
        %2788 = vmatprep.subr.mxu0 0.0
        %2789 = vmatpush1.msra.mxu0 0.0
        %2790 = vmatprep.subr.mxu0 0.0
        %2791 = vmatpush1.msra.mxu0 0.0
        %2792 = vmatprep.subr.mxu0 0.0
        %2793 = vmatpush1.msra.mxu0 0.0
        %2794 = vmatprep.subr.mxu0 0.0
        %2795 = vmatpush1.msra.mxu0 0.0
        %2796 = vmatprep.subr.mxu0 0.0
        %2797 = vmatpush1.msra.mxu0 0.0
        %2798 = vmatprep.subr.mxu0 0.0
        %2799 = vmatpush1.msra.mxu0 0.0
        %2800 = vmatprep.subr.mxu0 0.0
        %2801 = vmatpush1.msra.mxu0 0.0
        %2802 = vmatprep.subr.mxu0 0.0
        %2803 = vmatpush1.msra.mxu0 0.0
        %2804 = vmatprep.subr.mxu0 0.0
        %2805 = vmatpush1.msra.mxu0 0.0
        %2806 = vmatprep.subr.mxu0 0.0
        %2807 = vmatpush1.msra.mxu0 0.0
        %2808 = vmatprep.subr.mxu0 0.0
        %2809 = vmatpush1.msra.mxu0 0.0
        %2810 = vmatprep.subr.mxu0 0.0
        %2811 = vmatpush1.msra.mxu0 0.0
        %2812 = vmatprep.subr.mxu0 0.0
        %2813 = vmatpush1.msra.mxu0 0.0
        %2814 = vmatprep.subr.mxu0 0.0
        %2815 = vmatpush1.msra.mxu0 0.0
        %2816 = vmatprep.subr.mxu0 0.0
        %2817 = vmatpush1.msra.mxu0 0.0
        %2818 = vmatprep.subr.mxu0 0.0
        %2819 = vmatpush1.msra.mxu0 0.0
        %2820 = vmatprep.mubr.f32.mxu0 0.0
        %2821 = vmatmul.mubr.f32.gmra.mrb[0].mxu0 %v1632
        %v2822 = vpop.f32.mrb[0].mxu0
        %v2823 = vadd.f32 %v1430, %v2822
        %v2824 = vpop.f32.mrb[0].mxu0
        %2825 = vmatprep.mubr.f32.mxu0 0.0
        %2826 = vmatmul.mubr.f32.gmra.mrb[0].mxu0 %v1635
        %v2827 = vpop.f32.mrb[0].mxu0
        %v2828 = vadd.f32 %v1431, %v2827
        %v2829 = vpop.f32.mrb[0].mxu0
        %2830 = vmatprep.mubr.f32.mxu0 0.0
        %2831 = vmatmul.mubr.f32.gmra.mrb[0].mxu0 %v1638
        %v2832 = vpop.f32.mrb[0].mxu0
        %v2833 = vadd.f32 %v1432, %v2832
        %v2834 = vpop.f32.mrb[0].mxu0
        %2835 = vmatprep.mubr.f32.mxu0 0.0
        %2836 = vmatmul.mubr.f32.gmra.mrb[0].mxu0 %v1641
        %v2837 = vpop.f32.mrb[0].mxu0
        %v2838 = vadd.f32 %v1433, %v2837
        %v2839 = vpop.f32.mrb[0].mxu0
        %2840 = vdwg.mxu0
        %v2842 = vsel %vm1557, %v2823, 0
        %v2845 = vsel %vm1557, %v2828, 0
        %v2848 = vsel %vm1557, %v2833, 0
        %v2851 = vsel %vm1557, %v2838, 0
        %2853 = vmatprep.subr.mxu0 0.0
        %2854 = vmatpush1.msra.mxu0 %v2753
        %2855 = vmatprep.subr.mxu0 0.0
        %2856 = vmatpush1.msra.mxu0 0.0
        %2857 = vmatprep.subr.mxu0 0.0
        %2858 = vmatpush1.msra.mxu0 0.0
        %2859 = vmatprep.subr.mxu0 0.0
        %2860 = vmatpush1.msra.mxu0 0.0
        %2861 = vmatprep.subr.mxu0 0.0
        %2862 = vmatpush1.msra.mxu0 0.0
        %2863 = vmatprep.subr.mxu0 0.0
        %2864 = vmatpush1.msra.mxu0 0.0
        %2865 = vmatprep.subr.mxu0 0.0
        %2866 = vmatpush1.msra.mxu0 0.0
        %2867 = vmatprep.subr.mxu0 0.0
        %2868 = vmatpush1.msra.mxu0 0.0
        %2869 = vmatprep.subr.mxu0 0.0
        %2870 = vmatpush1.msra.mxu0 0.0
        %2871 = vmatprep.subr.mxu0 0.0
        %2872 = vmatpush1.msra.mxu0 0.0
        %2873 = vmatprep.subr.mxu0 0.0
        %2874 = vmatpush1.msra.mxu0 0.0
        %2875 = vmatprep.subr.mxu0 0.0
        %2876 = vmatpush1.msra.mxu0 0.0
        %2877 = vmatprep.subr.mxu0 0.0
        %2878 = vmatpush1.msra.mxu0 0.0
        %2879 = vmatprep.subr.mxu0 0.0
        %2880 = vmatpush1.msra.mxu0 0.0
        %2881 = vmatprep.subr.mxu0 0.0
        %2882 = vmatpush1.msra.mxu0 0.0
        %2883 = vmatprep.subr.mxu0 0.0
        %2884 = vmatpush1.msra.mxu0 0.0
        %2885 = vmatprep.subr.mxu0 0.0
        %2886 = vmatpush1.msra.mxu0 0.0
        %2887 = vmatprep.subr.mxu0 0.0
        %2888 = vmatpush1.msra.mxu0 0.0
        %2889 = vmatprep.subr.mxu0 0.0
        %2890 = vmatpush1.msra.mxu0 0.0
        %2891 = vmatprep.subr.mxu0 0.0
        %2892 = vmatpush1.msra.mxu0 0.0
        %2893 = vmatprep.subr.mxu0 0.0
        %2894 = vmatpush1.msra.mxu0 0.0
        %2895 = vmatprep.subr.mxu0 0.0
        %2896 = vmatpush1.msra.mxu0 0.0
        %2897 = vmatprep.subr.mxu0 0.0
        %2898 = vmatpush1.msra.mxu0 0.0
        %2899 = vmatprep.subr.mxu0 0.0
        %2900 = vmatpush1.msra.mxu0 0.0
        %2901 = vmatprep.subr.mxu0 0.0
        %2902 = vmatpush1.msra.mxu0 0.0
        %2903 = vmatprep.subr.mxu0 0.0
        %2904 = vmatpush1.msra.mxu0 0.0
        %2905 = vmatprep.subr.mxu0 0.0
        %2906 = vmatpush1.msra.mxu0 0.0
        %2907 = vmatprep.subr.mxu0 0.0
        %2908 = vmatpush1.msra.mxu0 0.0
        %2909 = vmatprep.subr.mxu0 0.0
        %2910 = vmatpush1.msra.mxu0 0.0
        %2911 = vmatprep.subr.mxu0 0.0
        %2912 = vmatpush1.msra.mxu0 0.0
        %2913 = vmatprep.subr.mxu0 0.0
        %2914 = vmatpush1.msra.mxu0 0.0
        %2915 = vmatprep.subr.mxu0 0.0
        %2916 = vmatpush1.msra.mxu0 0.0
        %2917 = vmatprep.mubr.f32.mxu0 0.0
        %2918 = vmatmul.mubr.f32.gmra.mrb[0].mxu0 %v2842
        %v2919 = vpop.f32.mrb[0].mxu0
        %v2920 = vadd.f32 0.0, %v2919
        %v2921 = vpop.f32.mrb[0].mxu0
        %2922 = vmatprep.mubr.f32.mxu0 0.0
        %2923 = vmatmul.mubr.f32.gmra.mrb[0].mxu0 %v2845
        %v2924 = vpop.f32.mrb[0].mxu0
        %v2925 = vadd.f32 0.0, %v2924
        %v2926 = vpop.f32.mrb[0].mxu0
        %2927 = vmatprep.mubr.f32.mxu0 0.0
        %2928 = vmatmul.mubr.f32.gmra.mrb[0].mxu0 %v2848
        %v2929 = vpop.f32.mrb[0].mxu0
        %v2930 = vadd.f32 0.0, %v2929
        %v2931 = vpop.f32.mrb[0].mxu0
        %2932 = vmatprep.mubr.f32.mxu0 0.0
        %2933 = vmatmul.mubr.f32.gmra.mrb[0].mxu0 %v2851
        %v2934 = vpop.f32.mrb[0].mxu0
        %v2935 = vadd.f32 0.0, %v2934
        %v2936 = vpop.f32.mrb[0].mxu0
        %2937 = vdwg.mxu0
        %2938 = vmatprep.subr.mxu0 0.0
        %2939 = vmatpush1.msra.mxu0 %v1345
        %2940 = vmatprep.subr.mxu0 0.0
        %2941 = vmatpush1.msra.mxu0 %v1350
        %2942 = vmatprep.subr.mxu0 0.0
        %2943 = vmatpush1.msra.mxu0 %v1355
        %2944 = vmatprep.subr.mxu0 0.0
        %2945 = vmatpush1.msra.mxu0 %v1360
        %2946 = vmatprep.subr.mxu0 0.0
        %2947 = vmatpush1.msra.mxu0 0.0
        %2948 = vmatprep.subr.mxu0 0.0
        %2949 = vmatpush1.msra.mxu0 0.0
        %2950 = vmatprep.subr.mxu0 0.0
        %2951 = vmatpush1.msra.mxu0 0.0
        %2952 = vmatprep.subr.mxu0 0.0
        %2953 = vmatpush1.msra.mxu0 0.0
        %2954 = vmatprep.subr.mxu0 0.0
        %2955 = vmatpush1.msra.mxu0 0.0
        %2956 = vmatprep.subr.mxu0 0.0
        %2957 = vmatpush1.msra.mxu0 0.0
        %2958 = vmatprep.subr.mxu0 0.0
        %2959 = vmatpush1.msra.mxu0 0.0
        %2960 = vmatprep.subr.mxu0 0.0
        %2961 = vmatpush1.msra.mxu0 0.0
        %2962 = vmatprep.subr.mxu0 0.0
        %2963 = vmatpush1.msra.mxu0 0.0
        %2964 = vmatprep.subr.mxu0 0.0
        %2965 = vmatpush1.msra.mxu0 0.0
        %2966 = vmatprep.subr.mxu0 0.0
        %2967 = vmatpush1.msra.mxu0 0.0
        %2968 = vmatprep.subr.mxu0 0.0
        %2969 = vmatpush1.msra.mxu0 0.0
        %2970 = vmatprep.subr.mxu0 0.0
        %2971 = vmatpush1.msra.mxu0 0.0
        %2972 = vmatprep.subr.mxu0 0.0
        %2973 = vmatpush1.msra.mxu0 0.0
        %2974 = vmatprep.subr.mxu0 0.0
        %2975 = vmatpush1.msra.mxu0 0.0
        %2976 = vmatprep.subr.mxu0 0.0
        %2977 = vmatpush1.msra.mxu0 0.0
        %2978 = vmatprep.subr.mxu0 0.0
        %2979 = vmatpush1.msra.mxu0 0.0
        %2980 = vmatprep.subr.mxu0 0.0
        %2981 = vmatpush1.msra.mxu0 0.0
        %2982 = vmatprep.subr.mxu0 0.0
        %2983 = vmatpush1.msra.mxu0 0.0
        %2984 = vmatprep.subr.mxu0 0.0
        %2985 = vmatpush1.msra.mxu0 0.0
        %2986 = vmatprep.subr.mxu0 0.0
        %2987 = vmatpush1.msra.mxu0 0.0
        %2988 = vmatprep.subr.mxu0 0.0
        %2989 = vmatpush1.msra.mxu0 0.0
        %2990 = vmatprep.subr.mxu0 0.0
        %2991 = vmatpush1.msra.mxu0 0.0
        %2992 = vmatprep.subr.mxu0 0.0
        %2993 = vmatpush1.msra.mxu0 0.0
        %2994 = vmatprep.subr.mxu0 0.0
        %2995 = vmatpush1.msra.mxu0 0.0
        %2996 = vmatprep.subr.mxu0 0.0
        %2997 = vmatpush1.msra.mxu0 0.0
        %2998 = vmatprep.subr.mxu0 0.0
        %2999 = vmatpush1.msra.mxu0 0.0
        %3000 = vmatprep.subr.mxu0 0.0
        %3001 = vmatpush1.msra.mxu0 0.0
        %3002 = vmatprep.mubr.f32.mxu0 0.0
        %3003 = vmatmul.mubr.f32.gmra.mrb[0].mxu0 %v1438
        %v3004 = vpop.f32.mrb[0].mxu0
        %v3005 = vadd.f32 %v1425, %v3004
        %v3006 = vpop.f32.mrb[0].mxu0
        %3007 = vdwg.mxu0
        %3008 = vxpose.xlu0.b32.start [1/16] %v3005, 128
        %3009 = vxpose.xlu0.b32.cont [2/16] 0.0, 128
        %3010 = vxpose.xlu0.b32.cont [3/16] 0.0, 128
        %3011 = vxpose.xlu0.b32.cont [4/16] 0.0, 128
        %3012 = vxpose.xlu0.b32.cont [5/16] 0.0, 128
        %3013 = vxpose.xlu0.b32.cont [6/16] 0.0, 128
        %3014 = vxpose.xlu0.b32.cont [7/16] 0.0, 128
        %3015 = vxpose.xlu0.b32.cont [8/16] 0.0, 128
        %3016 = vxpose.xlu0.b32.cont [9/16] 0.0, 128
        %3017 = vxpose.xlu0.b32.cont [10/16] 0.0, 128
        %3018 = vxpose.xlu0.b32.cont [11/16] 0.0, 128
        %3019 = vxpose.xlu0.b32.cont [12/16] 0.0, 128
        %3020 = vxpose.xlu0.b32.cont [13/16] 0.0, 128
        %3021 = vxpose.xlu0.b32.cont [14/16] 0.0, 128
        %3022 = vxpose.xlu0.b32.cont [15/16] 0.0, 128
        %3023 = vxpose.xlu0.b32.end [16/16] 0.0, 128
        %v3024 = vpop.trf.xlu0
        %v3025 = vpop.trf.xlu0
        %v3026 = vpop.trf.xlu0
        %v3027 = vpop.trf.xlu0
        %v3028 = vpop.trf.xlu0
        %v3029 = vpop.trf.xlu0
        %v3030 = vpop.trf.xlu0
        %v3031 = vpop.trf.xlu0
        %v3032 = vpop.trf.xlu0
        %v3033 = vpop.trf.xlu0
        %v3034 = vpop.trf.xlu0
        %v3035 = vpop.trf.xlu0
        %v3036 = vpop.trf.xlu0
        %v3037 = vpop.trf.xlu0
        %v3038 = vpop.trf.xlu0
        %v3039 = vpop.trf.xlu0
        %3041 = vset.pattern.permute.xlu0 0
        %3042 = vperm.xlu0 %3041, %v3024
        %v3043 = vpop.permute.xlu0 %3042
        %v3045 = vlaneseq
        %v3046 = vshrl.u32 %v3045, 7
        %v3047 = vsub.s32 1, %v3046
        %v3048 = vrot.slane %v3005, %v3047
        %v3049 = vsub.f32 %v3043, %v3048
        %v3050 = vtanh.pop %v3049
        %v3051 = vmul.f32 %v1553, %v3050
        %v3052 = vadd.f32 %v1434, %v3051
        %v3053 = vand.u32 2147483647, %v3052
        %v3055 = vsel %vm1557, %v3053, 0
        %3057 = vmatprep.subr.mxu0 0.0
        %3058 = vmatpush1.msra.mxu0 %v1435
        %3059 = vmatprep.subr.mxu0 0.0
        %3060 = vmatpush1.msra.mxu0 0.0
        %3061 = vmatprep.subr.mxu0 0.0
        %3062 = vmatpush1.msra.mxu0 0.0
        %3063 = vmatprep.subr.mxu0 0.0
        %3064 = vmatpush1.msra.mxu0 0.0
        %3065 = vmatprep.subr.mxu0 0.0
        %3066 = vmatpush1.msra.mxu0 0.0
        %3067 = vmatprep.subr.mxu0 0.0
        %3068 = vmatpush1.msra.mxu0 0.0
        %3069 = vmatprep.subr.mxu0 0.0
        %3070 = vmatpush1.msra.mxu0 0.0
        %3071 = vmatprep.subr.mxu0 0.0
        %3072 = vmatpush1.msra.mxu0 0.0
        %3073 = vmatprep.subr.mxu0 0.0
        %3074 = vmatpush1.msra.mxu0 0.0
        %3075 = vmatprep.subr.mxu0 0.0
        %3076 = vmatpush1.msra.mxu0 0.0
        %3077 = vmatprep.subr.mxu0 0.0
        %3078 = vmatpush1.msra.mxu0 0.0
        %3079 = vmatprep.subr.mxu0 0.0
        %3080 = vmatpush1.msra.mxu0 0.0
        %3081 = vmatprep.subr.mxu0 0.0
        %3082 = vmatpush1.msra.mxu0 0.0
        %3083 = vmatprep.subr.mxu0 0.0
        %3084 = vmatpush1.msra.mxu0 0.0
        %3085 = vmatprep.subr.mxu0 0.0
        %3086 = vmatpush1.msra.mxu0 0.0
        %3087 = vmatprep.subr.mxu0 0.0
        %3088 = vmatpush1.msra.mxu0 0.0
        %3089 = vmatprep.subr.mxu0 0.0
        %3090 = vmatpush1.msra.mxu0 0.0
        %3091 = vmatprep.subr.mxu0 0.0
        %3092 = vmatpush1.msra.mxu0 0.0
        %3093 = vmatprep.subr.mxu0 0.0
        %3094 = vmatpush1.msra.mxu0 0.0
        %3095 = vmatprep.subr.mxu0 0.0
        %3096 = vmatpush1.msra.mxu0 0.0
        %3097 = vmatprep.subr.mxu0 0.0
        %3098 = vmatpush1.msra.mxu0 0.0
        %3099 = vmatprep.subr.mxu0 0.0
        %3100 = vmatpush1.msra.mxu0 0.0
        %3101 = vmatprep.subr.mxu0 0.0
        %3102 = vmatpush1.msra.mxu0 0.0
        %3103 = vmatprep.subr.mxu0 0.0
        %3104 = vmatpush1.msra.mxu0 0.0
        %3105 = vmatprep.subr.mxu0 0.0
        %3106 = vmatpush1.msra.mxu0 0.0
        %3107 = vmatprep.subr.mxu0 0.0
        %3108 = vmatpush1.msra.mxu0 0.0
        %3109 = vmatprep.subr.mxu0 0.0
        %3110 = vmatpush1.msra.mxu0 0.0
        %3111 = vmatprep.subr.mxu0 0.0
        %3112 = vmatpush1.msra.mxu0 0.0
        %3113 = vmatprep.subr.mxu0 0.0
        %3114 = vmatpush1.msra.mxu0 0.0
        %3115 = vmatprep.subr.mxu0 0.0
        %3116 = vmatpush1.msra.mxu0 0.0
        %3117 = vmatprep.subr.mxu0 0.0
        %3118 = vmatpush1.msra.mxu0 0.0
        %3119 = vmatprep.subr.mxu0 0.0
        %3120 = vmatpush1.msra.mxu0 0.0
        %3121 = vmatprep.mubr.f32.mxu0 0.0
        %3122 = vmatmul.mubr.f32.gmra.mrb[0].mxu0 %v3055
        %v3123 = vpop.f32.mrb[0].mxu0
        %v3124 = vadd.f32 0.0, %v3123
        %v3125 = vpop.f32.mrb[0].mxu0
        %3126 = vdwg.mxu0
        %3127 = vmatprep.subr.mxu0 0.0
        %3128 = vmatpush1.msra.mxu0 %v1345
        %3129 = vmatprep.subr.mxu0 0.0
        %3130 = vmatpush1.msra.mxu0 %v1350
        %3131 = vmatprep.subr.mxu0 0.0
        %3132 = vmatpush1.msra.mxu0 %v1355
        %3133 = vmatprep.subr.mxu0 0.0
        %3134 = vmatpush1.msra.mxu0 %v1360
        %3135 = vmatprep.subr.mxu0 0.0
        %3136 = vmatpush1.msra.mxu0 0.0
        %3137 = vmatprep.subr.mxu0 0.0
        %3138 = vmatpush1.msra.mxu0 0.0
        %3139 = vmatprep.subr.mxu0 0.0
        %3140 = vmatpush1.msra.mxu0 0.0
        %3141 = vmatprep.subr.mxu0 0.0
        %3142 = vmatpush1.msra.mxu0 0.0
        %3143 = vmatprep.subr.mxu0 0.0
        %3144 = vmatpush1.msra.mxu0 0.0
        %3145 = vmatprep.subr.mxu0 0.0
        %3146 = vmatpush1.msra.mxu0 0.0
        %3147 = vmatprep.subr.mxu0 0.0
        %3148 = vmatpush1.msra.mxu0 0.0
        %3149 = vmatprep.subr.mxu0 0.0
        %3150 = vmatpush1.msra.mxu0 0.0
        %3151 = vmatprep.subr.mxu0 0.0
        %3152 = vmatpush1.msra.mxu0 0.0
        %3153 = vmatprep.subr.mxu0 0.0
        %3154 = vmatpush1.msra.mxu0 0.0
        %3155 = vmatprep.subr.mxu0 0.0
        %3156 = vmatpush1.msra.mxu0 0.0
        %3157 = vmatprep.subr.mxu0 0.0
        %3158 = vmatpush1.msra.mxu0 0.0
        %3159 = vmatprep.subr.mxu0 0.0
        %3160 = vmatpush1.msra.mxu0 0.0
        %3161 = vmatprep.subr.mxu0 0.0
        %3162 = vmatpush1.msra.mxu0 0.0
        %3163 = vmatprep.subr.mxu0 0.0
        %3164 = vmatpush1.msra.mxu0 0.0
        %3165 = vmatprep.subr.mxu0 0.0
        %3166 = vmatpush1.msra.mxu0 0.0
        %3167 = vmatprep.subr.mxu0 0.0
        %3168 = vmatpush1.msra.mxu0 0.0
        %3169 = vmatprep.subr.mxu0 0.0
        %3170 = vmatpush1.msra.mxu0 0.0
        %3171 = vmatprep.subr.mxu0 0.0
        %3172 = vmatpush1.msra.mxu0 0.0
        %3173 = vmatprep.subr.mxu0 0.0
        %3174 = vmatpush1.msra.mxu0 0.0
        %3175 = vmatprep.subr.mxu0 0.0
        %3176 = vmatpush1.msra.mxu0 0.0
        %3177 = vmatprep.subr.mxu0 0.0
        %3178 = vmatpush1.msra.mxu0 0.0
        %3179 = vmatprep.subr.mxu0 0.0
        %3180 = vmatpush1.msra.mxu0 0.0
        %3181 = vmatprep.subr.mxu0 0.0
        %3182 = vmatpush1.msra.mxu0 0.0
        %3183 = vmatprep.subr.mxu0 0.0
        %3184 = vmatpush1.msra.mxu0 0.0
        %3185 = vmatprep.subr.mxu0 0.0
        %3186 = vmatpush1.msra.mxu0 0.0
        %3187 = vmatprep.subr.mxu0 0.0
        %3188 = vmatpush1.msra.mxu0 0.0
        %3189 = vmatprep.subr.mxu0 0.0
        %3190 = vmatpush1.msra.mxu0 0.0
        %3191 = vmatprep.mubr.f32.mxu0 0.0
        %3192 = vmatmul.mubr.f32.gmra.mrb[0].mxu0 %v1632
        %v3193 = vpop.f32.mrb[0].mxu0
        %v3194 = vadd.f32 %v1430, %v3193
        %v3195 = vpop.f32.mrb[0].mxu0
        %3196 = vmatprep.mubr.f32.mxu0 0.0
        %3197 = vmatmul.mubr.f32.gmra.mrb[0].mxu0 %v1635
        %v3198 = vpop.f32.mrb[0].mxu0
        %v3199 = vadd.f32 %v1431, %v3198
        %v3200 = vpop.f32.mrb[0].mxu0
        %3201 = vmatprep.mubr.f32.mxu0 0.0
        %3202 = vmatmul.mubr.f32.gmra.mrb[0].mxu0 %v1638
        %v3203 = vpop.f32.mrb[0].mxu0
        %v3204 = vadd.f32 %v1432, %v3203
        %v3205 = vpop.f32.mrb[0].mxu0
        %3206 = vmatprep.mubr.f32.mxu0 0.0
        %3207 = vmatmul.mubr.f32.gmra.mrb[0].mxu0 %v1641
        %v3208 = vpop.f32.mrb[0].mxu0
        %v3209 = vadd.f32 %v1433, %v3208
        %v3210 = vpop.f32.mrb[0].mxu0
        %3211 = vdwg.mxu0
        %v3213 = vsel %vm1557, %v3194, 0
        %v3216 = vsel %vm1557, %v3199, 0
        %v3219 = vsel %vm1557, %v3204, 0
        %v3222 = vsel %vm1557, %v3209, 0
        %3224 = vmatprep.subr.mxu0 0.0
        %3225 = vmatpush1.msra.mxu0 %v3124
        %3226 = vmatprep.subr.mxu0 0.0
        %3227 = vmatpush1.msra.mxu0 0.0
        %3228 = vmatprep.subr.mxu0 0.0
        %3229 = vmatpush1.msra.mxu0 0.0
        %3230 = vmatprep.subr.mxu0 0.0
        %3231 = vmatpush1.msra.mxu0 0.0
        %3232 = vmatprep.subr.mxu0 0.0
        %3233 = vmatpush1.msra.mxu0 0.0
        %3234 = vmatprep.subr.mxu0 0.0
        %3235 = vmatpush1.msra.mxu0 0.0
        %3236 = vmatprep.subr.mxu0 0.0
        %3237 = vmatpush1.msra.mxu0 0.0
        %3238 = vmatprep.subr.mxu0 0.0
        %3239 = vmatpush1.msra.mxu0 0.0
        %3240 = vmatprep.subr.mxu0 0.0
        %3241 = vmatpush1.msra.mxu0 0.0
        %3242 = vmatprep.subr.mxu0 0.0
        %3243 = vmatpush1.msra.mxu0 0.0
        %3244 = vmatprep.subr.mxu0 0.0
        %3245 = vmatpush1.msra.mxu0 0.0
        %3246 = vmatprep.subr.mxu0 0.0
        %3247 = vmatpush1.msra.mxu0 0.0
        %3248 = vmatprep.subr.mxu0 0.0
        %3249 = vmatpush1.msra.mxu0 0.0
        %3250 = vmatprep.subr.mxu0 0.0
        %3251 = vmatpush1.msra.mxu0 0.0
        %3252 = vmatprep.subr.mxu0 0.0
        %3253 = vmatpush1.msra.mxu0 0.0
        %3254 = vmatprep.subr.mxu0 0.0
        %3255 = vmatpush1.msra.mxu0 0.0
        %3256 = vmatprep.subr.mxu0 0.0
        %3257 = vmatpush1.msra.mxu0 0.0
        %3258 = vmatprep.subr.mxu0 0.0
        %3259 = vmatpush1.msra.mxu0 0.0
        %3260 = vmatprep.subr.mxu0 0.0
        %3261 = vmatpush1.msra.mxu0 0.0
        %3262 = vmatprep.subr.mxu0 0.0
        %3263 = vmatpush1.msra.mxu0 0.0
        %3264 = vmatprep.subr.mxu0 0.0
        %3265 = vmatpush1.msra.mxu0 0.0
        %3266 = vmatprep.subr.mxu0 0.0
        %3267 = vmatpush1.msra.mxu0 0.0
        %3268 = vmatprep.subr.mxu0 0.0
        %3269 = vmatpush1.msra.mxu0 0.0
        %3270 = vmatprep.subr.mxu0 0.0
        %3271 = vmatpush1.msra.mxu0 0.0
        %3272 = vmatprep.subr.mxu0 0.0
        %3273 = vmatpush1.msra.mxu0 0.0
        %3274 = vmatprep.subr.mxu0 0.0
        %3275 = vmatpush1.msra.mxu0 0.0
        %3276 = vmatprep.subr.mxu0 0.0
        %3277 = vmatpush1.msra.mxu0 0.0
        %3278 = vmatprep.subr.mxu0 0.0
        %3279 = vmatpush1.msra.mxu0 0.0
        %3280 = vmatprep.subr.mxu0 0.0
        %3281 = vmatpush1.msra.mxu0 0.0
        %3282 = vmatprep.subr.mxu0 0.0
        %3283 = vmatpush1.msra.mxu0 0.0
        %3284 = vmatprep.subr.mxu0 0.0
        %3285 = vmatpush1.msra.mxu0 0.0
        %3286 = vmatprep.subr.mxu0 0.0
        %3287 = vmatpush1.msra.mxu0 0.0
        %3288 = vmatprep.mubr.f32.mxu0 0.0
        %3289 = vmatmul.mubr.f32.gmra.mrb[0].mxu0 %v3213
        %v3290 = vpop.f32.mrb[0].mxu0
        %v3291 = vadd.f32 0.0, %v3290
        %v3292 = vpop.f32.mrb[0].mxu0
        %3293 = vmatprep.mubr.f32.mxu0 0.0
        %3294 = vmatmul.mubr.f32.gmra.mrb[0].mxu0 %v3216
        %v3295 = vpop.f32.mrb[0].mxu0
        %v3296 = vadd.f32 0.0, %v3295
        %v3297 = vpop.f32.mrb[0].mxu0
        %3298 = vmatprep.mubr.f32.mxu0 0.0
        %3299 = vmatmul.mubr.f32.gmra.mrb[0].mxu0 %v3219
        %v3300 = vpop.f32.mrb[0].mxu0
        %v3301 = vadd.f32 0.0, %v3300
        %v3302 = vpop.f32.mrb[0].mxu0
        %3303 = vmatprep.mubr.f32.mxu0 0.0
        %3304 = vmatmul.mubr.f32.gmra.mrb[0].mxu0 %v3222
        %v3305 = vpop.f32.mrb[0].mxu0
        %v3306 = vadd.f32 0.0, %v3305
        %v3307 = vpop.f32.mrb[0].mxu0
        %3308 = vdwg.mxu0
        %3309 = vmatprep.subr.mxu0 0.0
        %3310 = vmatpush1.msra.mxu0 %v1365
        %3311 = vmatprep.subr.mxu0 0.0
        %3312 = vmatpush1.msra.mxu0 %v1370
        %3313 = vmatprep.subr.mxu0 0.0
        %3314 = vmatpush1.msra.mxu0 %v1375
        %3315 = vmatprep.subr.mxu0 0.0
        %3316 = vmatpush1.msra.mxu0 %v1380
        %3317 = vmatprep.subr.mxu0 0.0
        %3318 = vmatpush1.msra.mxu0 0.0
        %3319 = vmatprep.subr.mxu0 0.0
        %3320 = vmatpush1.msra.mxu0 0.0
        %3321 = vmatprep.subr.mxu0 0.0
        %3322 = vmatpush1.msra.mxu0 0.0
        %3323 = vmatprep.subr.mxu0 0.0
        %3324 = vmatpush1.msra.mxu0 0.0
        %3325 = vmatprep.subr.mxu0 0.0
        %3326 = vmatpush1.msra.mxu0 0.0
        %3327 = vmatprep.subr.mxu0 0.0
        %3328 = vmatpush1.msra.mxu0 0.0
        %3329 = vmatprep.subr.mxu0 0.0
        %3330 = vmatpush1.msra.mxu0 0.0
        %3331 = vmatprep.subr.mxu0 0.0
        %3332 = vmatpush1.msra.mxu0 0.0
        %3333 = vmatprep.subr.mxu0 0.0
        %3334 = vmatpush1.msra.mxu0 0.0
        %3335 = vmatprep.subr.mxu0 0.0
        %3336 = vmatpush1.msra.mxu0 0.0
        %3337 = vmatprep.subr.mxu0 0.0
        %3338 = vmatpush1.msra.mxu0 0.0
        %3339 = vmatprep.subr.mxu0 0.0
        %3340 = vmatpush1.msra.mxu0 0.0
        %3341 = vmatprep.subr.mxu0 0.0
        %3342 = vmatpush1.msra.mxu0 0.0
        %3343 = vmatprep.subr.mxu0 0.0
        %3344 = vmatpush1.msra.mxu0 0.0
        %3345 = vmatprep.subr.mxu0 0.0
        %3346 = vmatpush1.msra.mxu0 0.0
        %3347 = vmatprep.subr.mxu0 0.0
        %3348 = vmatpush1.msra.mxu0 0.0
        %3349 = vmatprep.subr.mxu0 0.0
        %3350 = vmatpush1.msra.mxu0 0.0
        %3351 = vmatprep.subr.mxu0 0.0
        %3352 = vmatpush1.msra.mxu0 0.0
        %3353 = vmatprep.subr.mxu0 0.0
        %3354 = vmatpush1.msra.mxu0 0.0
        %3355 = vmatprep.subr.mxu0 0.0
        %3356 = vmatpush1.msra.mxu0 0.0
        %3357 = vmatprep.subr.mxu0 0.0
        %3358 = vmatpush1.msra.mxu0 0.0
        %3359 = vmatprep.subr.mxu0 0.0
        %3360 = vmatpush1.msra.mxu0 0.0
        %3361 = vmatprep.subr.mxu0 0.0
        %3362 = vmatpush1.msra.mxu0 0.0
        %3363 = vmatprep.subr.mxu0 0.0
        %3364 = vmatpush1.msra.mxu0 0.0
        %3365 = vmatprep.subr.mxu0 0.0
        %3366 = vmatpush1.msra.mxu0 0.0
        %3367 = vmatprep.subr.mxu0 0.0
        %3368 = vmatpush1.msra.mxu0 0.0
        %3369 = vmatprep.subr.mxu0 0.0
        %3370 = vmatpush1.msra.mxu0 0.0
        %3371 = vmatprep.subr.mxu0 0.0
        %3372 = vmatpush1.msra.mxu0 0.0
        %3373 = vmatprep.mubr.f32.mxu0 0.0
        %3374 = vmatmul.mubr.f32.gmra.mrb[0].mxu0 %v1438
        %v3375 = vpop.f32.mrb[0].mxu0
        %v3376 = vadd.f32 %v1425, %v3375
        %v3377 = vpop.f32.mrb[0].mxu0
        %3378 = vdwg.mxu0
        %3379 = vxpose.xlu0.b32.start [1/16] %v3376, 128
        %3380 = vxpose.xlu0.b32.cont [2/16] 0.0, 128
        %3381 = vxpose.xlu0.b32.cont [3/16] 0.0, 128
        %3382 = vxpose.xlu0.b32.cont [4/16] 0.0, 128
        %3383 = vxpose.xlu0.b32.cont [5/16] 0.0, 128
        %3384 = vxpose.xlu0.b32.cont [6/16] 0.0, 128
        %3385 = vxpose.xlu0.b32.cont [7/16] 0.0, 128
        %3386 = vxpose.xlu0.b32.cont [8/16] 0.0, 128
        %3387 = vxpose.xlu0.b32.cont [9/16] 0.0, 128
        %3388 = vxpose.xlu0.b32.cont [10/16] 0.0, 128
        %3389 = vxpose.xlu0.b32.cont [11/16] 0.0, 128
        %3390 = vxpose.xlu0.b32.cont [12/16] 0.0, 128
        %3391 = vxpose.xlu0.b32.cont [13/16] 0.0, 128
        %3392 = vxpose.xlu0.b32.cont [14/16] 0.0, 128
        %3393 = vxpose.xlu0.b32.cont [15/16] 0.0, 128
        %3394 = vxpose.xlu0.b32.end [16/16] 0.0, 128
        %v3395 = vpop.trf.xlu0
        %v3396 = vpop.trf.xlu0
        %v3397 = vpop.trf.xlu0
        %v3398 = vpop.trf.xlu0
        %v3399 = vpop.trf.xlu0
        %v3400 = vpop.trf.xlu0
        %v3401 = vpop.trf.xlu0
        %v3402 = vpop.trf.xlu0
        %v3403 = vpop.trf.xlu0
        %v3404 = vpop.trf.xlu0
        %v3405 = vpop.trf.xlu0
        %v3406 = vpop.trf.xlu0
        %v3407 = vpop.trf.xlu0
        %v3408 = vpop.trf.xlu0
        %v3409 = vpop.trf.xlu0
        %v3410 = vpop.trf.xlu0
        %3412 = vset.pattern.permute.xlu0 0
        %3413 = vperm.xlu0 %3412, %v3395
        %v3414 = vpop.permute.xlu0 %3413
        %v3416 = vlaneseq
        %v3417 = vshrl.u32 %v3416, 7
        %v3418 = vsub.s32 1, %v3417
        %v3419 = vrot.slane %v3376, %v3418
        %v3420 = vsub.f32 %v3414, %v3419
        %v3421 = vtanh.pop %v3420
        %v3422 = vmul.f32 %v1553, %v3421
        %v3423 = vadd.f32 %v1434, %v3422
        %v3424 = vand.u32 2147483647, %v3423
        %v3426 = vsel %vm1557, %v3424, 0
        %3428 = vmatprep.subr.mxu0 0.0
        %3429 = vmatpush1.msra.mxu0 %v1435
        %3430 = vmatprep.subr.mxu0 0.0
        %3431 = vmatpush1.msra.mxu0 0.0
        %3432 = vmatprep.subr.mxu0 0.0
        %3433 = vmatpush1.msra.mxu0 0.0
        %3434 = vmatprep.subr.mxu0 0.0
        %3435 = vmatpush1.msra.mxu0 0.0
        %3436 = vmatprep.subr.mxu0 0.0
        %3437 = vmatpush1.msra.mxu0 0.0
        %3438 = vmatprep.subr.mxu0 0.0
        %3439 = vmatpush1.msra.mxu0 0.0
        %3440 = vmatprep.subr.mxu0 0.0
        %3441 = vmatpush1.msra.mxu0 0.0
        %3442 = vmatprep.subr.mxu0 0.0
        %3443 = vmatpush1.msra.mxu0 0.0
        %3444 = vmatprep.subr.mxu0 0.0
        %3445 = vmatpush1.msra.mxu0 0.0
        %3446 = vmatprep.subr.mxu0 0.0
        %3447 = vmatpush1.msra.mxu0 0.0
        %3448 = vmatprep.subr.mxu0 0.0
        %3449 = vmatpush1.msra.mxu0 0.0
        %3450 = vmatprep.subr.mxu0 0.0
        %3451 = vmatpush1.msra.mxu0 0.0
        %3452 = vmatprep.subr.mxu0 0.0
        %3453 = vmatpush1.msra.mxu0 0.0
        %3454 = vmatprep.subr.mxu0 0.0
        %3455 = vmatpush1.msra.mxu0 0.0
        %3456 = vmatprep.subr.mxu0 0.0
        %3457 = vmatpush1.msra.mxu0 0.0
        %3458 = vmatprep.subr.mxu0 0.0
        %3459 = vmatpush1.msra.mxu0 0.0
        %3460 = vmatprep.subr.mxu0 0.0
        %3461 = vmatpush1.msra.mxu0 0.0
        %3462 = vmatprep.subr.mxu0 0.0
        %3463 = vmatpush1.msra.mxu0 0.0
        %3464 = vmatprep.subr.mxu0 0.0
        %3465 = vmatpush1.msra.mxu0 0.0
        %3466 = vmatprep.subr.mxu0 0.0
        %3467 = vmatpush1.msra.mxu0 0.0
        %3468 = vmatprep.subr.mxu0 0.0
        %3469 = vmatpush1.msra.mxu0 0.0
        %3470 = vmatprep.subr.mxu0 0.0
        %3471 = vmatpush1.msra.mxu0 0.0
        %3472 = vmatprep.subr.mxu0 0.0
        %3473 = vmatpush1.msra.mxu0 0.0
        %3474 = vmatprep.subr.mxu0 0.0
        %3475 = vmatpush1.msra.mxu0 0.0
        %3476 = vmatprep.subr.mxu0 0.0
        %3477 = vmatpush1.msra.mxu0 0.0
        %3478 = vmatprep.subr.mxu0 0.0
        %3479 = vmatpush1.msra.mxu0 0.0
        %3480 = vmatprep.subr.mxu0 0.0
        %3481 = vmatpush1.msra.mxu0 0.0
        %3482 = vmatprep.subr.mxu0 0.0
        %3483 = vmatpush1.msra.mxu0 0.0
        %3484 = vmatprep.subr.mxu0 0.0
        %3485 = vmatpush1.msra.mxu0 0.0
        %3486 = vmatprep.subr.mxu0 0.0
        %3487 = vmatpush1.msra.mxu0 0.0
        %3488 = vmatprep.subr.mxu0 0.0
        %3489 = vmatpush1.msra.mxu0 0.0
        %3490 = vmatprep.subr.mxu0 0.0
        %3491 = vmatpush1.msra.mxu0 0.0
        %3492 = vmatprep.mubr.f32.mxu0 0.0
        %3493 = vmatmul.mubr.f32.gmra.mrb[0].mxu0 %v3426
        %v3494 = vpop.f32.mrb[0].mxu0
        %v3495 = vadd.f32 0.0, %v3494
        %v3496 = vpop.f32.mrb[0].mxu0
        %3497 = vdwg.mxu0
        %3498 = vmatprep.subr.mxu0 0.0
        %3499 = vmatpush1.msra.mxu0 %v1365
        %3500 = vmatprep.subr.mxu0 0.0
        %3501 = vmatpush1.msra.mxu0 %v1370
        %3502 = vmatprep.subr.mxu0 0.0
        %3503 = vmatpush1.msra.mxu0 %v1375
        %3504 = vmatprep.subr.mxu0 0.0
        %3505 = vmatpush1.msra.mxu0 %v1380
        %3506 = vmatprep.subr.mxu0 0.0
        %3507 = vmatpush1.msra.mxu0 0.0
        %3508 = vmatprep.subr.mxu0 0.0
        %3509 = vmatpush1.msra.mxu0 0.0
        %3510 = vmatprep.subr.mxu0 0.0
        %3511 = vmatpush1.msra.mxu0 0.0
        %3512 = vmatprep.subr.mxu0 0.0
        %3513 = vmatpush1.msra.mxu0 0.0
        %3514 = vmatprep.subr.mxu0 0.0
        %3515 = vmatpush1.msra.mxu0 0.0
        %3516 = vmatprep.subr.mxu0 0.0
        %3517 = vmatpush1.msra.mxu0 0.0
        %3518 = vmatprep.subr.mxu0 0.0
        %3519 = vmatpush1.msra.mxu0 0.0
        %3520 = vmatprep.subr.mxu0 0.0
        %3521 = vmatpush1.msra.mxu0 0.0
        %3522 = vmatprep.subr.mxu0 0.0
        %3523 = vmatpush1.msra.mxu0 0.0
        %3524 = vmatprep.subr.mxu0 0.0
        %3525 = vmatpush1.msra.mxu0 0.0
        %3526 = vmatprep.subr.mxu0 0.0
        %3527 = vmatpush1.msra.mxu0 0.0
        %3528 = vmatprep.subr.mxu0 0.0
        %3529 = vmatpush1.msra.mxu0 0.0
        %3530 = vmatprep.subr.mxu0 0.0
        %3531 = vmatpush1.msra.mxu0 0.0
        %3532 = vmatprep.subr.mxu0 0.0
        %3533 = vmatpush1.msra.mxu0 0.0
        %3534 = vmatprep.subr.mxu0 0.0
        %3535 = vmatpush1.msra.mxu0 0.0
        %3536 = vmatprep.subr.mxu0 0.0
        %3537 = vmatpush1.msra.mxu0 0.0
        %3538 = vmatprep.subr.mxu0 0.0
        %3539 = vmatpush1.msra.mxu0 0.0
        %3540 = vmatprep.subr.mxu0 0.0
        %3541 = vmatpush1.msra.mxu0 0.0
        %3542 = vmatprep.subr.mxu0 0.0
        %3543 = vmatpush1.msra.mxu0 0.0
        %3544 = vmatprep.subr.mxu0 0.0
        %3545 = vmatpush1.msra.mxu0 0.0
        %3546 = vmatprep.subr.mxu0 0.0
        %3547 = vmatpush1.msra.mxu0 0.0
        %3548 = vmatprep.subr.mxu0 0.0
        %3549 = vmatpush1.msra.mxu0 0.0
        %3550 = vmatprep.subr.mxu0 0.0
        %3551 = vmatpush1.msra.mxu0 0.0
        %3552 = vmatprep.subr.mxu0 0.0
        %3553 = vmatpush1.msra.mxu0 0.0
        %3554 = vmatprep.subr.mxu0 0.0
        %3555 = vmatpush1.msra.mxu0 0.0
        %3556 = vmatprep.subr.mxu0 0.0
        %3557 = vmatpush1.msra.mxu0 0.0
        %3558 = vmatprep.subr.mxu0 0.0
        %3559 = vmatpush1.msra.mxu0 0.0
        %3560 = vmatprep.subr.mxu0 0.0
        %3561 = vmatpush1.msra.mxu0 0.0
        %3562 = vmatprep.mubr.f32.mxu0 0.0
        %3563 = vmatmul.mubr.f32.gmra.mrb[0].mxu0 %v1632
        %v3564 = vpop.f32.mrb[0].mxu0
        %v3565 = vadd.f32 %v1430, %v3564
        %v3566 = vpop.f32.mrb[0].mxu0
        %3567 = vmatprep.mubr.f32.mxu0 0.0
        %3568 = vmatmul.mubr.f32.gmra.mrb[0].mxu0 %v1635
        %v3569 = vpop.f32.mrb[0].mxu0
        %v3570 = vadd.f32 %v1431, %v3569
        %v3571 = vpop.f32.mrb[0].mxu0
        %3572 = vmatprep.mubr.f32.mxu0 0.0
        %3573 = vmatmul.mubr.f32.gmra.mrb[0].mxu0 %v1638
        %v3574 = vpop.f32.mrb[0].mxu0
        %v3575 = vadd.f32 %v1432, %v3574
        %v3576 = vpop.f32.mrb[0].mxu0
        %3577 = vmatprep.mubr.f32.mxu0 0.0
        %3578 = vmatmul.mubr.f32.gmra.mrb[0].mxu0 %v1641
        %v3579 = vpop.f32.mrb[0].mxu0
        %v3580 = vadd.f32 %v1433, %v3579
        %v3581 = vpop.f32.mrb[0].mxu0
        %3582 = vdwg.mxu0
        %v3584 = vsel %vm1557, %v3565, 0
        %v3587 = vsel %vm1557, %v3570, 0
        %v3590 = vsel %vm1557, %v3575, 0
        %v3593 = vsel %vm1557, %v3580, 0
        %3595 = vmatprep.subr.mxu0 0.0
        %3596 = vmatpush1.msra.mxu0 %v3495
        %3597 = vmatprep.subr.mxu0 0.0
        %3598 = vmatpush1.msra.mxu0 0.0
        %3599 = vmatprep.subr.mxu0 0.0
        %3600 = vmatpush1.msra.mxu0 0.0
        %3601 = vmatprep.subr.mxu0 0.0
        %3602 = vmatpush1.msra.mxu0 0.0
        %3603 = vmatprep.subr.mxu0 0.0
        %3604 = vmatpush1.msra.mxu0 0.0
        %3605 = vmatprep.subr.mxu0 0.0
        %3606 = vmatpush1.msra.mxu0 0.0
        %3607 = vmatprep.subr.mxu0 0.0
        %3608 = vmatpush1.msra.mxu0 0.0
        %3609 = vmatprep.subr.mxu0 0.0
        %3610 = vmatpush1.msra.mxu0 0.0
        %3611 = vmatprep.subr.mxu0 0.0
        %3612 = vmatpush1.msra.mxu0 0.0
        %3613 = vmatprep.subr.mxu0 0.0
        %3614 = vmatpush1.msra.mxu0 0.0
        %3615 = vmatprep.subr.mxu0 0.0
        %3616 = vmatpush1.msra.mxu0 0.0
        %3617 = vmatprep.subr.mxu0 0.0
        %3618 = vmatpush1.msra.mxu0 0.0
        %3619 = vmatprep.subr.mxu0 0.0
        %3620 = vmatpush1.msra.mxu0 0.0
        %3621 = vmatprep.subr.mxu0 0.0
        %3622 = vmatpush1.msra.mxu0 0.0
        %3623 = vmatprep.subr.mxu0 0.0
        %3624 = vmatpush1.msra.mxu0 0.0
        %3625 = vmatprep.subr.mxu0 0.0
        %3626 = vmatpush1.msra.mxu0 0.0
        %3627 = vmatprep.subr.mxu0 0.0
        %3628 = vmatpush1.msra.mxu0 0.0
        %3629 = vmatprep.subr.mxu0 0.0
        %3630 = vmatpush1.msra.mxu0 0.0
        %3631 = vmatprep.subr.mxu0 0.0
        %3632 = vmatpush1.msra.mxu0 0.0
        %3633 = vmatprep.subr.mxu0 0.0
        %3634 = vmatpush1.msra.mxu0 0.0
        %3635 = vmatprep.subr.mxu0 0.0
        %3636 = vmatpush1.msra.mxu0 0.0
        %3637 = vmatprep.subr.mxu0 0.0
        %3638 = vmatpush1.msra.mxu0 0.0
        %3639 = vmatprep.subr.mxu0 0.0
        %3640 = vmatpush1.msra.mxu0 0.0
        %3641 = vmatprep.subr.mxu0 0.0
        %3642 = vmatpush1.msra.mxu0 0.0
        %3643 = vmatprep.subr.mxu0 0.0
        %3644 = vmatpush1.msra.mxu0 0.0
        %3645 = vmatprep.subr.mxu0 0.0
        %3646 = vmatpush1.msra.mxu0 0.0
        %3647 = vmatprep.subr.mxu0 0.0
        %3648 = vmatpush1.msra.mxu0 0.0
        %3649 = vmatprep.subr.mxu0 0.0
        %3650 = vmatpush1.msra.mxu0 0.0
        %3651 = vmatprep.subr.mxu0 0.0
        %3652 = vmatpush1.msra.mxu0 0.0
        %3653 = vmatprep.subr.mxu0 0.0
        %3654 = vmatpush1.msra.mxu0 0.0
        %3655 = vmatprep.subr.mxu0 0.0
        %3656 = vmatpush1.msra.mxu0 0.0
        %3657 = vmatprep.subr.mxu0 0.0
        %3658 = vmatpush1.msra.mxu0 0.0
        %3659 = vmatprep.mubr.f32.mxu0 0.0
        %3660 = vmatmul.mubr.f32.gmra.mrb[0].mxu0 %v3584
        %v3661 = vpop.f32.mrb[0].mxu0
        %v3662 = vadd.f32 0.0, %v3661
        %v3663 = vpop.f32.mrb[0].mxu0
        %3664 = vmatprep.mubr.f32.mxu0 0.0
        %3665 = vmatmul.mubr.f32.gmra.mrb[0].mxu0 %v3587
        %v3666 = vpop.f32.mrb[0].mxu0
        %v3667 = vadd.f32 0.0, %v3666
        %v3668 = vpop.f32.mrb[0].mxu0
        %3669 = vmatprep.mubr.f32.mxu0 0.0
        %3670 = vmatmul.mubr.f32.gmra.mrb[0].mxu0 %v3590
        %v3671 = vpop.f32.mrb[0].mxu0
        %v3672 = vadd.f32 0.0, %v3671
        %v3673 = vpop.f32.mrb[0].mxu0
        %3674 = vmatprep.mubr.f32.mxu0 0.0
        %3675 = vmatmul.mubr.f32.gmra.mrb[0].mxu0 %v3593
        %v3676 = vpop.f32.mrb[0].mxu0
        %v3677 = vadd.f32 0.0, %v3676
        %v3678 = vpop.f32.mrb[0].mxu0
        %3679 = vdwg.mxu0
        %3680 = vmatprep.subr.mxu0 0.0
        %3681 = vmatpush1.msra.mxu0 %v1385
        %3682 = vmatprep.subr.mxu0 0.0
        %3683 = vmatpush1.msra.mxu0 %v1390
        %3684 = vmatprep.subr.mxu0 0.0
        %3685 = vmatpush1.msra.mxu0 %v1395
        %3686 = vmatprep.subr.mxu0 0.0
        %3687 = vmatpush1.msra.mxu0 %v1400
        %3688 = vmatprep.subr.mxu0 0.0
        %3689 = vmatpush1.msra.mxu0 0.0
        %3690 = vmatprep.subr.mxu0 0.0
        %3691 = vmatpush1.msra.mxu0 0.0
        %3692 = vmatprep.subr.mxu0 0.0
        %3693 = vmatpush1.msra.mxu0 0.0
        %3694 = vmatprep.subr.mxu0 0.0
        %3695 = vmatpush1.msra.mxu0 0.0
        %3696 = vmatprep.subr.mxu0 0.0
        %3697 = vmatpush1.msra.mxu0 0.0
        %3698 = vmatprep.subr.mxu0 0.0
        %3699 = vmatpush1.msra.mxu0 0.0
        %3700 = vmatprep.subr.mxu0 0.0
        %3701 = vmatpush1.msra.mxu0 0.0
        %3702 = vmatprep.subr.mxu0 0.0
        %3703 = vmatpush1.msra.mxu0 0.0
        %3704 = vmatprep.subr.mxu0 0.0
        %3705 = vmatpush1.msra.mxu0 0.0
        %3706 = vmatprep.subr.mxu0 0.0
        %3707 = vmatpush1.msra.mxu0 0.0
        %3708 = vmatprep.subr.mxu0 0.0
        %3709 = vmatpush1.msra.mxu0 0.0
        %3710 = vmatprep.subr.mxu0 0.0
        %3711 = vmatpush1.msra.mxu0 0.0
        %3712 = vmatprep.subr.mxu0 0.0
        %3713 = vmatpush1.msra.mxu0 0.0
        %3714 = vmatprep.subr.mxu0 0.0
        %3715 = vmatpush1.msra.mxu0 0.0
        %3716 = vmatprep.subr.mxu0 0.0
        %3717 = vmatpush1.msra.mxu0 0.0
        %3718 = vmatprep.subr.mxu0 0.0
        %3719 = vmatpush1.msra.mxu0 0.0
        %3720 = vmatprep.subr.mxu0 0.0
        %3721 = vmatpush1.msra.mxu0 0.0
        %3722 = vmatprep.subr.mxu0 0.0
        %3723 = vmatpush1.msra.mxu0 0.0
        %3724 = vmatprep.subr.mxu0 0.0
        %3725 = vmatpush1.msra.mxu0 0.0
        %3726 = vmatprep.subr.mxu0 0.0
        %3727 = vmatpush1.msra.mxu0 0.0
        %3728 = vmatprep.subr.mxu0 0.0
        %3729 = vmatpush1.msra.mxu0 0.0
        %3730 = vmatprep.subr.mxu0 0.0
        %3731 = vmatpush1.msra.mxu0 0.0
        %3732 = vmatprep.subr.mxu0 0.0
        %3733 = vmatpush1.msra.mxu0 0.0
        %3734 = vmatprep.subr.mxu0 0.0
        %3735 = vmatpush1.msra.mxu0 0.0
        %3736 = vmatprep.subr.mxu0 0.0
        %3737 = vmatpush1.msra.mxu0 0.0
        %3738 = vmatprep.subr.mxu0 0.0
        %3739 = vmatpush1.msra.mxu0 0.0
        %3740 = vmatprep.subr.mxu0 0.0
        %3741 = vmatpush1.msra.mxu0 0.0
        %3742 = vmatprep.subr.mxu0 0.0
        %3743 = vmatpush1.msra.mxu0 0.0
        %3744 = vmatprep.mubr.f32.mxu0 0.0
        %3745 = vmatmul.mubr.f32.gmra.mrb[0].mxu0 %v1438
        %v3746 = vpop.f32.mrb[0].mxu0
        %v3747 = vadd.f32 %v1425, %v3746
        %v3748 = vpop.f32.mrb[0].mxu0
        %3749 = vdwg.mxu0
        %3750 = vxpose.xlu0.b32.start [1/16] %v3747, 128
        %3751 = vxpose.xlu0.b32.cont [2/16] 0.0, 128
        %3752 = vxpose.xlu0.b32.cont [3/16] 0.0, 128
        %3753 = vxpose.xlu0.b32.cont [4/16] 0.0, 128
        %3754 = vxpose.xlu0.b32.cont [5/16] 0.0, 128
        %3755 = vxpose.xlu0.b32.cont [6/16] 0.0, 128
        %3756 = vxpose.xlu0.b32.cont [7/16] 0.0, 128
        %3757 = vxpose.xlu0.b32.cont [8/16] 0.0, 128
        %3758 = vxpose.xlu0.b32.cont [9/16] 0.0, 128
        %3759 = vxpose.xlu0.b32.cont [10/16] 0.0, 128
        %3760 = vxpose.xlu0.b32.cont [11/16] 0.0, 128
        %3761 = vxpose.xlu0.b32.cont [12/16] 0.0, 128
        %3762 = vxpose.xlu0.b32.cont [13/16] 0.0, 128
        %3763 = vxpose.xlu0.b32.cont [14/16] 0.0, 128
        %3764 = vxpose.xlu0.b32.cont [15/16] 0.0, 128
        %3765 = vxpose.xlu0.b32.end [16/16] 0.0, 128
        %v3766 = vpop.trf.xlu0
        %v3767 = vpop.trf.xlu0
        %v3768 = vpop.trf.xlu0
        %v3769 = vpop.trf.xlu0
        %v3770 = vpop.trf.xlu0
        %v3771 = vpop.trf.xlu0
        %v3772 = vpop.trf.xlu0
        %v3773 = vpop.trf.xlu0
        %v3774 = vpop.trf.xlu0
        %v3775 = vpop.trf.xlu0
        %v3776 = vpop.trf.xlu0
        %v3777 = vpop.trf.xlu0
        %v3778 = vpop.trf.xlu0
        %v3779 = vpop.trf.xlu0
        %v3780 = vpop.trf.xlu0
        %v3781 = vpop.trf.xlu0
        %3783 = vset.pattern.permute.xlu0 0
        %3784 = vperm.xlu0 %3783, %v3766
        %v3785 = vpop.permute.xlu0 %3784
        %v3787 = vlaneseq
        %v3788 = vshrl.u32 %v3787, 7
        %v3789 = vsub.s32 1, %v3788
        %v3790 = vrot.slane %v3747, %v3789
        %v3791 = vsub.f32 %v3785, %v3790
        %v3792 = vtanh.pop %v3791
        %v3793 = vmul.f32 %v1553, %v3792
        %v3794 = vadd.f32 %v1434, %v3793
        %v3795 = vand.u32 2147483647, %v3794
        %v3797 = vsel %vm1557, %v3795, 0
        %3799 = vmatprep.subr.mxu0 0.0
        %3800 = vmatpush1.msra.mxu0 %v1435
        %3801 = vmatprep.subr.mxu0 0.0
        %3802 = vmatpush1.msra.mxu0 0.0
        %3803 = vmatprep.subr.mxu0 0.0
        %3804 = vmatpush1.msra.mxu0 0.0
        %3805 = vmatprep.subr.mxu0 0.0
        %3806 = vmatpush1.msra.mxu0 0.0
        %3807 = vmatprep.subr.mxu0 0.0
        %3808 = vmatpush1.msra.mxu0 0.0
        %3809 = vmatprep.subr.mxu0 0.0
        %3810 = vmatpush1.msra.mxu0 0.0
        %3811 = vmatprep.subr.mxu0 0.0
        %3812 = vmatpush1.msra.mxu0 0.0
        %3813 = vmatprep.subr.mxu0 0.0
        %3814 = vmatpush1.msra.mxu0 0.0
        %3815 = vmatprep.subr.mxu0 0.0
        %3816 = vmatpush1.msra.mxu0 0.0
        %3817 = vmatprep.subr.mxu0 0.0
        %3818 = vmatpush1.msra.mxu0 0.0
        %3819 = vmatprep.subr.mxu0 0.0
        %3820 = vmatpush1.msra.mxu0 0.0
        %3821 = vmatprep.subr.mxu0 0.0
        %3822 = vmatpush1.msra.mxu0 0.0
        %3823 = vmatprep.subr.mxu0 0.0
        %3824 = vmatpush1.msra.mxu0 0.0
        %3825 = vmatprep.subr.mxu0 0.0
        %3826 = vmatpush1.msra.mxu0 0.0
        %3827 = vmatprep.subr.mxu0 0.0
        %3828 = vmatpush1.msra.mxu0 0.0
        %3829 = vmatprep.subr.mxu0 0.0
        %3830 = vmatpush1.msra.mxu0 0.0
        %3831 = vmatprep.subr.mxu0 0.0
        %3832 = vmatpush1.msra.mxu0 0.0
        %3833 = vmatprep.subr.mxu0 0.0
        %3834 = vmatpush1.msra.mxu0 0.0
        %3835 = vmatprep.subr.mxu0 0.0
        %3836 = vmatpush1.msra.mxu0 0.0
        %3837 = vmatprep.subr.mxu0 0.0
        %3838 = vmatpush1.msra.mxu0 0.0
        %3839 = vmatprep.subr.mxu0 0.0
        %3840 = vmatpush1.msra.mxu0 0.0
        %3841 = vmatprep.subr.mxu0 0.0
        %3842 = vmatpush1.msra.mxu0 0.0
        %3843 = vmatprep.subr.mxu0 0.0
        %3844 = vmatpush1.msra.mxu0 0.0
        %3845 = vmatprep.subr.mxu0 0.0
        %3846 = vmatpush1.msra.mxu0 0.0
        %3847 = vmatprep.subr.mxu0 0.0
        %3848 = vmatpush1.msra.mxu0 0.0
        %3849 = vmatprep.subr.mxu0 0.0
        %3850 = vmatpush1.msra.mxu0 0.0
        %3851 = vmatprep.subr.mxu0 0.0
        %3852 = vmatpush1.msra.mxu0 0.0
        %3853 = vmatprep.subr.mxu0 0.0
        %3854 = vmatpush1.msra.mxu0 0.0
        %3855 = vmatprep.subr.mxu0 0.0
        %3856 = vmatpush1.msra.mxu0 0.0
        %3857 = vmatprep.subr.mxu0 0.0
        %3858 = vmatpush1.msra.mxu0 0.0
        %3859 = vmatprep.subr.mxu0 0.0
        %3860 = vmatpush1.msra.mxu0 0.0
        %3861 = vmatprep.subr.mxu0 0.0
        %3862 = vmatpush1.msra.mxu0 0.0
        %3863 = vmatprep.mubr.f32.mxu0 0.0
        %3864 = vmatmul.mubr.f32.gmra.mrb[0].mxu0 %v3797
        %v3865 = vpop.f32.mrb[0].mxu0
        %v3866 = vadd.f32 0.0, %v3865
        %v3867 = vpop.f32.mrb[0].mxu0
        %3868 = vdwg.mxu0
        %3869 = vmatprep.subr.mxu0 0.0
        %3870 = vmatpush1.msra.mxu0 %v1385
        %3871 = vmatprep.subr.mxu0 0.0
        %3872 = vmatpush1.msra.mxu0 %v1390
        %3873 = vmatprep.subr.mxu0 0.0
        %3874 = vmatpush1.msra.mxu0 %v1395
        %3875 = vmatprep.subr.mxu0 0.0
        %3876 = vmatpush1.msra.mxu0 %v1400
        %3877 = vmatprep.subr.mxu0 0.0
        %3878 = vmatpush1.msra.mxu0 0.0
        %3879 = vmatprep.subr.mxu0 0.0
        %3880 = vmatpush1.msra.mxu0 0.0
        %3881 = vmatprep.subr.mxu0 0.0
        %3882 = vmatpush1.msra.mxu0 0.0
        %3883 = vmatprep.subr.mxu0 0.0
        %3884 = vmatpush1.msra.mxu0 0.0
        %3885 = vmatprep.subr.mxu0 0.0
        %3886 = vmatpush1.msra.mxu0 0.0
        %3887 = vmatprep.subr.mxu0 0.0
        %3888 = vmatpush1.msra.mxu0 0.0
        %3889 = vmatprep.subr.mxu0 0.0
        %3890 = vmatpush1.msra.mxu0 0.0
        %3891 = vmatprep.subr.mxu0 0.0
        %3892 = vmatpush1.msra.mxu0 0.0
        %3893 = vmatprep.subr.mxu0 0.0
        %3894 = vmatpush1.msra.mxu0 0.0
        %3895 = vmatprep.subr.mxu0 0.0
        %3896 = vmatpush1.msra.mxu0 0.0
        %3897 = vmatprep.subr.mxu0 0.0
        %3898 = vmatpush1.msra.mxu0 0.0
        %3899 = vmatprep.subr.mxu0 0.0
        %3900 = vmatpush1.msra.mxu0 0.0
        %3901 = vmatprep.subr.mxu0 0.0
        %3902 = vmatpush1.msra.mxu0 0.0
        %3903 = vmatprep.subr.mxu0 0.0
        %3904 = vmatpush1.msra.mxu0 0.0
        %3905 = vmatprep.subr.mxu0 0.0
        %3906 = vmatpush1.msra.mxu0 0.0
        %3907 = vmatprep.subr.mxu0 0.0
        %3908 = vmatpush1.msra.mxu0 0.0
        %3909 = vmatprep.subr.mxu0 0.0
        %3910 = vmatpush1.msra.mxu0 0.0
        %3911 = vmatprep.subr.mxu0 0.0
        %3912 = vmatpush1.msra.mxu0 0.0
        %3913 = vmatprep.subr.mxu0 0.0
        %3914 = vmatpush1.msra.mxu0 0.0
        %3915 = vmatprep.subr.mxu0 0.0
        %3916 = vmatpush1.msra.mxu0 0.0
        %3917 = vmatprep.subr.mxu0 0.0
        %3918 = vmatpush1.msra.mxu0 0.0
        %3919 = vmatprep.subr.mxu0 0.0
        %3920 = vmatpush1.msra.mxu0 0.0
        %3921 = vmatprep.subr.mxu0 0.0
        %3922 = vmatpush1.msra.mxu0 0.0
        %3923 = vmatprep.subr.mxu0 0.0
        %3924 = vmatpush1.msra.mxu0 0.0
        %3925 = vmatprep.subr.mxu0 0.0
        %3926 = vmatpush1.msra.mxu0 0.0
        %3927 = vmatprep.subr.mxu0 0.0
        %3928 = vmatpush1.msra.mxu0 0.0
        %3929 = vmatprep.subr.mxu0 0.0
        %3930 = vmatpush1.msra.mxu0 0.0
        %3931 = vmatprep.subr.mxu0 0.0
        %3932 = vmatpush1.msra.mxu0 0.0
        %3933 = vmatprep.mubr.f32.mxu0 0.0
        %3934 = vmatmul.mubr.f32.gmra.mrb[0].mxu0 %v1632
        %v3935 = vpop.f32.mrb[0].mxu0
        %v3936 = vadd.f32 %v1430, %v3935
        %v3937 = vpop.f32.mrb[0].mxu0
        %3938 = vmatprep.mubr.f32.mxu0 0.0
        %3939 = vmatmul.mubr.f32.gmra.mrb[0].mxu0 %v1635
        %v3940 = vpop.f32.mrb[0].mxu0
        %v3941 = vadd.f32 %v1431, %v3940
        %v3942 = vpop.f32.mrb[0].mxu0
        %3943 = vmatprep.mubr.f32.mxu0 0.0
        %3944 = vmatmul.mubr.f32.gmra.mrb[0].mxu0 %v1638
        %v3945 = vpop.f32.mrb[0].mxu0
        %v3946 = vadd.f32 %v1432, %v3945
        %v3947 = vpop.f32.mrb[0].mxu0
        %3948 = vmatprep.mubr.f32.mxu0 0.0
        %3949 = vmatmul.mubr.f32.gmra.mrb[0].mxu0 %v1641
        %v3950 = vpop.f32.mrb[0].mxu0
        %v3951 = vadd.f32 %v1433, %v3950
        %v3952 = vpop.f32.mrb[0].mxu0
        %3953 = vdwg.mxu0
        %v3955 = vsel %vm1557, %v3936, 0
        %v3958 = vsel %vm1557, %v3941, 0
        %v3961 = vsel %vm1557, %v3946, 0
        %v3964 = vsel %vm1557, %v3951, 0
        %3966 = vmatprep.subr.mxu0 0.0
        %3967 = vmatpush1.msra.mxu0 %v3866
        %3968 = vmatprep.subr.mxu0 0.0
        %3969 = vmatpush1.msra.mxu0 0.0
        %3970 = vmatprep.subr.mxu0 0.0
        %3971 = vmatpush1.msra.mxu0 0.0
        %3972 = vmatprep.subr.mxu0 0.0
        %3973 = vmatpush1.msra.mxu0 0.0
        %3974 = vmatprep.subr.mxu0 0.0
        %3975 = vmatpush1.msra.mxu0 0.0
        %3976 = vmatprep.subr.mxu0 0.0
        %3977 = vmatpush1.msra.mxu0 0.0
        %3978 = vmatprep.subr.mxu0 0.0
        %3979 = vmatpush1.msra.mxu0 0.0
        %3980 = vmatprep.subr.mxu0 0.0
        %3981 = vmatpush1.msra.mxu0 0.0
        %3982 = vmatprep.subr.mxu0 0.0
        %3983 = vmatpush1.msra.mxu0 0.0
        %3984 = vmatprep.subr.mxu0 0.0
        %3985 = vmatpush1.msra.mxu0 0.0
        %3986 = vmatprep.subr.mxu0 0.0
        %3987 = vmatpush1.msra.mxu0 0.0
        %3988 = vmatprep.subr.mxu0 0.0
        %3989 = vmatpush1.msra.mxu0 0.0
        %3990 = vmatprep.subr.mxu0 0.0
        %3991 = vmatpush1.msra.mxu0 0.0
        %3992 = vmatprep.subr.mxu0 0.0
        %3993 = vmatpush1.msra.mxu0 0.0
        %3994 = vmatprep.subr.mxu0 0.0
        %3995 = vmatpush1.msra.mxu0 0.0
        %3996 = vmatprep.subr.mxu0 0.0
        %3997 = vmatpush1.msra.mxu0 0.0
        %3998 = vmatprep.subr.mxu0 0.0
        %3999 = vmatpush1.msra.mxu0 0.0
        %4000 = vmatprep.subr.mxu0 0.0
        %4001 = vmatpush1.msra.mxu0 0.0
        %4002 = vmatprep.subr.mxu0 0.0
        %4003 = vmatpush1.msra.mxu0 0.0
        %4004 = vmatprep.subr.mxu0 0.0
        %4005 = vmatpush1.msra.mxu0 0.0
        %4006 = vmatprep.subr.mxu0 0.0
        %4007 = vmatpush1.msra.mxu0 0.0
        %4008 = vmatprep.subr.mxu0 0.0
        %4009 = vmatpush1.msra.mxu0 0.0
        %4010 = vmatprep.subr.mxu0 0.0
        %4011 = vmatpush1.msra.mxu0 0.0
        %4012 = vmatprep.subr.mxu0 0.0
        %4013 = vmatpush1.msra.mxu0 0.0
        %4014 = vmatprep.subr.mxu0 0.0
        %4015 = vmatpush1.msra.mxu0 0.0
        %4016 = vmatprep.subr.mxu0 0.0
        %4017 = vmatpush1.msra.mxu0 0.0
        %4018 = vmatprep.subr.mxu0 0.0
        %4019 = vmatpush1.msra.mxu0 0.0
        %4020 = vmatprep.subr.mxu0 0.0
        %4021 = vmatpush1.msra.mxu0 0.0
        %4022 = vmatprep.subr.mxu0 0.0
        %4023 = vmatpush1.msra.mxu0 0.0
        %4024 = vmatprep.subr.mxu0 0.0
        %4025 = vmatpush1.msra.mxu0 0.0
        %4026 = vmatprep.subr.mxu0 0.0
        %4027 = vmatpush1.msra.mxu0 0.0
        %4028 = vmatprep.subr.mxu0 0.0
        %4029 = vmatpush1.msra.mxu0 0.0
        %4030 = vmatprep.mubr.f32.mxu0 0.0
        %4031 = vmatmul.mubr.f32.gmra.mrb[0].mxu0 %v3955
        %v4032 = vpop.f32.mrb[0].mxu0
        %v4033 = vadd.f32 0.0, %v4032
        %v4034 = vpop.f32.mrb[0].mxu0
        %4035 = vmatprep.mubr.f32.mxu0 0.0
        %4036 = vmatmul.mubr.f32.gmra.mrb[0].mxu0 %v3958
        %v4037 = vpop.f32.mrb[0].mxu0
        %v4038 = vadd.f32 0.0, %v4037
        %v4039 = vpop.f32.mrb[0].mxu0
        %4040 = vmatprep.mubr.f32.mxu0 0.0
        %4041 = vmatmul.mubr.f32.gmra.mrb[0].mxu0 %v3961
        %v4042 = vpop.f32.mrb[0].mxu0
        %v4043 = vadd.f32 0.0, %v4042
        %v4044 = vpop.f32.mrb[0].mxu0
        %4045 = vmatprep.mubr.f32.mxu0 0.0
        %4046 = vmatmul.mubr.f32.gmra.mrb[0].mxu0 %v3964
        %v4047 = vpop.f32.mrb[0].mxu0
        %v4048 = vadd.f32 0.0, %v4047
        %v4049 = vpop.f32.mrb[0].mxu0
        %4050 = vdwg.mxu0
        %4051 = vmatprep.subr.mxu0 0.0
        %4052 = vmatpush1.msra.mxu0 %v1405
        %4053 = vmatprep.subr.mxu0 0.0
        %4054 = vmatpush1.msra.mxu0 %v1410
        %4055 = vmatprep.subr.mxu0 0.0
        %4056 = vmatpush1.msra.mxu0 %v1415
        %4057 = vmatprep.subr.mxu0 0.0
        %4058 = vmatpush1.msra.mxu0 %v1420
        %4059 = vmatprep.subr.mxu0 0.0
        %4060 = vmatpush1.msra.mxu0 0.0
        %4061 = vmatprep.subr.mxu0 0.0
        %4062 = vmatpush1.msra.mxu0 0.0
        %4063 = vmatprep.subr.mxu0 0.0
        %4064 = vmatpush1.msra.mxu0 0.0
        %4065 = vmatprep.subr.mxu0 0.0
        %4066 = vmatpush1.msra.mxu0 0.0
        %4067 = vmatprep.subr.mxu0 0.0
        %4068 = vmatpush1.msra.mxu0 0.0
        %4069 = vmatprep.subr.mxu0 0.0
        %4070 = vmatpush1.msra.mxu0 0.0
        %4071 = vmatprep.subr.mxu0 0.0
        %4072 = vmatpush1.msra.mxu0 0.0
        %4073 = vmatprep.subr.mxu0 0.0
        %4074 = vmatpush1.msra.mxu0 0.0
        %4075 = vmatprep.subr.mxu0 0.0
        %4076 = vmatpush1.msra.mxu0 0.0
        %4077 = vmatprep.subr.mxu0 0.0
        %4078 = vmatpush1.msra.mxu0 0.0
        %4079 = vmatprep.subr.mxu0 0.0
        %4080 = vmatpush1.msra.mxu0 0.0
        %4081 = vmatprep.subr.mxu0 0.0
        %4082 = vmatpush1.msra.mxu0 0.0
        %4083 = vmatprep.subr.mxu0 0.0
        %4084 = vmatpush1.msra.mxu0 0.0
        %4085 = vmatprep.subr.mxu0 0.0
        %4086 = vmatpush1.msra.mxu0 0.0
        %4087 = vmatprep.subr.mxu0 0.0
        %4088 = vmatpush1.msra.mxu0 0.0
        %4089 = vmatprep.subr.mxu0 0.0
        %4090 = vmatpush1.msra.mxu0 0.0
        %4091 = vmatprep.subr.mxu0 0.0
        %4092 = vmatpush1.msra.mxu0 0.0
        %4093 = vmatprep.subr.mxu0 0.0
        %4094 = vmatpush1.msra.mxu0 0.0
        %4095 = vmatprep.subr.mxu0 0.0
        %4096 = vmatpush1.msra.mxu0 0.0
        %4097 = vmatprep.subr.mxu0 0.0
        %4098 = vmatpush1.msra.mxu0 0.0
        %4099 = vmatprep.subr.mxu0 0.0
        %4100 = vmatpush1.msra.mxu0 0.0
        %4101 = vmatprep.subr.mxu0 0.0
        %4102 = vmatpush1.msra.mxu0 0.0
        %4103 = vmatprep.subr.mxu0 0.0
        %4104 = vmatpush1.msra.mxu0 0.0
        %4105 = vmatprep.subr.mxu0 0.0
        %4106 = vmatpush1.msra.mxu0 0.0
        %4107 = vmatprep.subr.mxu0 0.0
        %4108 = vmatpush1.msra.mxu0 0.0
        %4109 = vmatprep.subr.mxu0 0.0
        %4110 = vmatpush1.msra.mxu0 0.0
        %4111 = vmatprep.subr.mxu0 0.0
        %4112 = vmatpush1.msra.mxu0 0.0
        %4113 = vmatprep.subr.mxu0 0.0
        %4114 = vmatpush1.msra.mxu0 0.0
        %4115 = vmatprep.mubr.f32.mxu0 0.0
        %4116 = vmatmul.mubr.f32.gmra.mrb[0].mxu0 %v1438
        %v4117 = vpop.f32.mrb[0].mxu0
        %v4118 = vadd.f32 %v1425, %v4117
        %v4119 = vpop.f32.mrb[0].mxu0
        %4120 = vdwg.mxu0
        %4121 = vxpose.xlu0.b32.start [1/16] %v4118, 128
        %4122 = vxpose.xlu0.b32.cont [2/16] 0.0, 128
        %4123 = vxpose.xlu0.b32.cont [3/16] 0.0, 128
        %4124 = vxpose.xlu0.b32.cont [4/16] 0.0, 128
        %4125 = vxpose.xlu0.b32.cont [5/16] 0.0, 128
        %4126 = vxpose.xlu0.b32.cont [6/16] 0.0, 128
        %4127 = vxpose.xlu0.b32.cont [7/16] 0.0, 128
        %4128 = vxpose.xlu0.b32.cont [8/16] 0.0, 128
        %4129 = vxpose.xlu0.b32.cont [9/16] 0.0, 128
        %4130 = vxpose.xlu0.b32.cont [10/16] 0.0, 128
        %4131 = vxpose.xlu0.b32.cont [11/16] 0.0, 128
        %4132 = vxpose.xlu0.b32.cont [12/16] 0.0, 128
        %4133 = vxpose.xlu0.b32.cont [13/16] 0.0, 128
        %4134 = vxpose.xlu0.b32.cont [14/16] 0.0, 128
        %4135 = vxpose.xlu0.b32.cont [15/16] 0.0, 128
        %4136 = vxpose.xlu0.b32.end [16/16] 0.0, 128
        %v4137 = vpop.trf.xlu0
        %v4138 = vpop.trf.xlu0
        %v4139 = vpop.trf.xlu0
        %v4140 = vpop.trf.xlu0
        %v4141 = vpop.trf.xlu0
        %v4142 = vpop.trf.xlu0
        %v4143 = vpop.trf.xlu0
        %v4144 = vpop.trf.xlu0
        %v4145 = vpop.trf.xlu0
        %v4146 = vpop.trf.xlu0
        %v4147 = vpop.trf.xlu0
        %v4148 = vpop.trf.xlu0
        %v4149 = vpop.trf.xlu0
        %v4150 = vpop.trf.xlu0
        %v4151 = vpop.trf.xlu0
        %v4152 = vpop.trf.xlu0
        %4154 = vset.pattern.permute.xlu0 0
        %4155 = vperm.xlu0 %4154, %v4137
        %v4156 = vpop.permute.xlu0 %4155
        %v4158 = vlaneseq
        %v4159 = vshrl.u32 %v4158, 7
        %v4160 = vsub.s32 1, %v4159
        %v4161 = vrot.slane %v4118, %v4160
        %v4162 = vsub.f32 %v4156, %v4161
        %v4163 = vtanh.pop %v4162
        %v4164 = vmul.f32 %v1553, %v4163
        %v4165 = vadd.f32 %v1434, %v4164
        %v4166 = vand.u32 2147483647, %v4165
        %v4168 = vsel %vm1557, %v4166, 0
        %4170 = vmatprep.subr.mxu0 0.0
        %4171 = vmatpush1.msra.mxu0 %v1435
        %4172 = vmatprep.subr.mxu0 0.0
        %4173 = vmatpush1.msra.mxu0 0.0
        %4174 = vmatprep.subr.mxu0 0.0
        %4175 = vmatpush1.msra.mxu0 0.0
        %4176 = vmatprep.subr.mxu0 0.0
        %4177 = vmatpush1.msra.mxu0 0.0
        %4178 = vmatprep.subr.mxu0 0.0
        %4179 = vmatpush1.msra.mxu0 0.0
        %4180 = vmatprep.subr.mxu0 0.0
        %4181 = vmatpush1.msra.mxu0 0.0
        %4182 = vmatprep.subr.mxu0 0.0
        %4183 = vmatpush1.msra.mxu0 0.0
        %4184 = vmatprep.subr.mxu0 0.0
        %4185 = vmatpush1.msra.mxu0 0.0
        %4186 = vmatprep.subr.mxu0 0.0
        %4187 = vmatpush1.msra.mxu0 0.0
        %4188 = vmatprep.subr.mxu0 0.0
        %4189 = vmatpush1.msra.mxu0 0.0
        %4190 = vmatprep.subr.mxu0 0.0
        %4191 = vmatpush1.msra.mxu0 0.0
        %4192 = vmatprep.subr.mxu0 0.0
        %4193 = vmatpush1.msra.mxu0 0.0
        %4194 = vmatprep.subr.mxu0 0.0
        %4195 = vmatpush1.msra.mxu0 0.0
        %4196 = vmatprep.subr.mxu0 0.0
        %4197 = vmatpush1.msra.mxu0 0.0
        %4198 = vmatprep.subr.mxu0 0.0
        %4199 = vmatpush1.msra.mxu0 0.0
        %4200 = vmatprep.subr.mxu0 0.0
        %4201 = vmatpush1.msra.mxu0 0.0
        %4202 = vmatprep.subr.mxu0 0.0
        %4203 = vmatpush1.msra.mxu0 0.0
        %4204 = vmatprep.subr.mxu0 0.0
        %4205 = vmatpush1.msra.mxu0 0.0
        %4206 = vmatprep.subr.mxu0 0.0
        %4207 = vmatpush1.msra.mxu0 0.0
        %4208 = vmatprep.subr.mxu0 0.0
        %4209 = vmatpush1.msra.mxu0 0.0
        %4210 = vmatprep.subr.mxu0 0.0
        %4211 = vmatpush1.msra.mxu0 0.0
        %4212 = vmatprep.subr.mxu0 0.0
        %4213 = vmatpush1.msra.mxu0 0.0
        %4214 = vmatprep.subr.mxu0 0.0
        %4215 = vmatpush1.msra.mxu0 0.0
        %4216 = vmatprep.subr.mxu0 0.0
        %4217 = vmatpush1.msra.mxu0 0.0
        %4218 = vmatprep.subr.mxu0 0.0
        %4219 = vmatpush1.msra.mxu0 0.0
        %4220 = vmatprep.subr.mxu0 0.0
        %4221 = vmatpush1.msra.mxu0 0.0
        %4222 = vmatprep.subr.mxu0 0.0
        %4223 = vmatpush1.msra.mxu0 0.0
        %4224 = vmatprep.subr.mxu0 0.0
        %4225 = vmatpush1.msra.mxu0 0.0
        %4226 = vmatprep.subr.mxu0 0.0
        %4227 = vmatpush1.msra.mxu0 0.0
        %4228 = vmatprep.subr.mxu0 0.0
        %4229 = vmatpush1.msra.mxu0 0.0
        %4230 = vmatprep.subr.mxu0 0.0
        %4231 = vmatpush1.msra.mxu0 0.0
        %4232 = vmatprep.subr.mxu0 0.0
        %4233 = vmatpush1.msra.mxu0 0.0
        %4234 = vmatprep.mubr.f32.mxu0 0.0
        %4235 = vmatmul.mubr.f32.gmra.mrb[0].mxu0 %v4168
        %v4236 = vpop.f32.mrb[0].mxu0
        %v4237 = vadd.f32 0.0, %v4236
        %v4238 = vpop.f32.mrb[0].mxu0
        %4239 = vdwg.mxu0
        %4240 = vmatprep.subr.mxu0 0.0
        %4241 = vmatpush1.msra.mxu0 %v1405
        %4242 = vmatprep.subr.mxu0 0.0
        %4243 = vmatpush1.msra.mxu0 %v1410
        %4244 = vmatprep.subr.mxu0 0.0
        %4245 = vmatpush1.msra.mxu0 %v1415
        %4246 = vmatprep.subr.mxu0 0.0
        %4247 = vmatpush1.msra.mxu0 %v1420
        %4248 = vmatprep.subr.mxu0 0.0
        %4249 = vmatpush1.msra.mxu0 0.0
        %4250 = vmatprep.subr.mxu0 0.0
        %4251 = vmatpush1.msra.mxu0 0.0
        %4252 = vmatprep.subr.mxu0 0.0
        %4253 = vmatpush1.msra.mxu0 0.0
        %4254 = vmatprep.subr.mxu0 0.0
        %4255 = vmatpush1.msra.mxu0 0.0
        %4256 = vmatprep.subr.mxu0 0.0
        %4257 = vmatpush1.msra.mxu0 0.0
        %4258 = vmatprep.subr.mxu0 0.0
        %4259 = vmatpush1.msra.mxu0 0.0
        %4260 = vmatprep.subr.mxu0 0.0
        %4261 = vmatpush1.msra.mxu0 0.0
        %4262 = vmatprep.subr.mxu0 0.0
        %4263 = vmatpush1.msra.mxu0 0.0
        %4264 = vmatprep.subr.mxu0 0.0
        %4265 = vmatpush1.msra.mxu0 0.0
        %4266 = vmatprep.subr.mxu0 0.0
        %4267 = vmatpush1.msra.mxu0 0.0
        %4268 = vmatprep.subr.mxu0 0.0
        %4269 = vmatpush1.msra.mxu0 0.0
        %4270 = vmatprep.subr.mxu0 0.0
        %4271 = vmatpush1.msra.mxu0 0.0
        %4272 = vmatprep.subr.mxu0 0.0
        %4273 = vmatpush1.msra.mxu0 0.0
        %4274 = vmatprep.subr.mxu0 0.0
        %4275 = vmatpush1.msra.mxu0 0.0
        %4276 = vmatprep.subr.mxu0 0.0
        %4277 = vmatpush1.msra.mxu0 0.0
        %4278 = vmatprep.subr.mxu0 0.0
        %4279 = vmatpush1.msra.mxu0 0.0
        %4280 = vmatprep.subr.mxu0 0.0
        %4281 = vmatpush1.msra.mxu0 0.0
        %4282 = vmatprep.subr.mxu0 0.0
        %4283 = vmatpush1.msra.mxu0 0.0
        %4284 = vmatprep.subr.mxu0 0.0
        %4285 = vmatpush1.msra.mxu0 0.0
        %4286 = vmatprep.subr.mxu0 0.0
        %4287 = vmatpush1.msra.mxu0 0.0
        %4288 = vmatprep.subr.mxu0 0.0
        %4289 = vmatpush1.msra.mxu0 0.0
        %4290 = vmatprep.subr.mxu0 0.0
        %4291 = vmatpush1.msra.mxu0 0.0
        %4292 = vmatprep.subr.mxu0 0.0
        %4293 = vmatpush1.msra.mxu0 0.0
        %4294 = vmatprep.subr.mxu0 0.0
        %4295 = vmatpush1.msra.mxu0 0.0
        %4296 = vmatprep.subr.mxu0 0.0
        %4297 = vmatpush1.msra.mxu0 0.0
        %4298 = vmatprep.subr.mxu0 0.0
        %4299 = vmatpush1.msra.mxu0 0.0
        %4300 = vmatprep.subr.mxu0 0.0
        %4301 = vmatpush1.msra.mxu0 0.0
        %4302 = vmatprep.subr.mxu0 0.0
        %4303 = vmatpush1.msra.mxu0 0.0
        %4304 = vmatprep.mubr.f32.mxu0 0.0
        %4305 = vmatmul.mubr.f32.gmra.mrb[0].mxu0 %v1632
        %v4306 = vpop.f32.mrb[0].mxu0
        %v4307 = vadd.f32 %v1430, %v4306
        %v4308 = vpop.f32.mrb[0].mxu0
        %4309 = vmatprep.mubr.f32.mxu0 0.0
        %4310 = vmatmul.mubr.f32.gmra.mrb[0].mxu0 %v1635
        %v4311 = vpop.f32.mrb[0].mxu0
        %v4312 = vadd.f32 %v1431, %v4311
        %v4313 = vpop.f32.mrb[0].mxu0
        %4314 = vmatprep.mubr.f32.mxu0 0.0
        %4315 = vmatmul.mubr.f32.gmra.mrb[0].mxu0 %v1638
        %v4316 = vpop.f32.mrb[0].mxu0
        %v4317 = vadd.f32 %v1432, %v4316
        %v4318 = vpop.f32.mrb[0].mxu0
        %4319 = vmatprep.mubr.f32.mxu0 0.0
        %4320 = vmatmul.mubr.f32.gmra.mrb[0].mxu0 %v1641
        %v4321 = vpop.f32.mrb[0].mxu0
        %v4322 = vadd.f32 %v1433, %v4321
        %v4323 = vpop.f32.mrb[0].mxu0
        %4324 = vdwg.mxu0
        %v4326 = vsel %vm1557, %v4307, 0
        %v4329 = vsel %vm1557, %v4312, 0
        %v4332 = vsel %vm1557, %v4317, 0
        %v4335 = vsel %vm1557, %v4322, 0
        %4337 = vmatprep.subr.mxu0 0.0
        %4338 = vmatpush1.msra.mxu0 %v4237
        %4339 = vmatprep.subr.mxu0 0.0
        %4340 = vmatpush1.msra.mxu0 0.0
        %4341 = vmatprep.subr.mxu0 0.0
        %4342 = vmatpush1.msra.mxu0 0.0
        %4343 = vmatprep.subr.mxu0 0.0
        %4344 = vmatpush1.msra.mxu0 0.0
        %4345 = vmatprep.subr.mxu0 0.0
        %4346 = vmatpush1.msra.mxu0 0.0
        %4347 = vmatprep.subr.mxu0 0.0
        %4348 = vmatpush1.msra.mxu0 0.0
        %4349 = vmatprep.subr.mxu0 0.0
        %4350 = vmatpush1.msra.mxu0 0.0
        %4351 = vmatprep.subr.mxu0 0.0
        %4352 = vmatpush1.msra.mxu0 0.0
        %4353 = vmatprep.subr.mxu0 0.0
        %4354 = vmatpush1.msra.mxu0 0.0
        %4355 = vmatprep.subr.mxu0 0.0
        %4356 = vmatpush1.msra.mxu0 0.0
        %4357 = vmatprep.subr.mxu0 0.0
        %4358 = vmatpush1.msra.mxu0 0.0
        %4359 = vmatprep.subr.mxu0 0.0
        %4360 = vmatpush1.msra.mxu0 0.0
        %4361 = vmatprep.subr.mxu0 0.0
        %4362 = vmatpush1.msra.mxu0 0.0
        %4363 = vmatprep.subr.mxu0 0.0
        %4364 = vmatpush1.msra.mxu0 0.0
        %4365 = vmatprep.subr.mxu0 0.0
        %4366 = vmatpush1.msra.mxu0 0.0
        %4367 = vmatprep.subr.mxu0 0.0
        %4368 = vmatpush1.msra.mxu0 0.0
        %4369 = vmatprep.subr.mxu0 0.0
        %4370 = vmatpush1.msra.mxu0 0.0
        %4371 = vmatprep.subr.mxu0 0.0
        %4372 = vmatpush1.msra.mxu0 0.0
        %4373 = vmatprep.subr.mxu0 0.0
        %4374 = vmatpush1.msra.mxu0 0.0
        %4375 = vmatprep.subr.mxu0 0.0
        %4376 = vmatpush1.msra.mxu0 0.0
        %4377 = vmatprep.subr.mxu0 0.0
        %4378 = vmatpush1.msra.mxu0 0.0
        %4379 = vmatprep.subr.mxu0 0.0
        %4380 = vmatpush1.msra.mxu0 0.0
        %4381 = vmatprep.subr.mxu0 0.0
        %4382 = vmatpush1.msra.mxu0 0.0
        %4383 = vmatprep.subr.mxu0 0.0
        %4384 = vmatpush1.msra.mxu0 0.0
        %4385 = vmatprep.subr.mxu0 0.0
        %4386 = vmatpush1.msra.mxu0 0.0
        %4387 = vmatprep.subr.mxu0 0.0
        %4388 = vmatpush1.msra.mxu0 0.0
        %4389 = vmatprep.subr.mxu0 0.0
        %4390 = vmatpush1.msra.mxu0 0.0
        %4391 = vmatprep.subr.mxu0 0.0
        %4392 = vmatpush1.msra.mxu0 0.0
        %4393 = vmatprep.subr.mxu0 0.0
        %4394 = vmatpush1.msra.mxu0 0.0
        %4395 = vmatprep.subr.mxu0 0.0
        %4396 = vmatpush1.msra.mxu0 0.0
        %4397 = vmatprep.subr.mxu0 0.0
        %4398 = vmatpush1.msra.mxu0 0.0
        %4399 = vmatprep.subr.mxu0 0.0
        %4400 = vmatpush1.msra.mxu0 0.0
        %4401 = vmatprep.mubr.f32.mxu0 0.0
        %4402 = vmatmul.mubr.f32.gmra.mrb[0].mxu0 %v4326
        %v4403 = vpop.f32.mrb[0].mxu0
        %v4404 = vadd.f32 0.0, %v4403
        %v4405 = vpop.f32.mrb[0].mxu0
        %4406 = vmatprep.mubr.f32.mxu0 0.0
        %4407 = vmatmul.mubr.f32.gmra.mrb[0].mxu0 %v4329
        %v4408 = vpop.f32.mrb[0].mxu0
        %v4409 = vadd.f32 0.0, %v4408
        %v4410 = vpop.f32.mrb[0].mxu0
        %4411 = vmatprep.mubr.f32.mxu0 0.0
        %4412 = vmatmul.mubr.f32.gmra.mrb[0].mxu0 %v4332
        %v4413 = vpop.f32.mrb[0].mxu0
        %v4414 = vadd.f32 0.0, %v4413
        %v4415 = vpop.f32.mrb[0].mxu0
        %4416 = vmatprep.mubr.f32.mxu0 0.0
        %4417 = vmatmul.mubr.f32.gmra.mrb[0].mxu0 %v4335
        %v4418 = vpop.f32.mrb[0].mxu0
        %v4419 = vadd.f32 0.0, %v4418
        %v4420 = vpop.f32.mrb[0].mxu0
        %4421 = vdwg.mxu0
        %4426 = vrot.lane.b32.xlu0 %v2178, 1
        %v4427 = vpop.permute.xlu0 %4426
        %4428 = vrot.lane.b32.xlu0 %v2183, 1
        %v4429 = vpop.permute.xlu0 %4428
        %4430 = vrot.lane.b32.xlu0 %v2188, 1
        %v4431 = vpop.permute.xlu0 %4430
        %4432 = vrot.lane.b32.xlu0 %v2193, 1
        %v4433 = vpop.permute.xlu0 %4432
        %4442 = vrot.lane.b32.xlu0 %v2549, 2
        %v4443 = vpop.permute.xlu0 %4442
        %4444 = vrot.lane.b32.xlu0 %v2554, 2
        %v4445 = vpop.permute.xlu0 %4444
        %4446 = vrot.lane.b32.xlu0 %v2559, 2
        %v4447 = vpop.permute.xlu0 %4446
        %4448 = vrot.lane.b32.xlu0 %v2564, 2
        %v4449 = vpop.permute.xlu0 %4448
        %4458 = vrot.lane.b32.xlu0 %v2920, 3
        %v4459 = vpop.permute.xlu0 %4458
        %4460 = vrot.lane.b32.xlu0 %v2925, 3
        %v4461 = vpop.permute.xlu0 %4460
        %4462 = vrot.lane.b32.xlu0 %v2930, 3
        %v4463 = vpop.permute.xlu0 %4462
        %4464 = vrot.lane.b32.xlu0 %v2935, 3
        %v4465 = vpop.permute.xlu0 %4464
        %4474 = vrot.lane.b32.xlu0 %v3291, 4
        %v4475 = vpop.permute.xlu0 %4474
        %4476 = vrot.lane.b32.xlu0 %v3296, 4
        %v4477 = vpop.permute.xlu0 %4476
        %4478 = vrot.lane.b32.xlu0 %v3301, 4
        %v4479 = vpop.permute.xlu0 %4478
        %4480 = vrot.lane.b32.xlu0 %v3306, 4
        %v4481 = vpop.permute.xlu0 %4480
        %4490 = vrot.lane.b32.xlu0 %v3662, 5
        %v4491 = vpop.permute.xlu0 %4490
        %4492 = vrot.lane.b32.xlu0 %v3667, 5
        %v4493 = vpop.permute.xlu0 %4492
        %4494 = vrot.lane.b32.xlu0 %v3672, 5
        %v4495 = vpop.permute.xlu0 %4494
        %4496 = vrot.lane.b32.xlu0 %v3677, 5
        %v4497 = vpop.permute.xlu0 %4496
        %4506 = vrot.lane.b32.xlu0 %v4033, 6
        %v4507 = vpop.permute.xlu0 %4506
        %4508 = vrot.lane.b32.xlu0 %v4038, 6
        %v4509 = vpop.permute.xlu0 %4508
        %4510 = vrot.lane.b32.xlu0 %v4043, 6
        %v4511 = vpop.permute.xlu0 %4510
        %4512 = vrot.lane.b32.xlu0 %v4048, 6
        %v4513 = vpop.permute.xlu0 %4512
        %4522 = vrot.lane.b32.xlu0 %v4404, 7
        %v4523 = vpop.permute.xlu0 %4522
        %4524 = vrot.lane.b32.xlu0 %v4409, 7
        %v4525 = vpop.permute.xlu0 %4524
        %4526 = vrot.lane.b32.xlu0 %v4414, 7
        %v4527 = vpop.permute.xlu0 %4526
        %4528 = vrot.lane.b32.xlu0 %v4419, 7
        %v4529 = vpop.permute.xlu0 %4528
        %vm4534 = vcmask 7168
        %v4535 = vsel %vm4534, %v1807, %v4427
        %v4536 = vsel %vm4534, %v1812, %v4429
        %v4537 = vsel %vm4534, %v1817, %v4431
        %v4538 = vsel %vm4534, %v1822, %v4433
        %vm4539 = vcmask 15360
        %v4540 = vsel %vm4539, %v4535, %v4443
        %v4541 = vsel %vm4539, %v4536, %v4445
        %v4542 = vsel %vm4539, %v4537, %v4447
        %v4543 = vsel %vm4539, %v4538, %v4449
        %vm4544 = vcmask 23552
        %v4545 = vsel %vm4544, %v4540, %v4459
        %v4546 = vsel %vm4544, %v4541, %v4461
        %v4547 = vsel %vm4544, %v4542, %v4463
        %v4548 = vsel %vm4544, %v4543, %v4465
        %vm4549 = vcmask 31744
        %v4550 = vsel %vm4549, %v4545, %v4475
        %v4551 = vsel %vm4549, %v4546, %v4477
        %v4552 = vsel %vm4549, %v4547, %v4479
        %v4553 = vsel %vm4549, %v4548, %v4481
        %vm4554 = vcmask 39936
        %v4555 = vsel %vm4554, %v4550, %v4491
        %v4556 = vsel %vm4554, %v4551, %v4493
        %v4557 = vsel %vm4554, %v4552, %v4495
        %v4558 = vsel %vm4554, %v4553, %v4497
        %vm4559 = vcmask 48128
        %v4560 = vsel %vm4559, %v4555, %v4507
        %v4561 = vsel %vm4559, %v4556, %v4509
        %v4562 = vsel %vm4559, %v4557, %v4511
        %v4563 = vsel %vm4559, %v4558, %v4513
        %vm4564 = vcmask 56320
        %v4565 = vsel %vm4564, %v4560, %v4523
        %v4566 = vsel %vm4564, %v4561, %v4525
        %v4567 = vsel %vm4564, %v4562, %v4527
        %v4568 = vsel %vm4564, %v4563, %v4529
        %4569 = vxpose.xlu0.b32.start [1/16] %v4565, 128
        %4570 = vxpose.xlu0.b32.cont [2/16] %v4566, 128
        %4571 = vxpose.xlu0.b32.cont [3/16] %v4567, 128
        %4572 = vxpose.xlu0.b32.cont [4/16] %v4568, 128
        %4573 = vxpose.xlu0.b32.cont [5/16] 0.0, 128
        %4574 = vxpose.xlu0.b32.cont [6/16] 0.0, 128
        %4575 = vxpose.xlu0.b32.cont [7/16] 0.0, 128
        %4576 = vxpose.xlu0.b32.cont [8/16] 0.0, 128
        %4577 = vxpose.xlu0.b32.cont [9/16] 0.0, 128
        %4578 = vxpose.xlu0.b32.cont [10/16] 0.0, 128
        %4579 = vxpose.xlu0.b32.cont [11/16] 0.0, 128
        %4580 = vxpose.xlu0.b32.cont [12/16] 0.0, 128
        %4581 = vxpose.xlu0.b32.cont [13/16] 0.0, 128
        %4582 = vxpose.xlu0.b32.cont [14/16] 0.0, 128
        %4583 = vxpose.xlu0.b32.cont [15/16] 0.0, 128
        %4584 = vxpose.xlu0.b32.end [16/16] 0.0, 128
        %v4585 = vpop.trf.xlu0
        %v4586 = vpop.trf.xlu0
        %v4587 = vpop.trf.xlu0
        %v4588 = vpop.trf.xlu0
        %v4589 = vpop.trf.xlu0
        %v4590 = vpop.trf.xlu0
        %v4591 = vpop.trf.xlu0
        %v4592 = vpop.trf.xlu0
        %v4593 = vpop.trf.xlu0
        %v4594 = vpop.trf.xlu0
        %v4595 = vpop.trf.xlu0
        %v4596 = vpop.trf.xlu0
        %v4597 = vpop.trf.xlu0
        %v4598 = vpop.trf.xlu0
        %v4599 = vpop.trf.xlu0
        %v4600 = vpop.trf.xlu0
        %v4601 = vld [vmem:[%s8] sm:$0xff]
        %v4602 = vld [vmem:[%s8 + $0x8] sm:$0xff]
        %v4603 = vld [vmem:[%s8 + $0x10] sm:$0xff]
        %v4604 = vld [vmem:[%s8 + $0x18] sm:$0xff]
        %v4605 = vld [vmem:[%s9] sm:$0x1]
        %v4607 = vlaneseq
        %v4608 = vshrl.u32 %v4607, 7
        %v4609 = vsub.s32 0, %v4608
        %v4610 = vrot.slane %v4605, %v4609
        %v4613 = vsel %vm1436, %v4585, 0
        %4615 = vmatprep.subr.mxu0 0.0
        %4616 = vmatpush1.msra.mxu0 %v4601
        %4617 = vmatprep.subr.mxu0 0.0
        %4618 = vmatpush1.msra.mxu0 %v4602
        %4619 = vmatprep.subr.mxu0 0.0
        %4620 = vmatpush1.msra.mxu0 %v4603
        %4621 = vmatprep.subr.mxu0 0.0
        %4622 = vmatpush1.msra.mxu0 %v4604
        %4623 = vmatprep.subr.mxu0 0.0
        %4624 = vmatpush1.msra.mxu0 0.0
        %4625 = vmatprep.subr.mxu0 0.0
        %4626 = vmatpush1.msra.mxu0 0.0
        %4627 = vmatprep.subr.mxu0 0.0
        %4628 = vmatpush1.msra.mxu0 0.0
        %4629 = vmatprep.subr.mxu0 0.0
        %4630 = vmatpush1.msra.mxu0 0.0
        %4631 = vmatprep.subr.mxu0 0.0
        %4632 = vmatpush1.msra.mxu0 0.0
        %4633 = vmatprep.subr.mxu0 0.0
        %4634 = vmatpush1.msra.mxu0 0.0
        %4635 = vmatprep.subr.mxu0 0.0
        %4636 = vmatpush1.msra.mxu0 0.0
        %4637 = vmatprep.subr.mxu0 0.0
        %4638 = vmatpush1.msra.mxu0 0.0
        %4639 = vmatprep.subr.mxu0 0.0
        %4640 = vmatpush1.msra.mxu0 0.0
        %4641 = vmatprep.subr.mxu0 0.0
        %4642 = vmatpush1.msra.mxu0 0.0
        %4643 = vmatprep.subr.mxu0 0.0
        %4644 = vmatpush1.msra.mxu0 0.0
        %4645 = vmatprep.subr.mxu0 0.0
        %4646 = vmatpush1.msra.mxu0 0.0
        %4647 = vmatprep.subr.mxu0 0.0
        %4648 = vmatpush1.msra.mxu0 0.0
        %4649 = vmatprep.subr.mxu0 0.0
        %4650 = vmatpush1.msra.mxu0 0.0
        %4651 = vmatprep.subr.mxu0 0.0
        %4652 = vmatpush1.msra.mxu0 0.0
        %4653 = vmatprep.subr.mxu0 0.0
        %4654 = vmatpush1.msra.mxu0 0.0
        %4655 = vmatprep.subr.mxu0 0.0
        %4656 = vmatpush1.msra.mxu0 0.0
        %4657 = vmatprep.subr.mxu0 0.0
        %4658 = vmatpush1.msra.mxu0 0.0
        %4659 = vmatprep.subr.mxu0 0.0
        %4660 = vmatpush1.msra.mxu0 0.0
        %4661 = vmatprep.subr.mxu0 0.0
        %4662 = vmatpush1.msra.mxu0 0.0
        %4663 = vmatprep.subr.mxu0 0.0
        %4664 = vmatpush1.msra.mxu0 0.0
        %4665 = vmatprep.subr.mxu0 0.0
        %4666 = vmatpush1.msra.mxu0 0.0
        %4667 = vmatprep.subr.mxu0 0.0
        %4668 = vmatpush1.msra.mxu0 0.0
        %4669 = vmatprep.subr.mxu0 0.0
        %4670 = vmatpush1.msra.mxu0 0.0
        %4671 = vmatprep.subr.mxu0 0.0
        %4672 = vmatpush1.msra.mxu0 0.0
        %4673 = vmatprep.subr.mxu0 0.0
        %4674 = vmatpush1.msra.mxu0 0.0
        %4675 = vmatprep.subr.mxu0 0.0
        %4676 = vmatpush1.msra.mxu0 0.0
        %4677 = vmatprep.subr.mxu0 0.0
        %4678 = vmatpush1.msra.mxu0 0.0
        %4679 = vmatprep.mubr.f32.mxu0 0.0
        %4680 = vmatmul.mubr.f32.gmra.mrb[0].mxu0 %v4613
        %v4681 = vpop.f32.mrb[0].mxu0
        %v4682 = vadd.f32 %v4610, %v4681
        %v4683 = vpop.f32.mrb[0].mxu0
        %4684 = vdwg.mxu0
        %4685 = vst [vmem:[%s383] sm:$0xff] %v4682
        %s4686 = sand.u32 %s270, 1
        %s4687 = scalar_lea.sflag [#allocation4], %s4686
        %s4688 = sand.u32 %s270, 1
        %s4689 = smul.addr %s4688, 8
        %s4690 = scalar_lea.vmem [#allocation3], %s4689
        // Predicated region
        $region65: #{tpu_custom_call.1} parent=63 // pred_check
          %p4691 = pneg %p280
        $region66: #{tpu_custom_call.1} parent=63 // pred_check_branch
          %4693 = sbr.rel (%p4691) target = $region68
        $region67: #{tpu_custom_call.1} parent=63 // pred_region
          %s4695 = ssub.s32 128, 128
          %4696 = vsyncadd %s4687, %s4695
          %s4697 = smul.addr %s26, 128
          %s4698 = scalar_lea.hbm %s11, %s4697
          %s4700 = sshll.u32 %s4690, 4
          %s4701 = int_to_ptr.vmem [resolvable:$true] %s4700
          %4703 = dma.vmem_to_hbm [thread:$0]  %s4701, 128, %s4698, %s4687
        $region68: #{tpu_custom_call.1} parent=63 // pred_fallthru
          _
      $region64: #{tpu_custom_call.1} parent=5 // pred_fallthru
        _
      %p4704 = scmp.le.s32.totalorder 2, %s21
      // Predicated region
      $region69: #{tpu_custom_call.1} parent=5 // pred_check
        %p4705 = pneg %p4704
      $region70: #{tpu_custom_call.1} parent=5 // pred_check_branch
        %4707 = sbr.rel (%p4705) target = $region72
      $region71: #{tpu_custom_call.1} parent=5 // pred_region
        %s4708 = ssub.s32 %s21, 2
        // Predicated region
        $region73: #{tpu_custom_call.1} parent=71 // pred_check
          %p4709 = pneg %p286
        $region74: #{tpu_custom_call.1} parent=71 // pred_check_branch
          %4711 = sbr.rel (%p4709) target = $region76
        $region75: #{tpu_custom_call.1} parent=71 // pred_region
          %s4712 = sand.u32 %s271, 1
          %s4713 = scalar_lea.sflag [#allocation4], %s4712
          %s4714 = sand.u32 %s271, 1
          %s4715 = smul.addr %s4714, 8
          %s4716 = scalar_lea.vmem [#allocation3], %s4715
          %4717 = dma.done %s4713, 128
        $region76: #{tpu_custom_call.1} parent=71 // pred_fallthru
          _
      $region72: #{tpu_custom_call.1} parent=5 // pred_fallthru
        _
    $region6: #{tpu_custom_call.1} parent=1 // loop_footer
      %s25 = sadd.s32 1, %s21
    $region7: #{tpu_custom_call.1} parent=1 // loop_footer_branch
      %20 = sbr.rel target = $region3
    $region8: #{tpu_custom_call.1} parent=1 // loop_exit
      _
    %4718 = vsyncpa [#allocation4], 1
    %s4719 = scalar_lea.sflag [#allocation4], 1
    %4720 = vsyncpa %s4719, 1

</llo_original>
